<compile_context>
chip_gen: v7x
topology: tpu7x:2x2x1
jax: 0.10.0
libtpu: 0.0.40
codegen_flags: <defaults>
</compile_context>

<pallas_src>
import math

import jax
import jax.numpy as jnp
from jax.experimental import pallas as pl
from jax.experimental.pallas import tpu as pltpu

CIN = 64                  # fixed by the module: Conv3d(64, channel, 3)
CMID = 64                 # channel
CMID_FUSED = 3 * CMID     # 192 fused mid channels (cls | wh | reg)
COUT_FUSED = 8            # [cls(1), wh(3), reg(3), pad(1)] lane-padded outputs
BN_EPS = 1e-5

_VMEM_LIMIT_CACHE = None


def _vmem_limit_bytes():
    """Per-chip scoped-VMEM limit: ~3/4 of capacity, capped at 96 MiB."""
    global _VMEM_LIMIT_CACHE
    if _VMEM_LIMIT_CACHE is None:
        try:
            cap = int(pltpu.get_tpu_info().vmem_capacity_bytes)
        except Exception:                       # unknown backend -> be safe
            cap = 64 * 1024 * 1024
        _VMEM_LIMIT_CACHE = min(cap * 3 // 4, 96 * 1024 * 1024)
    return _VMEM_LIMIT_CACHE


# ---------------------------------------------------------------------------
# Pass A: fused 3x3x3 conv for all three heads (in-VMEM tap assembly, 9 MXU
#         matmuls of K=192) + masked per-step BN partial sums.
# ---------------------------------------------------------------------------
def _conv3_stats(x_flat, w1, *, n, d, hwf, m_step, w_out, c):
    cmid = w1.shape[-1]            # 192
    wp = w_out + 2                 # padded width (flattened row period)

    def kernel(x0_ref, x1_ref, x2_ref, w1_ref, y_ref, stats_ref):
        xs = (x0_ref, x1_ref, x2_ref)
        acc = jnp.zeros((m_step, cmid), jnp.float32)
        for kd in range(3):
            for kh in range(3):
                base = kh * wp
                # The three kw taps are consecutive flattened rows -> fold the
                # kw axis into the matmul K dimension (K = 3*Cin = 192).
                lhs = jnp.concatenate(
                    [xs[kd][base + kw: base + kw + m_step, :] for kw in range(3)],
                    axis=-1)                                    # (M, 192) bf16
                acc = acc + jnp.dot(lhs, w1_ref[kd * 3 + kh],
                                    preferred_element_type=jnp.float32)

        yb = acc.astype(jnp.bfloat16)
        y_ref[...] = yb                                         # bf16 spill

        # BN partial sums from the bf16-rounded values that pass B normalizes.
        # Junk columns (w >= W, an artifact of the flattened padded layout)
        # are masked out so the global statistics stay exact.
        ys = yb.astype(jnp.float32)
        wpos = jax.lax.broadcasted_iota(jnp.int32, (m_step, 1), 0) % wp
        valid = (wpos < w_out).astype(jnp.float32)
        ysm = ys * valid
        stats_ref[0:1, :] = jnp.sum(ysm, axis=0, keepdims=True)
        stats_ref[1:2, :] = jnp.sum(ysm * ys, axis=0, keepdims=True)

    def x_spec(kd):
        return pl.BlockSpec((None, None, hwf, c),
                            lambda ni, di: (ni, di + kd, 0, 0))

    return pl.pallas_call(
        kernel,
        out_shape=(jax.ShapeDtypeStruct((n, d, m_step, cmid), jnp.bfloat16),
                   jax.ShapeDtypeStruct((n, d, 2, cmid), jnp.float32)),
        grid_spec=pltpu.PrefetchScalarGridSpec(
            num_scalar_prefetch=0,
            grid=(n, d),
            in_specs=[x_spec(0), x_spec(1), x_spec(2),
                      # constant index_map -> fused conv weight stays resident
                      pl.BlockSpec((9, 3 * c, cmid), lambda ni, di: (0, 0, 0))],
            out_specs=(pl.BlockSpec((None, None, m_step, cmid),
                                    lambda ni, di: (ni, di, 0, 0)),
                       pl.BlockSpec((None, None, 2, cmid),
                                    lambda ni, di: (ni, di, 0, 0)))),
        compiler_params=pltpu.CompilerParams(
            dimension_semantics=("parallel", "parallel"),
            vmem_limit_bytes=_vmem_limit_bytes()),
    )(x_flat, x_flat, x_flat, w1)


# ---------------------------------------------------------------------------
# Pass B: BN apply (f32) -> ReLU -> block-diagonal fused 1x1x1 conv (+bias)
#         -> exact sigmoid on the cls row, stored channel-major / lane-dense.
# ---------------------------------------------------------------------------
def _bn_relu_conv1(y, scale, shift, w2, b2, *, n, d, m_step):
    cmid = y.shape[-1]
    cout = w2.shape[-1]

    def kernel(y_ref, scale_ref, shift_ref, w2_ref, b2_ref, out_ref):
        yv = y_ref[...].astype(jnp.float32)                     # (M, 192)
        hv = jnp.maximum(yv * scale_ref[...] + shift_ref[...], 0.0)
        z = jnp.dot(hv.astype(jnp.bfloat16), w2_ref[...],
                    preferred_element_type=jnp.float32)         # (M, 8)
        z = z + b2_ref[...]
        zt = z.T                                                # (8, M) lane-dense
        out_ref[1:cout, :] = zt[1:cout, :]
        # Exact sigmoid on the cls row only (no approx reciprocal -> hm <= 1).
        out_ref[0:1, :] = 1.0 / (1.0 + jnp.exp(-zt[0:1, :]))

    return pl.pallas_call(
        kernel,
        out_shape=jax.ShapeDtypeStruct((n, d, cout, m_step), jnp.float32),
        grid_spec=pltpu.PrefetchScalarGridSpec(
            num_scalar_prefetch=0,
            grid=(n, d),
            in_specs=[pl.BlockSpec((None, None, m_step, cmid),
                                   lambda ni, di: (ni, di, 0, 0)),
                      pl.BlockSpec((1, cmid), lambda ni, di: (0, 0)),
                      pl.BlockSpec((1, cmid), lambda ni, di: (0, 0)),
                      pl.BlockSpec((cmid, cout), lambda ni, di: (0, 0)),
                      pl.BlockSpec((1, cout), lambda ni, di: (0, 0))],
            out_specs=pl.BlockSpec((None, None, cout, m_step),
                                   lambda ni, di: (ni, di, 0, 0))),
        compiler_params=pltpu.CompilerParams(
            dimension_semantics=("parallel", "parallel"),
            vmem_limit_bytes=_vmem_limit_bytes()),
    )(y, scale, shift, w2, b2)


# ---------------------------------------------------------------------------
# JAX glue
# ---------------------------------------------------------------------------
@jax.jit
def resnet50_head_forward(x_ncdhw, params):
    n, c, d, h, w = x_ncdhw.shape
    assert c == CIN

    # bf16 BEFORE the pad/flatten so all host-side data movement is 2-byte.
    xb = jnp.transpose(x_ncdhw, (0, 2, 3, 4, 1)).astype(jnp.bfloat16)
    # pad D by (1,1), H by (1,2), W by (1,1): the extra trailing H row keeps
    # the flattened tap windows (offset up to 2*(W+2)+2) inside the array.
    xp = jnp.pad(xb, ((0, 0), (1, 1), (1, 2), (1, 1), (0, 0)))
    hwf = (h + 3) * (w + 2)
    x_flat = xp.reshape(n, d + 2, hwf, c)           # (N, D+2, (H+3)*(W+2), C)
    m_step = h * (w + 2)                            # rows per (n, d) step

    # Pass A: fused conv + masked BN partial sums.
    y, stats = _conv3_stats(x_flat, params["w1"], n=n, d=d, hwf=hwf,
                            m_step=m_step, w_out=w, c=c)

    # Global training-mode BN statistics (biased variance) over the true M.
    cnt = n * d * h * w
    s1 = jnp.sum(stats[..., 0, :], axis=(0, 1))
    s2 = jnp.sum(stats[..., 1, :], axis=(0, 1))
    mean = s1 / cnt
    var = jnp.maximum(s2 / cnt - mean * mean, 0.0)
    inv = jax.lax.rsqrt(var + BN_EPS)
    scale = (params["gamma"] * inv)[None, :]
    shift = (params["beta"] - mean * params["gamma"] * inv)[None, :]

    # Pass B: BN apply + ReLU + fused 1x1 conv + sigmoid(cls), channel-major.
    out = _bn_relu_conv1(y, scale, shift, params["w2_bd"], params["b2"],
                         n=n, d=d, m_step=m_step)
    out = out.reshape(n, d, COUT_FUSED, h, w + 2)[..., :w]   # drop junk cols
    out = jnp.transpose(out, (0, 2, 1, 3, 4))                # (N, 8, D, H, W)

    hm = out[:, 0:1]
    wh = out[:, 1:4]
    offset = out[:, 4:7]
    return hm, wh, offset


def make_params(key, cin=CIN, cmid=CMID):
    """Random per-head weights (for the reference) + fused kernel params."""
    couts = (1, 3, 3)
    keys = jax.random.split(key, 3)
    raw = []
    w1_cols, gammas, betas = [], [], []
    w2_bd = jnp.zeros((3 * cmid, COUT_FUSED), jnp.float32)
    b2f = jnp.zeros((COUT_FUSED,), jnp.float32)
    col = 0
    for hidx, (k, cout) in enumerate(zip(keys, couts)):
        k1, k2, k3, k4, k5 = jax.random.split(k, 5)
        w1 = jax.random.normal(k1, (cmid, cin, 3, 3, 3), jnp.float32) / math.sqrt(cin * 27)
        w2 = jax.random.normal(k2, (cout, cmid), jnp.float32) / math.sqrt(cmid)
        b2 = (jax.random.uniform(k3, (cout,), jnp.float32) - 0.5) / math.sqrt(cmid)
        gamma = 1.0 + 0.1 * jax.random.normal(k4, (cmid,), jnp.float32)
        beta = 0.1 * jax.random.normal(k5, (cmid,), jnp.float32)
        raw.append(dict(w1=w1, gamma=gamma, beta=beta, w2=w2, b2=b2))
        # (Cout, Cin, kd, kh, kw) -> (kd, kh, kw, cin, cout) -> (9, 3*cin, cmid)
        wt = jnp.transpose(w1, (2, 3, 4, 1, 0)).reshape(9, 3 * cin, cmid)
        w1_cols.append(wt)
        gammas.append(gamma)
        betas.append(beta)
        w2_bd = w2_bd.at[hidx * cmid:(hidx + 1) * cmid, col:col + cout].set(w2.T)
        b2f = b2f.at[col:col + cout].set(b2)
        col += cout
    fused = dict(
        w1=jnp.concatenate(w1_cols, axis=-1).astype(jnp.bfloat16),   # (9,192,192)
        gamma=jnp.concatenate(gammas),                               # (192,)
        beta=jnp.concatenate(betas),                                 # (192,)
        w2_bd=w2_bd.astype(jnp.bfloat16),                            # (192, 8)
        b2=b2f.reshape(1, COUT_FUSED),                               # (1, 8)
    )
    return fused, raw


def _reference_head(x, p):
    y = jax.lax.conv_general_dilated(
        x, p["w1"], window_strides=(1, 1, 1),
        padding=((1, 1), (1, 1), (1, 1)),
        dimension_numbers=("NCDHW", "OIDHW", "NCDHW"),
        precision=jax.lax.Precision.HIGHEST)
    mean = jnp.mean(y, axis=(0, 2, 3, 4), keepdims=True)
    var = jnp.var(y, axis=(0, 2, 3, 4), keepdims=True)       # biased, as in BN
    yn = (y - mean) * jax.lax.rsqrt(var + BN_EPS)
    yn = p["gamma"].reshape(1, -1, 1, 1, 1) * yn + p["beta"].reshape(1, -1, 1, 1, 1)
    hv = jnp.maximum(yn, 0.0)
    z = jnp.einsum("ncdhw,oc->nodhw", hv, p["w2"],
                   precision=jax.lax.Precision.HIGHEST)
    return z + p["b2"].reshape(1, -1, 1, 1, 1)


def reference_forward(x, raw):
    hm = jax.nn.sigmoid(_reference_head(x, raw[0]))
    wh = _reference_head(x, raw[1])
    offset = _reference_head(x, raw[2])
    return hm, wh, offset


if __name__ == "__main__":
    key = jax.random.PRNGKey(0)
    kx, kp = jax.random.split(key, 2)

    # Module fixes Cin = 64; keep spatial dims small for the smoke test.
    N, C, D, H, W = 2, 64, 4, 8, 8
    x = jax.random.normal(kx, (N, C, D, H, W), jnp.float32)

    params, raw = make_params(kp)

    hm, wh, offset = resnet50_head_forward(x, params)
    jax.block_until_ready((hm, wh, offset))

    assert hm.shape == (N, 1, D, H, W)
    assert wh.shape == (N, 3, D, H, W)
    assert offset.shape == (N, 3, D, H, W)
    assert bool(jnp.all((hm >= 0.0) & (hm <= 1.0)))
    assert bool(jnp.all(jnp.isfinite(wh))) and bool(jnp.all(jnp.isfinite(offset)))

    # Loose-tolerance check vs. a pure-JAX f32 reference (kernel uses bf16 MXU
    # matmuls with f32 accumulation, so small numeric drift is expected).
    hm_r, wh_r, off_r = reference_forward(x, raw)
    for got, ref in ((hm, hm_r), (wh, wh_r), (offset, off_r)):
        err = float(jnp.max(jnp.abs(got - ref)))
        assert err < 0.15, f"max abs diff {err}"

    print("KERNEL_OK")
</pallas_src>

<mosaic_0001>
module attributes {stable_mosaic.version = 11 : i64} {
  func.func @kernel(%arg0: i32, %arg1: i32, %arg2: memref<1x1x110x64xbf16, #tpu.memory_space<vmem>>, %arg3: memref<1x1x110x64xbf16, #tpu.memory_space<vmem>>, %arg4: memref<1x1x110x64xbf16, #tpu.memory_space<vmem>>, %arg5: memref<9x192x192xbf16, #tpu.memory_space<vmem>>, %arg6: memref<1x1x80x192xbf16, #tpu.memory_space<vmem>>, %arg7: memref<1x1x2x192xf32, #tpu.memory_space<vmem>>) attributes {dimension_semantics = [#tpu.dimension_semantics<parallel>, #tpu.dimension_semantics<parallel>], iteration_bounds = array<i64: 2, 4>, scalar_prefetch = 0 : i64, scratch_operands = 0 : i64, tpu.core_type = #tpu.core_type<tc>, window_params = [{transform_indices = @transform_0, window_bounds = array<i64: 1, 1, 110, 64>}, {transform_indices = @transform_1, window_bounds = array<i64: 1, 1, 110, 64>}, {transform_indices = @transform_2, window_bounds = array<i64: 1, 1, 110, 64>}, {pipeline_mode = #tpu.pipeline_mode<synchronous>, transform_indices = @transform_3, window_bounds = array<i64: 9, 192, 192>}, {transform_indices = @transform_4, window_bounds = array<i64: 1, 1, 80, 192>}, {transform_indices = @transform_5, window_bounds = array<i64: 1, 1, 2, 192>}]} {
    %cst = arith.constant 0.000000e+00 : f32
    %0 = vector.broadcast %cst : f32 to vector<80x192xf32>
    %c0 = arith.constant 0 : index
    %c0_0 = arith.constant 0 : index
    %c0_1 = arith.constant 0 : index
    %c0_2 = arith.constant 0 : index
    %1 = vector.load %arg2[%c0, %c0_0, %c0_1, %c0_2] : memref<1x1x110x64xbf16, #tpu.memory_space<vmem>>, vector<1x1x80x64xbf16>
    %2 = vector.shape_cast %1 : vector<1x1x80x64xbf16> to vector<80x64xbf16>
    %c0_3 = arith.constant 0 : index
    %c0_4 = arith.constant 0 : index
    %c1 = arith.constant 1 : index
    %c0_5 = arith.constant 0 : index
    %3 = vector.load %arg2[%c0_3, %c0_4, %c1, %c0_5] : memref<1x1x110x64xbf16, #tpu.memory_space<vmem>>, vector<1x1x80x64xbf16>
    %4 = vector.shape_cast %3 : vector<1x1x80x64xbf16> to vector<80x64xbf16>
    %c0_6 = arith.constant 0 : index
    %c0_7 = arith.constant 0 : index
    %c2 = arith.constant 2 : index
    %c0_8 = arith.constant 0 : index
    %5 = vector.load %arg2[%c0_6, %c0_7, %c2, %c0_8] : memref<1x1x110x64xbf16, #tpu.memory_space<vmem>>, vector<1x1x80x64xbf16>
    %6 = vector.shape_cast %5 : vector<1x1x80x64xbf16> to vector<80x64xbf16>
    %7 = tpu.concatenate %2, %4, %6 in 1 : vector<80x64xbf16>, vector<80x64xbf16>, vector<80x64xbf16> -> vector<80x192xbf16>
    %c0_9 = arith.constant 0 : index
    %c0_10 = arith.constant 0 : index
    %c0_11 = arith.constant 0 : index
    %8 = vector.load %arg5[%c0_9, %c0_10, %c0_11] : memref<9x192x192xbf16, #tpu.memory_space<vmem>>, vector<1x192x192xbf16>
    %9 = vector.shape_cast %8 : vector<1x192x192xbf16> to vector<192x192xbf16>
    %cst_12 = arith.constant dense<0.000000e+00> : vector<80x192xf32>
    %10 = tpu.matmul %7, %9, %cst_12 {dimension_numbers = #tpu.dot_dimension_numbers<[1], [0], [0], [1], [0, 0, 1, 1], [], []>} : vector<80x192xbf16>, vector<192x192xbf16>, vector<80x192xf32> -> vector<80x192xf32>
    %11 = arith.addf %0, %10 : vector<80x192xf32>
    %c0_13 = arith.constant 0 : index
    %c0_14 = arith.constant 0 : index
    %c10 = arith.constant 10 : index
    %c0_15 = arith.constant 0 : index
    %12 = vector.load %arg2[%c0_13, %c0_14, %c10, %c0_15] : memref<1x1x110x64xbf16, #tpu.memory_space<vmem>>, vector<1x1x80x64xbf16>
    %13 = vector.shape_cast %12 : vector<1x1x80x64xbf16> to vector<80x64xbf16>
    %c0_16 = arith.constant 0 : index
    %c0_17 = arith.constant 0 : index
    %c11 = arith.constant 11 : index
    %c0_18 = arith.constant 0 : index
    %14 = vector.load %arg2[%c0_16, %c0_17, %c11, %c0_18] : memref<1x1x110x64xbf16, #tpu.memory_space<vmem>>, vector<1x1x80x64xbf16>
    %15 = vector.shape_cast %14 : vector<1x1x80x64xbf16> to vector<80x64xbf16>
    %c0_19 = arith.constant 0 : index
    %c0_20 = arith.constant 0 : index
    %c12 = arith.constant 12 : index
    %c0_21 = arith.constant 0 : index
    %16 = vector.load %arg2[%c0_19, %c0_20, %c12, %c0_21] : memref<1x1x110x64xbf16, #tpu.memory_space<vmem>>, vector<1x1x80x64xbf16>
    %17 = vector.shape_cast %16 : vector<1x1x80x64xbf16> to vector<80x64xbf16>
    %18 = tpu.concatenate %13, %15, %17 in 1 : vector<80x64xbf16>, vector<80x64xbf16>, vector<80x64xbf16> -> vector<80x192xbf16>
    %c1_22 = arith.constant 1 : index
    %c0_23 = arith.constant 0 : index
    %c0_24 = arith.constant 0 : index
    %19 = vector.load %arg5[%c1_22, %c0_23, %c0_24] : memref<9x192x192xbf16, #tpu.memory_space<vmem>>, vector<1x192x192xbf16>
    %20 = vector.shape_cast %19 : vector<1x192x192xbf16> to vector<192x192xbf16>
    %cst_25 = arith.constant dense<0.000000e+00> : vector<80x192xf32>
    %21 = tpu.matmul %18, %20, %cst_25 {dimension_numbers = #tpu.dot_dimension_numbers<[1], [0], [0], [1], [0, 0, 1, 1], [], []>} : vector<80x192xbf16>, vector<192x192xbf16>, vector<80x192xf32> -> vector<80x192xf32>
    %22 = arith.addf %11, %21 : vector<80x192xf32>
    %c0_26 = arith.constant 0 : index
    %c0_27 = arith.constant 0 : index
    %c20 = arith.constant 20 : index
    %c0_28 = arith.constant 0 : index
    %23 = vector.load %arg2[%c0_26, %c0_27, %c20, %c0_28] : memref<1x1x110x64xbf16, #tpu.memory_space<vmem>>, vector<1x1x80x64xbf16>
    %24 = vector.shape_cast %23 : vector<1x1x80x64xbf16> to vector<80x64xbf16>
    %c0_29 = arith.constant 0 : index
    %c0_30 = arith.constant 0 : index
    %c21 = arith.constant 21 : index
    %c0_31 = arith.constant 0 : index
    %25 = vector.load %arg2[%c0_29, %c0_30, %c21, %c0_31] : memref<1x1x110x64xbf16, #tpu.memory_space<vmem>>, vector<1x1x80x64xbf16>
    %26 = vector.shape_cast %25 : vector<1x1x80x64xbf16> to vector<80x64xbf16>
    %c0_32 = arith.constant 0 : index
    %c0_33 = arith.constant 0 : index
    %c22 = arith.constant 22 : index
    %c0_34 = arith.constant 0 : index
    %27 = vector.load %arg2[%c0_32, %c0_33, %c22, %c0_34] : memref<1x1x110x64xbf16, #tpu.memory_space<vmem>>, vector<1x1x80x64xbf16>
    %28 = vector.shape_cast %27 : vector<1x1x80x64xbf16> to vector<80x64xbf16>
    %29 = tpu.concatenate %24, %26, %28 in 1 : vector<80x64xbf16>, vector<80x64xbf16>, vector<80x64xbf16> -> vector<80x192xbf16>
    %c2_35 = arith.constant 2 : index
    %c0_36 = arith.constant 0 : index
    %c0_37 = arith.constant 0 : index
    %30 = vector.load %arg5[%c2_35, %c0_36, %c0_37] : memref<9x192x192xbf16, #tpu.memory_space<vmem>>, vector<1x192x192xbf16>
    %31 = vector.shape_cast %30 : vector<1x192x192xbf16> to vector<192x192xbf16>
    %cst_38 = arith.constant dense<0.000000e+00> : vector<80x192xf32>
    %32 = tpu.matmul %29, %31, %cst_38 {dimension_numbers = #tpu.dot_dimension_numbers<[1], [0], [0], [1], [0, 0, 1, 1], [], []>} : vector<80x192xbf16>, vector<192x192xbf16>, vector<80x192xf32> -> vector<80x192xf32>
    %33 = arith.addf %22, %32 : vector<80x192xf32>
    %c0_39 = arith.constant 0 : index
    %c0_40 = arith.constant 0 : index
    %c0_41 = arith.constant 0 : index
    %c0_42 = arith.constant 0 : index
    %34 = vector.load %arg3[%c0_39, %c0_40, %c0_41, %c0_42] : memref<1x1x110x64xbf16, #tpu.memory_space<vmem>>, vector<1x1x80x64xbf16>
    %35 = vector.shape_cast %34 : vector<1x1x80x64xbf16> to vector<80x64xbf16>
    %c0_43 = arith.constant 0 : index
    %c0_44 = arith.constant 0 : index
    %c1_45 = arith.constant 1 : index
    %c0_46 = arith.constant 0 : index
    %36 = vector.load %arg3[%c0_43, %c0_44, %c1_45, %c0_46] : memref<1x1x110x64xbf16, #tpu.memory_space<vmem>>, vector<1x1x80x64xbf16>
    %37 = vector.shape_cast %36 : vector<1x1x80x64xbf16> to vector<80x64xbf16>
    %c0_47 = arith.constant 0 : index
    %c0_48 = arith.constant 0 : index
    %c2_49 = arith.constant 2 : index
    %c0_50 = arith.constant 0 : index
    %38 = vector.load %arg3[%c0_47, %c0_48, %c2_49, %c0_50] : memref<1x1x110x64xbf16, #tpu.memory_space<vmem>>, vector<1x1x80x64xbf16>
    %39 = vector.shape_cast %38 : vector<1x1x80x64xbf16> to vector<80x64xbf16>
    %40 = tpu.concatenate %35, %37, %39 in 1 : vector<80x64xbf16>, vector<80x64xbf16>, vector<80x64xbf16> -> vector<80x192xbf16>
    %c3 = arith.constant 3 : index
    %c0_51 = arith.constant 0 : index
    %c0_52 = arith.constant 0 : index
    %41 = vector.load %arg5[%c3, %c0_51, %c0_52] : memref<9x192x192xbf16, #tpu.memory_space<vmem>>, vector<1x192x192xbf16>
    %42 = vector.shape_cast %41 : vector<1x192x192xbf16> to vector<192x192xbf16>
    %cst_53 = arith.constant dense<0.000000e+00> : vector<80x192xf32>
    %43 = tpu.matmul %40, %42, %cst_53 {dimension_numbers = #tpu.dot_dimension_numbers<[1], [0], [0], [1], [0, 0, 1, 1], [], []>} : vector<80x192xbf16>, vector<192x192xbf16>, vector<80x192xf32> -> vector<80x192xf32>
    %44 = arith.addf %33, %43 : vector<80x192xf32>
    %c0_54 = arith.constant 0 : index
    %c0_55 = arith.constant 0 : index
    %c10_56 = arith.constant 10 : index
    %c0_57 = arith.constant 0 : index
    %45 = vector.load %arg3[%c0_54, %c0_55, %c10_56, %c0_57] : memref<1x1x110x64xbf16, #tpu.memory_space<vmem>>, vector<1x1x80x64xbf16>
    %46 = vector.shape_cast %45 : vector<1x1x80x64xbf16> to vector<80x64xbf16>
    %c0_58 = arith.constant 0 : index
    %c0_59 = arith.constant 0 : index
    %c11_60 = arith.constant 11 : index
    %c0_61 = arith.constant 0 : index
    %47 = vector.load %arg3[%c0_58, %c0_59, %c11_60, %c0_61] : memref<1x1x110x64xbf16, #tpu.memory_space<vmem>>, vector<1x1x80x64xbf16>
    %48 = vector.shape_cast %47 : vector<1x1x80x64xbf16> to vector<80x64xbf16>
    %c0_62 = arith.constant 0 : index
    %c0_63 = arith.constant 0 : index
    %c12_64 = arith.constant 12 : index
    %c0_65 = arith.constant 0 : index
    %49 = vector.load %arg3[%c0_62, %c0_63, %c12_64, %c0_65] : memref<1x1x110x64xbf16, #tpu.memory_space<vmem>>, vector<1x1x80x64xbf16>
    %50 = vector.shape_cast %49 : vector<1x1x80x64xbf16> to vector<80x64xbf16>
    %51 = tpu.concatenate %46, %48, %50 in 1 : vector<80x64xbf16>, vector<80x64xbf16>, vector<80x64xbf16> -> vector<80x192xbf16>
    %c4 = arith.constant 4 : index
    %c0_66 = arith.constant 0 : index
    %c0_67 = arith.constant 0 : index
    %52 = vector.load %arg5[%c4, %c0_66, %c0_67] : memref<9x192x192xbf16, #tpu.memory_space<vmem>>, vector<1x192x192xbf16>
    %53 = vector.shape_cast %52 : vector<1x192x192xbf16> to vector<192x192xbf16>
    %cst_68 = arith.constant dense<0.000000e+00> : vector<80x192xf32>
    %54 = tpu.matmul %51, %53, %cst_68 {dimension_numbers = #tpu.dot_dimension_numbers<[1], [0], [0], [1], [0, 0, 1, 1], [], []>} : vector<80x192xbf16>, vector<192x192xbf16>, vector<80x192xf32> -> vector<80x192xf32>
    %55 = arith.addf %44, %54 : vector<80x192xf32>
    %c0_69 = arith.constant 0 : index
    %c0_70 = arith.constant 0 : index
    %c20_71 = arith.constant 20 : index
    %c0_72 = arith.constant 0 : index
    %56 = vector.load %arg3[%c0_69, %c0_70, %c20_71, %c0_72] : memref<1x1x110x64xbf16, #tpu.memory_space<vmem>>, vector<1x1x80x64xbf16>
    %57 = vector.shape_cast %56 : vector<1x1x80x64xbf16> to vector<80x64xbf16>
    %c0_73 = arith.constant 0 : index
    %c0_74 = arith.constant 0 : index
    %c21_75 = arith.constant 21 : index
    %c0_76 = arith.constant 0 : index
    %58 = vector.load %arg3[%c0_73, %c0_74, %c21_75, %c0_76] : memref<1x1x110x64xbf16, #tpu.memory_space<vmem>>, vector<1x1x80x64xbf16>
    %59 = vector.shape_cast %58 : vector<1x1x80x64xbf16> to vector<80x64xbf16>
    %c0_77 = arith.constant 0 : index
    %c0_78 = arith.constant 0 : index
    %c22_79 = arith.constant 22 : index
    %c0_80 = arith.constant 0 : index
    %60 = vector.load %arg3[%c0_77, %c0_78, %c22_79, %c0_80] : memref<1x1x110x64xbf16, #tpu.memory_space<vmem>>, vector<1x1x80x64xbf16>
    %61 = vector.shape_cast %60 : vector<1x1x80x64xbf16> to vector<80x64xbf16>
    %62 = tpu.concatenate %57, %59, %61 in 1 : vector<80x64xbf16>, vector<80x64xbf16>, vector<80x64xbf16> -> vector<80x192xbf16>
    %c5 = arith.constant 5 : index
    %c0_81 = arith.constant 0 : index
    %c0_82 = arith.constant 0 : index
    %63 = vector.load %arg5[%c5, %c0_81, %c0_82] : memref<9x192x192xbf16, #tpu.memory_space<vmem>>, vector<1x192x192xbf16>
    %64 = vector.shape_cast %63 : vector<1x192x192xbf16> to vector<192x192xbf16>
    %cst_83 = arith.constant dense<0.000000e+00> : vector<80x192xf32>
    %65 = tpu.matmul %62, %64, %cst_83 {dimension_numbers = #tpu.dot_dimension_numbers<[1], [0], [0], [1], [0, 0, 1, 1], [], []>} : vector<80x192xbf16>, vector<192x192xbf16>, vector<80x192xf32> -> vector<80x192xf32>
    %66 = arith.addf %55, %65 : vector<80x192xf32>
    %c0_84 = arith.constant 0 : index
    %c0_85 = arith.constant 0 : index
    %c0_86 = arith.constant 0 : index
    %c0_87 = arith.constant 0 : index
    %67 = vector.load %arg4[%c0_84, %c0_85, %c0_86, %c0_87] : memref<1x1x110x64xbf16, #tpu.memory_space<vmem>>, vector<1x1x80x64xbf16>
    %68 = vector.shape_cast %67 : vector<1x1x80x64xbf16> to vector<80x64xbf16>
    %c0_88 = arith.constant 0 : index
    %c0_89 = arith.constant 0 : index
    %c1_90 = arith.constant 1 : index
    %c0_91 = arith.constant 0 : index
    %69 = vector.load %arg4[%c0_88, %c0_89, %c1_90, %c0_91] : memref<1x1x110x64xbf16, #tpu.memory_space<vmem>>, vector<1x1x80x64xbf16>
    %70 = vector.shape_cast %69 : vector<1x1x80x64xbf16> to vector<80x64xbf16>
    %c0_92 = arith.constant 0 : index
    %c0_93 = arith.constant 0 : index
    %c2_94 = arith.constant 2 : index
    %c0_95 = arith.constant 0 : index
    %71 = vector.load %arg4[%c0_92, %c0_93, %c2_94, %c0_95] : memref<1x1x110x64xbf16, #tpu.memory_space<vmem>>, vector<1x1x80x64xbf16>
    %72 = vector.shape_cast %71 : vector<1x1x80x64xbf16> to vector<80x64xbf16>
    %73 = tpu.concatenate %68, %70, %72 in 1 : vector<80x64xbf16>, vector<80x64xbf16>, vector<80x64xbf16> -> vector<80x192xbf16>
    %c6 = arith.constant 6 : index
    %c0_96 = arith.constant 0 : index
    %c0_97 = arith.constant 0 : index
    %74 = vector.load %arg5[%c6, %c0_96, %c0_97] : memref<9x192x192xbf16, #tpu.memory_space<vmem>>, vector<1x192x192xbf16>
    %75 = vector.shape_cast %74 : vector<1x192x192xbf16> to vector<192x192xbf16>
    %cst_98 = arith.constant dense<0.000000e+00> : vector<80x192xf32>
    %76 = tpu.matmul %73, %75, %cst_98 {dimension_numbers = #tpu.dot_dimension_numbers<[1], [0], [0], [1], [0, 0, 1, 1], [], []>} : vector<80x192xbf16>, vector<192x192xbf16>, vector<80x192xf32> -> vector<80x192xf32>
    %77 = arith.addf %66, %76 : vector<80x192xf32>
    %c0_99 = arith.constant 0 : index
    %c0_100 = arith.constant 0 : index
    %c10_101 = arith.constant 10 : index
    %c0_102 = arith.constant 0 : index
    %78 = vector.load %arg4[%c0_99, %c0_100, %c10_101, %c0_102] : memref<1x1x110x64xbf16, #tpu.memory_space<vmem>>, vector<1x1x80x64xbf16>
    %79 = vector.shape_cast %78 : vector<1x1x80x64xbf16> to vector<80x64xbf16>
    %c0_103 = arith.constant 0 : index
    %c0_104 = arith.constant 0 : index
    %c11_105 = arith.constant 11 : index
    %c0_106 = arith.constant 0 : index
    %80 = vector.load %arg4[%c0_103, %c0_104, %c11_105, %c0_106] : memref<1x1x110x64xbf16, #tpu.memory_space<vmem>>, vector<1x1x80x64xbf16>
    %81 = vector.shape_cast %80 : vector<1x1x80x64xbf16> to vector<80x64xbf16>
    %c0_107 = arith.constant 0 : index
    %c0_108 = arith.constant 0 : index
    %c12_109 = arith.constant 12 : index
    %c0_110 = arith.constant 0 : index
    %82 = vector.load %arg4[%c0_107, %c0_108, %c12_109, %c0_110] : memref<1x1x110x64xbf16, #tpu.memory_space<vmem>>, vector<1x1x80x64xbf16>
    %83 = vector.shape_cast %82 : vector<1x1x80x64xbf16> to vector<80x64xbf16>
    %84 = tpu.concatenate %79, %81, %83 in 1 : vector<80x64xbf16>, vector<80x64xbf16>, vector<80x64xbf16> -> vector<80x192xbf16>
    %c7 = arith.constant 7 : index
    %c0_111 = arith.constant 0 : index
    %c0_112 = arith.constant 0 : index
    %85 = vector.load %arg5[%c7, %c0_111, %c0_112] : memref<9x192x192xbf16, #tpu.memory_space<vmem>>, vector<1x192x192xbf16>
    %86 = vector.shape_cast %85 : vector<1x192x192xbf16> to vector<192x192xbf16>
    %cst_113 = arith.constant dense<0.000000e+00> : vector<80x192xf32>
    %87 = tpu.matmul %84, %86, %cst_113 {dimension_numbers = #tpu.dot_dimension_numbers<[1], [0], [0], [1], [0, 0, 1, 1], [], []>} : vector<80x192xbf16>, vector<192x192xbf16>, vector<80x192xf32> -> vector<80x192xf32>
    %88 = arith.addf %77, %87 : vector<80x192xf32>
    %c0_114 = arith.constant 0 : index
    %c0_115 = arith.constant 0 : index
    %c20_116 = arith.constant 20 : index
    %c0_117 = arith.constant 0 : index
    %89 = vector.load %arg4[%c0_114, %c0_115, %c20_116, %c0_117] : memref<1x1x110x64xbf16, #tpu.memory_space<vmem>>, vector<1x1x80x64xbf16>
    %90 = vector.shape_cast %89 : vector<1x1x80x64xbf16> to vector<80x64xbf16>
    %c0_118 = arith.constant 0 : index
    %c0_119 = arith.constant 0 : index
    %c21_120 = arith.constant 21 : index
    %c0_121 = arith.constant 0 : index
    %91 = vector.load %arg4[%c0_118, %c0_119, %c21_120, %c0_121] : memref<1x1x110x64xbf16, #tpu.memory_space<vmem>>, vector<1x1x80x64xbf16>
    %92 = vector.shape_cast %91 : vector<1x1x80x64xbf16> to vector<80x64xbf16>
    %c0_122 = arith.constant 0 : index
    %c0_123 = arith.constant 0 : index
    %c22_124 = arith.constant 22 : index
    %c0_125 = arith.constant 0 : index
    %93 = vector.load %arg4[%c0_122, %c0_123, %c22_124, %c0_125] : memref<1x1x110x64xbf16, #tpu.memory_space<vmem>>, vector<1x1x80x64xbf16>
    %94 = vector.shape_cast %93 : vector<1x1x80x64xbf16> to vector<80x64xbf16>
    %95 = tpu.concatenate %90, %92, %94 in 1 : vector<80x64xbf16>, vector<80x64xbf16>, vector<80x64xbf16> -> vector<80x192xbf16>
    %c8 = arith.constant 8 : index
    %c0_126 = arith.constant 0 : index
    %c0_127 = arith.constant 0 : index
    %96 = vector.load %arg5[%c8, %c0_126, %c0_127] : memref<9x192x192xbf16, #tpu.memory_space<vmem>>, vector<1x192x192xbf16>
    %97 = vector.shape_cast %96 : vector<1x192x192xbf16> to vector<192x192xbf16>
    %cst_128 = arith.constant dense<0.000000e+00> : vector<80x192xf32>
    %98 = tpu.matmul %95, %97, %cst_128 {dimension_numbers = #tpu.dot_dimension_numbers<[1], [0], [0], [1], [0, 0, 1, 1], [], []>} : vector<80x192xbf16>, vector<192x192xbf16>, vector<80x192xf32> -> vector<80x192xf32>
    %99 = arith.addf %88, %98 : vector<80x192xf32>
    %100 = arith.truncf %99 : vector<80x192xf32> to vector<80x192xbf16>
    %c0_129 = arith.constant 0 : index
    %c0_130 = arith.constant 0 : index
    %c0_131 = arith.constant 0 : index
    %c0_132 = arith.constant 0 : index
    %101 = vector.load %arg6[%c0_129, %c0_130, %c0_131, %c0_132] : memref<1x1x80x192xbf16, #tpu.memory_space<vmem>>, vector<1x1x80x192xbf16>
    %102 = vector.shape_cast %101 : vector<1x1x80x192xbf16> to vector<80x192xbf16>
    %103 = vector.shape_cast %100 : vector<80x192xbf16> to vector<1x1x80x192xbf16>
    tpu.vector_store %arg6[%c0_129, %c0_130, %c0_131, %c0_132], %103 {strides = array<i32>} : memref<1x1x80x192xbf16, #tpu.memory_space<vmem>>, vector<1x1x80x192xbf16>,
    %104 = arith.extf %100 : vector<80x192xbf16> to vector<80x192xf32>
    %105 = tpu.iota {dimensions = array<i32: 0>} : vector<80x1xi32>
    %c10_i32 = arith.constant 10 : i32
    %c0_i32 = arith.constant 0 : i32
    %106 = arith.cmpi eq, %c10_i32, %c0_i32 : i32
    %c1_i32 = arith.constant 1 : i32
    %107 = arith.select %106, %c1_i32, %c10_i32 : i32
    %108 = vector.broadcast %107 : i32 to vector<80x1xi32>
    %109 = arith.remsi %105, %108 : vector<80x1xi32>
    %c0_i32_133 = arith.constant 0 : i32
    %110 = vector.broadcast %c0_i32_133 : i32 to vector<80x1xi32>
    %111 = arith.cmpi ne, %109, %110 : vector<80x1xi32>
    %c0_i32_134 = arith.constant 0 : i32
    %112 = vector.broadcast %c0_i32_134 : i32 to vector<80x1xi32>
    %113 = arith.cmpi slt, %109, %112 : vector<80x1xi32>
    %c0_i32_135 = arith.constant 0 : i32
    %114 = arith.cmpi slt, %107, %c0_i32_135 : i32
    %115 = vector.broadcast %114 : i1 to vector<80x1xi1>
    %116 = vector.broadcast %115 : vector<80x1xi1> to vector<80x1xi1>
    %117 = arith.xori %113, %116 : vector<80x1xi1>
    %118 = arith.andi %117, %111 : vector<80x1xi1>
    %119 = vector.broadcast %107 : i32 to vector<80x1xi32>
    %120 = arith.addi %109, %119 : vector<80x1xi32>
    %121 = arith.select %118, %120, %109 : vector<80x1xi1>, vector<80x1xi32>
    %c8_i32 = arith.constant 8 : i32
    %122 = vector.broadcast %c8_i32 : i32 to vector<80x1xi32>
    %123 = arith.cmpi slt, %121, %122 : vector<80x1xi32>
    %124 = arith.extui %123 : vector<80x1xi1> to vector<80x1xi32>
    %125 = arith.sitofp %124 : vector<80x1xi32> to vector<80x1xf32>
    %126 = vector.broadcast %125 : vector<80x1xf32> to vector<80x192xf32>
    %127 = arith.mulf %104, %126 : vector<80x192xf32>
    %cst_136 = arith.constant dense<0.000000e+00> : vector<192xf32>
    %128 = vector.multi_reduction <add>, %127, %cst_136 [0] : vector<80x192xf32> to vector<192xf32>
    %129 = vector.shape_cast %128 : vector<192xf32> to vector<1x192xf32>
    %c0_137 = arith.constant 0 : index
    %c0_138 = arith.constant 0 : index
    %c0_139 = arith.constant 0 : index
    %c0_140 = arith.constant 0 : index
    %130 = vector.load %arg7[%c0_137, %c0_138, %c0_139, %c0_140] : memref<1x1x2x192xf32, #tpu.memory_space<vmem>>, vector<1x1x1x192xf32>
    %131 = vector.shape_cast %130 : vector<1x1x1x192xf32> to vector<1x192xf32>
    %132 = vector.shape_cast %129 : vector<1x192xf32> to vector<1x1x1x192xf32>
    tpu.vector_store %arg7[%c0_137, %c0_138, %c0_139, %c0_140], %132 {strides = array<i32>} : memref<1x1x2x192xf32, #tpu.memory_space<vmem>>, vector<1x1x1x192xf32>,
    %133 = arith.mulf %127, %104 : vector<80x192xf32>
    %cst_141 = arith.constant dense<0.000000e+00> : vector<192xf32>
    %134 = vector.multi_reduction <add>, %133, %cst_141 [0] : vector<80x192xf32> to vector<192xf32>
    %135 = vector.shape_cast %134 : vector<192xf32> to vector<1x192xf32>
    %c0_142 = arith.constant 0 : index
    %c0_143 = arith.constant 0 : index
    %c1_144 = arith.constant 1 : index
    %c0_145 = arith.constant 0 : index
    %136 = vector.load %arg7[%c0_142, %c0_143, %c1_144, %c0_145] : memref<1x1x2x192xf32, #tpu.memory_space<vmem>>, vector<1x1x1x192xf32>
    %137 = vector.shape_cast %136 : vector<1x1x1x192xf32> to vector<1x192xf32>
    %138 = vector.shape_cast %135 : vector<1x192xf32> to vector<1x1x1x192xf32>
    tpu.vector_store %arg7[%c0_142, %c0_143, %c1_144, %c0_145], %138 {strides = array<i32>} : memref<1x1x2x192xf32, #tpu.memory_space<vmem>>, vector<1x1x1x192xf32>,
    return
  }
  func.func @transform_0(%arg0: i32, %arg1: i32) -> (i32, i32, i32, i32) {
    %c0_i32 = arith.constant 0 : i32
    %0 = arith.addi %arg1, %c0_i32 : i32
    %c0_i32_0 = arith.constant 0 : i32
    %c0_i32_1 = arith.constant 0 : i32
    %c0_i32_2 = arith.constant 0 : i32
    return %arg0, %0, %c0_i32_0, %c0_i32_1 : i32, i32, i32, i32
  }
  func.func @transform_1(%arg0: i32, %arg1: i32) -> (i32, i32, i32, i32) {
    %c1_i32 = arith.constant 1 : i32
    %0 = arith.addi %arg1, %c1_i32 : i32
    %c0_i32 = arith.constant 0 : i32
    %c0_i32_0 = arith.constant 0 : i32
    %c0_i32_1 = arith.constant 0 : i32
    return %arg0, %0, %c0_i32, %c0_i32_0 : i32, i32, i32, i32
  }
  func.func @transform_2(%arg0: i32, %arg1: i32) -> (i32, i32, i32, i32) {
    %c2_i32 = arith.constant 2 : i32
    %0 = arith.addi %arg1, %c2_i32 : i32
    %c0_i32 = arith.constant 0 : i32
    %c0_i32_0 = arith.constant 0 : i32
    %c0_i32_1 = arith.constant 0 : i32
    return %arg0, %0, %c0_i32, %c0_i32_0 : i32, i32, i32, i32
  }
  func.func @transform_3(%arg0: i32, %arg1: i32) -> (i32, i32, i32) {
    %c0_i32 = arith.constant 0 : i32
    %c0_i32_0 = arith.constant 0 : i32
    %c0_i32_1 = arith.constant 0 : i32
    %c0_i32_2 = arith.constant 0 : i32
    return %c0_i32, %c0_i32_0, %c0_i32_1 : i32, i32, i32
  }
  func.func @transform_4(%arg0: i32, %arg1: i32) -> (i32, i32, i32, i32) {
    %c0_i32 = arith.constant 0 : i32
    %c0_i32_0 = arith.constant 0 : i32
    %c0_i32_1 = arith.constant 0 : i32
    return %arg0, %arg1, %c0_i32, %c0_i32_0 : i32, i32, i32, i32
  }
  func.func @transform_5(%arg0: i32, %arg1: i32) -> (i32, i32, i32, i32) {
    %c0_i32 = arith.constant 0 : i32
    %c0_i32_0 = arith.constant 0 : i32
    %c0_i32_1 = arith.constant 0 : i32
    return %arg0, %arg1, %c0_i32, %c0_i32_0 : i32, i32, i32, i32
  }
}

module attributes {stable_mosaic.version = 11 : i64} {
  func.func @kernel(%arg0: i32, %arg1: i32, %arg2: memref<1x1x80x192xbf16, #tpu.memory_space<vmem>>, %arg3: memref<1x192xf32, #tpu.memory_space<vmem>>, %arg4: memref<1x192xf32, #tpu.memory_space<vmem>>, %arg5: memref<192x8xbf16, #tpu.memory_space<vmem>>, %arg6: memref<1x8xf32, #tpu.memory_space<vmem>>, %arg7: memref<1x1x8x80xf32, #tpu.memory_space<vmem>>) attributes {dimension_semantics = [#tpu.dimension_semantics<parallel>, #tpu.dimension_semantics<parallel>], iteration_bounds = array<i64: 2, 4>, scalar_prefetch = 0 : i64, scratch_operands = 0 : i64, tpu.core_type = #tpu.core_type<tc>, window_params = [{transform_indices = @transform_0, window_bounds = array<i64: 1, 1, 80, 192>}, {pipeline_mode = #tpu.pipeline_mode<synchronous>, transform_indices = @transform_1, window_bounds = array<i64: 1, 192>}, {pipeline_mode = #tpu.pipeline_mode<synchronous>, transform_indices = @transform_2, window_bounds = array<i64: 1, 192>}, {pipeline_mode = #tpu.pipeline_mode<synchronous>, transform_indices = @transform_3, window_bounds = array<i64: 192, 8>}, {pipeline_mode = #tpu.pipeline_mode<synchronous>, transform_indices = @transform_4, window_bounds = array<i64: 1, 8>}, {transform_indices = @transform_5, window_bounds = array<i64: 1, 1, 8, 80>}]} {
    %c0 = arith.constant 0 : index
    %c0_0 = arith.constant 0 : index
    %c0_1 = arith.constant 0 : index
    %c0_2 = arith.constant 0 : index
    %0 = vector.load %arg2[%c0, %c0_0, %c0_1, %c0_2] : memref<1x1x80x192xbf16, #tpu.memory_space<vmem>>, vector<1x1x80x192xbf16>
    %1 = vector.shape_cast %0 : vector<1x1x80x192xbf16> to vector<80x192xbf16>
    %2 = arith.extf %1 : vector<80x192xbf16> to vector<80x192xf32>
    %c0_3 = arith.constant 0 : index
    %c0_4 = arith.constant 0 : index
    %3 = vector.load %arg3[%c0_3, %c0_4] : memref<1x192xf32, #tpu.memory_space<vmem>>, vector<1x192xf32>
    %4 = vector.broadcast %3 : vector<1x192xf32> to vector<80x192xf32>
    %5 = arith.mulf %2, %4 : vector<80x192xf32>
    %c0_5 = arith.constant 0 : index
    %c0_6 = arith.constant 0 : index
    %6 = vector.load %arg4[%c0_5, %c0_6] : memref<1x192xf32, #tpu.memory_space<vmem>>, vector<1x192xf32>
    %7 = vector.broadcast %6 : vector<1x192xf32> to vector<80x192xf32>
    %8 = arith.addf %5, %7 : vector<80x192xf32>
    %cst = arith.constant 0.000000e+00 : f32
    %9 = vector.broadcast %cst : f32 to vector<80x192xf32>
    %10 = arith.maximumf %8, %9 : vector<80x192xf32>
    %11 = arith.truncf %10 : vector<80x192xf32> to vector<80x192xbf16>
    %c0_7 = arith.constant 0 : index
    %c0_8 = arith.constant 0 : index
    %12 = vector.load %arg5[%c0_7, %c0_8] : memref<192x8xbf16, #tpu.memory_space<vmem>>, vector<192x8xbf16>
    %cst_9 = arith.constant dense<0.000000e+00> : vector<80x8xf32>
    %13 = tpu.matmul %11, %12, %cst_9 {dimension_numbers = #tpu.dot_dimension_numbers<[1], [0], [0], [1], [0, 0, 1, 1], [], []>} : vector<80x192xbf16>, vector<192x8xbf16>, vector<80x8xf32> -> vector<80x8xf32>
    %c0_10 = arith.constant 0 : index
    %c0_11 = arith.constant 0 : index
    %14 = vector.load %arg6[%c0_10, %c0_11] : memref<1x8xf32, #tpu.memory_space<vmem>>, vector<1x8xf32>
    %15 = vector.broadcast %14 : vector<1x8xf32> to vector<80x8xf32>
    %16 = arith.addf %13, %15 : vector<80x8xf32>
    %17 = tpu.transpose %16, [1, 0] : vector<80x8xf32> -> vector<8x80xf32>
    %18 = vector.extract_strided_slice %17 {offsets = [1, 0], sizes = [7, 80], strides = [1, 1]} : vector<8x80xf32> to vector<7x80xf32>
    %c0_12 = arith.constant 0 : index
    %c0_13 = arith.constant 0 : index
    %c1 = arith.constant 1 : index
    %c0_14 = arith.constant 0 : index
    %19 = vector.load %arg7[%c0_12, %c0_13, %c1, %c0_14] : memref<1x1x8x80xf32, #tpu.memory_space<vmem>>, vector<1x1x7x80xf32>
    %20 = vector.shape_cast %19 : vector<1x1x7x80xf32> to vector<7x80xf32>
    %21 = vector.shape_cast %18 : vector<7x80xf32> to vector<1x1x7x80xf32>
    tpu.vector_store %arg7[%c0_12, %c0_13, %c1, %c0_14], %21 {strides = array<i32>} : memref<1x1x8x80xf32, #tpu.memory_space<vmem>>, vector<1x1x7x80xf32>,
    %22 = vector.extract_strided_slice %17 {offsets = [0, 0], sizes = [1, 80], strides = [1, 1]} : vector<8x80xf32> to vector<1x80xf32>
    %cst_15 = arith.constant 0.000000e+00 : f32
    %23 = vector.broadcast %cst_15 : f32 to vector<1x80xf32>
    %24 = arith.subf %23, %22 : vector<1x80xf32>
    %25 = math.exp %24 : vector<1x80xf32>
    %cst_16 = arith.constant 1.000000e+00 : f32
    %26 = vector.broadcast %cst_16 : f32 to vector<1x80xf32>
    %27 = arith.addf %26, %25 : vector<1x80xf32>
    %cst_17 = arith.constant 1.000000e+00 : f32
    %28 = vector.broadcast %cst_17 : f32 to vector<1x80xf32>
    %29 = arith.divf %28, %27 : vector<1x80xf32>
    %c0_18 = arith.constant 0 : index
    %c0_19 = arith.constant 0 : index
    %c0_20 = arith.constant 0 : index
    %c0_21 = arith.constant 0 : index
    %30 = vector.load %arg7[%c0_18, %c0_19, %c0_20, %c0_21] : memref<1x1x8x80xf32, #tpu.memory_space<vmem>>, vector<1x1x1x80xf32>
    %31 = vector.shape_cast %30 : vector<1x1x1x80xf32> to vector<1x80xf32>
    %32 = vector.shape_cast %29 : vector<1x80xf32> to vector<1x1x1x80xf32>
    tpu.vector_store %arg7[%c0_18, %c0_19, %c0_20, %c0_21], %32 {strides = array<i32>} : memref<1x1x8x80xf32, #tpu.memory_space<vmem>>, vector<1x1x1x80xf32>,
    return
  }
  func.func @transform_0(%arg0: i32, %arg1: i32) -> (i32, i32, i32, i32) {
    %c0_i32 = arith.constant 0 : i32
    %c0_i32_0 = arith.constant 0 : i32
    %c0_i32_1 = arith.constant 0 : i32
    return %arg0, %arg1, %c0_i32, %c0_i32_0 : i32, i32, i32, i32
  }
  func.func @transform_1(%arg0: i32, %arg1: i32) -> (i32, i32) {
    %c0_i32 = arith.constant 0 : i32
    %c0_i32_0 = arith.constant 0 : i32
    %c0_i32_1 = arith.constant 0 : i32
    return %c0_i32, %c0_i32_0 : i32, i32
  }
  func.func @transform_2(%arg0: i32, %arg1: i32) -> (i32, i32) {
    %c0_i32 = arith.constant 0 : i32
    %c0_i32_0 = arith.constant 0 : i32
    %c0_i32_1 = arith.constant 0 : i32
    return %c0_i32, %c0_i32_0 : i32, i32
  }
  func.func @transform_3(%arg0: i32, %arg1: i32) -> (i32, i32) {
    %c0_i32 = arith.constant 0 : i32
    %c0_i32_0 = arith.constant 0 : i32
    %c0_i32_1 = arith.constant 0 : i32
    return %c0_i32, %c0_i32_0 : i32, i32
  }
  func.func @transform_4(%arg0: i32, %arg1: i32) -> (i32, i32) {
    %c0_i32 = arith.constant 0 : i32
    %c0_i32_0 = arith.constant 0 : i32
    %c0_i32_1 = arith.constant 0 : i32
    return %c0_i32, %c0_i32_0 : i32, i32
  }
  func.func @transform_5(%arg0: i32, %arg1: i32) -> (i32, i32, i32, i32) {
    %c0_i32 = arith.constant 0 : i32
    %c0_i32_0 = arith.constant 0 : i32
    %c0_i32_1 = arith.constant 0 : i32
    return %arg0, %arg1, %c0_i32, %c0_i32_0 : i32, i32, i32, i32
  }
}

</mosaic_0001>

<llo_original>
// kernel: resnet50_head_forward.3
$region0: #{resnet50_head_forward.3}
  #allocation0 [shape = 'u32[]', space=smem, size = 0x4, offset = 0x4, fixed_abs, tag = 'smem constant byte address 0x4 - core index']
  #allocation1 [shape = 'u32[144,128]{1,0:T(1,128)}', space=vmem, size = 0x12000, scoped, tag = 'internal scratch']
  %s0 = inlined_call_operand.vmem [shape: bf16[2,4,80,192], index: 0, kind: input, shape index: {}]
  %s1 = inlined_call_operand.vmem [shape: f32[1,192], index: 1, kind: input, shape index: {}]
  %s2 = inlined_call_operand.vmem [shape: f32[1,192], index: 2, kind: input, shape index: {}]
  %s3 = inlined_call_operand.vmem [shape: bf16[192,8], index: 3, kind: input, shape index: {}]
  %s4 = inlined_call_operand.vmem [shape: f32[1,8], index: 4, kind: input, shape index: {}]
  %s5 = inlined_call_operand.vmem [shape: f32[2,4,8,80], index: 5, kind: output, shape index: {}]
  %s6 = sld [smem:[#allocation0]]
  $region53: #{resnet50_head_forward.3} parent=0
    _
  %s8 = ssub.s32 1, %s6
  %s9 = scalar_select 0, %s8, %s6
  loop: start=0, step=1, limit=10
  $region2: #{resnet50_head_forward.3} parent=0 // loop_pre_header
    _
  $region3: #{resnet50_head_forward.3} parent=0 // loop_header
    %s11 = sphi 0, %s15
    %p12 = scmp.ge.s32.totalorder %s11, 10
    %s18 = sphi 0, %s30
    %s19 = sphi 0, %s26
    %s20 = sphi 0, %s18
    %s21 = sphi 0, %s19
    %s22 = sphi 0, %s20
    %s23 = sphi 0, %s21
    %s35 = sphi 0, %s37
    %s38 = sphi 0, %s35
    %s39 = sphi 0, %s38
    %s55 = sphi 0, %s39
    %s59 = sphi 0, %s59
    %s61 = sphi 0, %s59
    %s62 = sphi 0, %s61
    %s76 = sphi 0, %s62
    %s80 = sphi 0, %s80
    %s82 = sphi 0, %s80
    %s83 = sphi 0, %s82
    %s97 = sphi 0, %s83
    %s101 = sphi 0, %s101
    %s103 = sphi 0, %s101
    %s104 = sphi 0, %s103
    %s118 = sphi 0, %s104
    %s122 = sphi 0, %s122
    %s124 = sphi 0, %s122
    %s125 = sphi 0, %s124
    %s139 = sphi 0, %s125
    %s147 = sphi 0, %s149
    %s150 = sphi 0, %s147
    %s151 = sphi 0, %s150
    %s167 = sphi 0, %s151
  $region4: #{resnet50_head_forward.3} parent=0 // loop_header_branch
    %14 = sbr.rel (%p12) target = $region8
  $region5: #{resnet50_head_forward.3} parent=0 // loop_body
    %s16 = ssub.s32 %s11, 1
    %s17 = ssub.s32 %s11, 2
    %s24 = sadd.s32 1, %s19
    %p25 = scmp.ge.s32.totalorder %s24, 4
    %s26 = scalar_select %p25, 0, %s24
    %s27 = sadd.s32 1, %s18
    %s28 = scalar_select %p25, %s27, %s18
    %p29 = scmp.ge.s32.totalorder %s28, 2
    %s30 = scalar_select %p29, 0, %s28
    %s31 = ssub.s32 %s18, %s30
    %s32 = ssub.s32 %s19, %s26
    %s33 = sor.u32 %s31, %s32
    %p34 = scmp.eq.s32.totalorder %s33, 0
    %s36 = sadd.s32 %s35, 1
    %s37 = scalar_select %p34, %s35, %s36
    %p40 = pneg %p34
    %p41 = scmp.eq.s32.totalorder %s11, 7
    %p42 = por %p40, %p41
    %p43 = scmp.ne.s32.totalorder %s35, %s38
    %p44 = scmp.eq.s32.totalorder %s11, 0
    %p45 = por %p43, %p44
    %p46 = scmp.ne.s32.totalorder %s35, %s38
    %p47 = scmp.eq.s32.totalorder %s16, 7
    %p48 = por %p46, %p47
    %p49 = scmp.ne.s32.totalorder %s38, %s39
    %p50 = scmp.eq.s32.totalorder %s16, 0
    %p51 = por %p49, %p50
    %p52 = scmp.ne.s32.totalorder %s38, %s39
    %p53 = scmp.eq.s32.totalorder %s17, 7
    %p54 = por %p52, %p53
    %p56 = scmp.ne.s32.totalorder %s39, %s55
    %p57 = scmp.eq.s32.totalorder %s17, 0
    %p58 = por %p56, %p57
    %s60 = sadd.s32 %s59, 1
    %p63 = scmp.eq.s32.totalorder %s11, 7
    %p64 = scmp.ne.s32.totalorder %s59, %s61
    %p65 = scmp.eq.s32.totalorder %s11, 0
    %p66 = por %p64, %p65
    %p67 = scmp.ne.s32.totalorder %s59, %s61
    %p68 = scmp.eq.s32.totalorder %s16, 7
    %p69 = por %p67, %p68
    %p70 = scmp.ne.s32.totalorder %s61, %s62
    %p71 = scmp.eq.s32.totalorder %s16, 0
    %p72 = por %p70, %p71
    %p73 = scmp.ne.s32.totalorder %s61, %s62
    %p74 = scmp.eq.s32.totalorder %s17, 7
    %p75 = por %p73, %p74
    %p77 = scmp.ne.s32.totalorder %s62, %s76
    %p78 = scmp.eq.s32.totalorder %s17, 0
    %p79 = por %p77, %p78
    %s81 = sadd.s32 %s80, 1
    %p84 = scmp.eq.s32.totalorder %s11, 7
    %p85 = scmp.ne.s32.totalorder %s80, %s82
    %p86 = scmp.eq.s32.totalorder %s11, 0
    %p87 = por %p85, %p86
    %p88 = scmp.ne.s32.totalorder %s80, %s82
    %p89 = scmp.eq.s32.totalorder %s16, 7
    %p90 = por %p88, %p89
    %p91 = scmp.ne.s32.totalorder %s82, %s83
    %p92 = scmp.eq.s32.totalorder %s16, 0
    %p93 = por %p91, %p92
    %p94 = scmp.ne.s32.totalorder %s82, %s83
    %p95 = scmp.eq.s32.totalorder %s17, 7
    %p96 = por %p94, %p95
    %p98 = scmp.ne.s32.totalorder %s83, %s97
    %p99 = scmp.eq.s32.totalorder %s17, 0
    %p100 = por %p98, %p99
    %s102 = sadd.s32 %s101, 1
    %p105 = scmp.eq.s32.totalorder %s11, 7
    %p106 = scmp.ne.s32.totalorder %s101, %s103
    %p107 = scmp.eq.s32.totalorder %s11, 0
    %p108 = por %p106, %p107
    %p109 = scmp.ne.s32.totalorder %s101, %s103
    %p110 = scmp.eq.s32.totalorder %s16, 7
    %p111 = por %p109, %p110
    %p112 = scmp.ne.s32.totalorder %s103, %s104
    %p113 = scmp.eq.s32.totalorder %s16, 0
    %p114 = por %p112, %p113
    %p115 = scmp.ne.s32.totalorder %s103, %s104
    %p116 = scmp.eq.s32.totalorder %s17, 7
    %p117 = por %p115, %p116
    %p119 = scmp.ne.s32.totalorder %s104, %s118
    %p120 = scmp.eq.s32.totalorder %s17, 0
    %p121 = por %p119, %p120
    %s123 = sadd.s32 %s122, 1
    %p126 = scmp.eq.s32.totalorder %s11, 7
    %p127 = scmp.ne.s32.totalorder %s122, %s124
    %p128 = scmp.eq.s32.totalorder %s11, 0
    %p129 = por %p127, %p128
    %p130 = scmp.ne.s32.totalorder %s122, %s124
    %p131 = scmp.eq.s32.totalorder %s16, 7
    %p132 = por %p130, %p131
    %p133 = scmp.ne.s32.totalorder %s124, %s125
    %p134 = scmp.eq.s32.totalorder %s16, 0
    %p135 = por %p133, %p134
    %p136 = scmp.ne.s32.totalorder %s124, %s125
    %p137 = scmp.eq.s32.totalorder %s17, 7
    %p138 = por %p136, %p137
    %p140 = scmp.ne.s32.totalorder %s125, %s139
    %p141 = scmp.eq.s32.totalorder %s17, 0
    %p142 = por %p140, %p141
    %s143 = ssub.s32 %s18, %s30
    %s144 = ssub.s32 %s19, %s26
    %s145 = sor.u32 %s143, %s144
    %p146 = scmp.eq.s32.totalorder %s145, 0
    %s148 = sadd.s32 %s147, 1
    %s149 = scalar_select %p146, %s147, %s148
    %p152 = pneg %p146
    %p153 = scmp.eq.s32.totalorder %s11, 7
    %p154 = por %p152, %p153
    %p155 = scmp.ne.s32.totalorder %s147, %s150
    %p156 = scmp.eq.s32.totalorder %s11, 0
    %p157 = por %p155, %p156
    %p158 = scmp.ne.s32.totalorder %s147, %s150
    %p159 = scmp.eq.s32.totalorder %s16, 7
    %p160 = por %p158, %p159
    %p161 = scmp.ne.s32.totalorder %s150, %s151
    %p162 = scmp.eq.s32.totalorder %s16, 0
    %p163 = por %p161, %p162
    %p164 = scmp.ne.s32.totalorder %s150, %s151
    %p165 = scmp.eq.s32.totalorder %s17, 7
    %p166 = por %p164, %p165
    %p168 = scmp.ne.s32.totalorder %s151, %s167
    %p169 = scmp.eq.s32.totalorder %s17, 0
    %p170 = por %p168, %p169
    %p171 = scmp.le.s32.totalorder 1, %s11
    %p172 = scmp.lt.s32.totalorder %s11, 9
    %p173 = pnand %p171, %p172
    %p174 = pneg %p173
    // Predicated region
    $region9: #{resnet50_head_forward.3} parent=5 // pred_check
      _
    $region10: #{resnet50_head_forward.3} parent=5 // pred_check_branch
      %176 = sbr.rel (%p173) target = $region12
    $region11: #{resnet50_head_forward.3} parent=5 // pred_region
      %s177 = ssub.s32 %s11, 1
      // Predicated region
      $region13: #{resnet50_head_forward.3} parent=11 // pred_check
        %p178 = pneg %p72
      $region14: #{resnet50_head_forward.3} parent=11 // pred_check_branch
        %180 = sbr.rel (%p178) target = $region16
      $region15: #{resnet50_head_forward.3} parent=11 // pred_region
        _
      $region16: #{resnet50_head_forward.3} parent=11 // pred_fallthru
        _
      // Predicated region
      $region17: #{resnet50_head_forward.3} parent=11 // pred_check
        %p181 = pneg %p93
      $region18: #{resnet50_head_forward.3} parent=11 // pred_check_branch
        %183 = sbr.rel (%p181) target = $region20
      $region19: #{resnet50_head_forward.3} parent=11 // pred_region
        _
      $region20: #{resnet50_head_forward.3} parent=11 // pred_fallthru
        _
      // Predicated region
      $region21: #{resnet50_head_forward.3} parent=11 // pred_check
        %p184 = pneg %p114
      $region22: #{resnet50_head_forward.3} parent=11 // pred_check_branch
        %186 = sbr.rel (%p184) target = $region24
      $region23: #{resnet50_head_forward.3} parent=11 // pred_region
        _
      $region24: #{resnet50_head_forward.3} parent=11 // pred_fallthru
        _
      // Predicated region
      $region25: #{resnet50_head_forward.3} parent=11 // pred_check
        %p187 = pneg %p135
      $region26: #{resnet50_head_forward.3} parent=11 // pred_check_branch
        %189 = sbr.rel (%p187) target = $region28
      $region27: #{resnet50_head_forward.3} parent=11 // pred_region
        _
      $region28: #{resnet50_head_forward.3} parent=11 // pred_fallthru
        _
    $region12: #{resnet50_head_forward.3} parent=5 // pred_fallthru
      _
    %p190 = scmp.lt.s32.totalorder %s11, 8
    // Predicated region
    $region29: #{resnet50_head_forward.3} parent=5 // pred_check
      %p191 = pneg %p190
    $region30: #{resnet50_head_forward.3} parent=5 // pred_check_branch
      %193 = sbr.rel (%p191) target = $region32
    $region31: #{resnet50_head_forward.3} parent=5 // pred_region
      // Predicated region
      $region33: #{resnet50_head_forward.3} parent=31 // pred_check
        %p194 = pneg %p45
      $region34: #{resnet50_head_forward.3} parent=31 // pred_check_branch
        %196 = sbr.rel (%p194) target = $region36
      $region35: #{resnet50_head_forward.3} parent=31 // pred_region
        %p197 = scmp.lt.s32.totalorder %s18, 1
        %s198 = scalar_select %p197, %s18, 1
        %p199 = scmp.lt.s32.totalorder %s19, 3
        %s200 = scalar_select %p199, %s19, 3
        %s201 = smul.addr %s200, 20
        %s202 = smul.addr %s198, 80
        %s203 = sadd.s32 %s201, %s202
        %s204 = smul.addr %s203, 4
        %s205 = scalar_lea.vmem %s0, %s204
      $region36: #{resnet50_head_forward.3} parent=31 // pred_fallthru
        _
    $region32: #{resnet50_head_forward.3} parent=5 // pred_fallthru
      _
    %p206 = scmp.le.s32.totalorder 1, %s11
    %p207 = scmp.lt.s32.totalorder %s11, 9
    %p208 = pnand %p206, %p207
    %p209 = pneg %p208
    // Predicated region
    $region37: #{resnet50_head_forward.3} parent=5 // pred_check
      _
    $region38: #{resnet50_head_forward.3} parent=5 // pred_check_branch
      %211 = sbr.rel (%p208) target = $region40
    $region39: #{resnet50_head_forward.3} parent=5 // pred_region
      %s212 = ssub.s32 %s11, 1
      %p213 = scmp.lt.s32.totalorder %s20, 1
      %s214 = scalar_select %p213, %s20, 1
      %p215 = scmp.lt.s32.totalorder %s21, 3
      %s216 = scalar_select %p215, %s21, 3
      %s217 = smul.addr %s216, 20
      %s218 = smul.addr %s214, 80
      %s219 = sadd.s32 %s217, %s218
      %s220 = smul.addr %s219, 4
      %s221 = scalar_lea.vmem %s0, %s220
      %p222 = pneg %p51
      %p223 = pneg %p48
      %p224 = pneg %p72
      %p225 = pneg %p69
      %p226 = pneg %p93
      %p227 = pneg %p90
      %p228 = pneg %p114
      %p229 = pneg %p111
      %p230 = pneg %p135
      %p231 = pneg %p132
      %p232 = pneg %p163
      %p233 = pneg %p160
      %p234 = scmp.lt.s32.totalorder %s20, 1
      %s235 = scalar_select %p234, %s20, 1
      %p236 = scmp.lt.s32.totalorder %s21, 3
      %s237 = scalar_select %p236, %s21, 3
      %s238 = smul.addr %s235, 4
      %s239 = sadd.s32 %s237, %s238
      %s240 = smul.addr %s239, 8
      %s241 = scalar_lea.vmem %s5, %s240
      %p242 = scmp.lt.s32.totalorder %s20, 1
      %s243 = scalar_select %p242, %s20, 1
      %p244 = scmp.lt.s32.totalorder %s21, 3
      %s245 = scalar_select %p244, %s21, 3
      %s246 = smul.addr %s245, 20
      %s247 = smul.addr %s243, 80
      %s248 = sadd.s32 %s246, %s247
      %s249 = smul.addr %s248, 4
      %s250 = scalar_lea.vmem %s0, %s249
      %p251 = scmp.lt.s32.totalorder %s20, 1
      %s252 = scalar_select %p251, %s20, 1
      %p253 = scmp.lt.s32.totalorder %s21, 3
      %s254 = scalar_select %p253, %s21, 3
      %s255 = smul.addr %s252, 4
      %s256 = sadd.s32 %s254, %s255
      %s257 = smul.addr %s256, 8
      %s258 = scalar_lea.vmem %s5, %s257
      %v260 = vld [vmem:[%s250] sm:$0xff]
      %v261 = vld [vmem:[%s250 + $0x8] sm:$0xff]
      %v262 = vld [vmem:[%s250 + $0x10] sm:$0xff]
      %v263 = vld [vmem:[%s250 + $0x18] sm:$0xff]
      %v264 = vld [vmem:[%s250 + $0x20] sm:$0xff]
      %v265 = vld [vmem:[%s250 + $0x28] sm:$0xff]
      %v266 = vld [vmem:[%s250 + $0x30] sm:$0xff]
      %v267 = vld [vmem:[%s250 + $0x38] sm:$0xff]
      %v268 = vld [vmem:[%s250 + $0x40] sm:$0xff]
      %v269 = vld [vmem:[%s250 + $0x48] sm:$0xff]
      %v270 = vunpack.c.l.bf16 %v260
      %v271 = vunpack.c.h.bf16 %v260
      %v272 = vunpack.c.l.bf16 %v261
      %v273 = vunpack.c.h.bf16 %v261
      %v274 = vunpack.c.l.bf16 %v262
      %v275 = vunpack.c.h.bf16 %v262
      %v276 = vunpack.c.l.bf16 %v263
      %v277 = vunpack.c.h.bf16 %v263
      %v278 = vunpack.c.l.bf16 %v264
      %v279 = vunpack.c.h.bf16 %v264
      %v280 = vunpack.c.l.bf16 %v265
      %v281 = vunpack.c.h.bf16 %v265
      %v282 = vunpack.c.l.bf16 %v266
      %v283 = vunpack.c.h.bf16 %v266
      %v284 = vunpack.c.l.bf16 %v267
      %v285 = vunpack.c.h.bf16 %v267
      %v286 = vunpack.c.l.bf16 %v268
      %v287 = vunpack.c.h.bf16 %v268
      %v288 = vunpack.c.l.bf16 %v269
      %v289 = vunpack.c.h.bf16 %v269
      %v290 = vld [vmem:[%s1] sm:$0x3]
      %v292 = vlaneseq
      %v293 = vshrl.u32 %v292, 7
      %v294 = vsub.s32 0, %v293
      %v295 = vrot.slane %v290, %v294
      %v296 = vlaneseq
      %v297 = vshrl.u32 %v296, 7
      %v298 = vsub.s32 1, %v297
      %v299 = vrot.slane %v290, %v298
      %v302 = vmul.f32 %v270, %v295
      %v303 = vmul.f32 %v271, %v299
      %v304 = vmul.f32 %v272, %v295
      %v305 = vmul.f32 %v273, %v299
      %v306 = vmul.f32 %v274, %v295
      %v307 = vmul.f32 %v275, %v299
      %v308 = vmul.f32 %v276, %v295
      %v309 = vmul.f32 %v277, %v299
      %v310 = vmul.f32 %v278, %v295
      %v311 = vmul.f32 %v279, %v299
      %v312 = vmul.f32 %v280, %v295
      %v313 = vmul.f32 %v281, %v299
      %v314 = vmul.f32 %v282, %v295
      %v315 = vmul.f32 %v283, %v299
      %v316 = vmul.f32 %v284, %v295
      %v317 = vmul.f32 %v285, %v299
      %v318 = vmul.f32 %v286, %v295
      %v319 = vmul.f32 %v287, %v299
      %v320 = vmul.f32 %v288, %v295
      %v321 = vmul.f32 %v289, %v299
      %v322 = vld [vmem:[%s2] sm:$0x3]
      %v324 = vlaneseq
      %v325 = vshrl.u32 %v324, 7
      %v326 = vsub.s32 0, %v325
      %v327 = vrot.slane %v322, %v326
      %v328 = vlaneseq
      %v329 = vshrl.u32 %v328, 7
      %v330 = vsub.s32 1, %v329
      %v331 = vrot.slane %v322, %v330
      %v334 = vadd.f32 %v302, %v327
      %v335 = vadd.f32 %v303, %v331
      %v336 = vadd.f32 %v304, %v327
      %v337 = vadd.f32 %v305, %v331
      %v338 = vadd.f32 %v306, %v327
      %v339 = vadd.f32 %v307, %v331
      %v340 = vadd.f32 %v308, %v327
      %v341 = vadd.f32 %v309, %v331
      %v342 = vadd.f32 %v310, %v327
      %v343 = vadd.f32 %v311, %v331
      %v344 = vadd.f32 %v312, %v327
      %v345 = vadd.f32 %v313, %v331
      %v346 = vadd.f32 %v314, %v327
      %v347 = vadd.f32 %v315, %v331
      %v348 = vadd.f32 %v316, %v327
      %v349 = vadd.f32 %v317, %v331
      %v350 = vadd.f32 %v318, %v327
      %v351 = vadd.f32 %v319, %v331
      %v352 = vadd.f32 %v320, %v327
      %v353 = vadd.f32 %v321, %v331
      %v354 = vmax.f32 %v334, 0.0
      %v355 = vmax.f32 %v335, 0.0
      %v356 = vmax.f32 %v336, 0.0
      %v357 = vmax.f32 %v337, 0.0
      %v358 = vmax.f32 %v338, 0.0
      %v359 = vmax.f32 %v339, 0.0
      %v360 = vmax.f32 %v340, 0.0
      %v361 = vmax.f32 %v341, 0.0
      %v362 = vmax.f32 %v342, 0.0
      %v363 = vmax.f32 %v343, 0.0
      %v364 = vmax.f32 %v344, 0.0
      %v365 = vmax.f32 %v345, 0.0
      %v366 = vmax.f32 %v346, 0.0
      %v367 = vmax.f32 %v347, 0.0
      %v368 = vmax.f32 %v348, 0.0
      %v369 = vmax.f32 %v349, 0.0
      %v370 = vmax.f32 %v350, 0.0
      %v371 = vmax.f32 %v351, 0.0
      %v372 = vmax.f32 %v352, 0.0
      %v373 = vmax.f32 %v353, 0.0
      %v374 = vpack.c.bf16 %v356, %v354
      %v375 = vpack.c.bf16 %v357, %v355
      %v376 = vpack.c.bf16 %v360, %v358
      %v377 = vpack.c.bf16 %v361, %v359
      %v378 = vpack.c.bf16 %v364, %v362
      %v379 = vpack.c.bf16 %v365, %v363
      %v380 = vpack.c.bf16 %v368, %v366
      %v381 = vpack.c.bf16 %v369, %v367
      %v382 = vpack.c.bf16 %v372, %v370
      %v383 = vpack.c.bf16 %v373, %v371
      %v384 = vld [vmem:[%s3] sm:$0xf]
      %v385 = vld [vmem:[%s3 + $0x4] sm:$0xf]
      %v386 = vld [vmem:[%s3 + $0x8] sm:$0xf]
      %v387 = vld [vmem:[%s3 + $0xc] sm:$0xf]
      %v388 = vld [vmem:[%s3 + $0x10] sm:$0xf]
      %v389 = vld [vmem:[%s3 + $0x14] sm:$0xf]
      %v390 = vld [vmem:[%s3 + $0x18] sm:$0xf]
      %v391 = vld [vmem:[%s3 + $0x1c] sm:$0xf]
      %v392 = vld [vmem:[%s3 + $0x20] sm:$0xf]
      %v393 = vld [vmem:[%s3 + $0x24] sm:$0xf]
      %v394 = vld [vmem:[%s3 + $0x28] sm:$0xf]
      %v395 = vld [vmem:[%s3 + $0x2c] sm:$0xf]
      %v396 = vld [vmem:[%s3 + $0x30] sm:$0xf]
      %v397 = vld [vmem:[%s3 + $0x34] sm:$0xf]
      %v398 = vld [vmem:[%s3 + $0x38] sm:$0xf]
      %v399 = vld [vmem:[%s3 + $0x3c] sm:$0xf]
      %v400 = vld [vmem:[%s3 + $0x40] sm:$0xf]
      %v401 = vld [vmem:[%s3 + $0x44] sm:$0xf]
      %v402 = vld [vmem:[%s3 + $0x48] sm:$0xf]
      %v403 = vld [vmem:[%s3 + $0x4c] sm:$0xf]
      %v404 = vld [vmem:[%s3 + $0x50] sm:$0xf]
      %v405 = vld [vmem:[%s3 + $0x54] sm:$0xf]
      %v406 = vld [vmem:[%s3 + $0x58] sm:$0xf]
      %v407 = vld [vmem:[%s3 + $0x5c] sm:$0xf]
      %v408 = vld [vmem:[%s4] sm:$0x1]
      %v410 = vlaneseq
      %v411 = vshrl.u32 %v410, 7
      %v412 = vsub.s32 0, %v411
      %v413 = vrot.slane %v408, %v412
      %v439 = vunpack.c.l.b16 %v384
      %v440 = vunpack.c.l.b16 %v385
      %v441 = vunpack.c.l.b16 %v386
      %v442 = vunpack.c.l.b16 %v387
      %v443 = vunpack.c.l.b16 %v388
      %v444 = vunpack.c.l.b16 %v389
      %v445 = vunpack.c.l.b16 %v390
      %v446 = vunpack.c.l.b16 %v391
      %v447 = vunpack.c.l.b16 %v392
      %v448 = vunpack.c.l.b16 %v393
      %v449 = vunpack.c.l.b16 %v394
      %v450 = vunpack.c.l.b16 %v395
      %v451 = vunpack.c.l.b16 %v396
      %v452 = vunpack.c.l.b16 %v397
      %v453 = vunpack.c.l.b16 %v398
      %v454 = vunpack.c.l.b16 %v399
      %v455 = vunpack.c.l.b16 %v400
      %v456 = vunpack.c.l.b16 %v401
      %v457 = vunpack.c.l.b16 %v402
      %v458 = vunpack.c.l.b16 %v403
      %v459 = vunpack.c.l.b16 %v404
      %v460 = vunpack.c.l.b16 %v405
      %v461 = vunpack.c.l.b16 %v406
      %v462 = vunpack.c.l.b16 %v407
      %v463 = vpack.c.b16 %v440, %v439
      %v464 = vpack.c.b16 %v442, %v441
      %v465 = vpack.c.b16 %v444, %v443
      %v466 = vpack.c.b16 %v446, %v445
      %v467 = vpack.c.b16 %v448, %v447
      %v468 = vpack.c.b16 %v450, %v449
      %v469 = vpack.c.b16 %v452, %v451
      %v470 = vpack.c.b16 %v454, %v453
      %v471 = vpack.c.b16 %v456, %v455
      %v472 = vpack.c.b16 %v458, %v457
      %v473 = vpack.c.b16 %v460, %v459
      %v474 = vpack.c.b16 %v462, %v461
      %vm487 = vcmask 523264
      %v489 = vsel %vm487, %v375, 0
      %v492 = vsel %vm487, %v377, 0
      %v495 = vsel %vm487, %v379, 0
      %v498 = vsel %vm487, %v381, 0
      %v501 = vsel %vm487, %v383, 0
      %503 = vmatprep.subr.bf16.mxu0 0
      %504 = vmatpush1.bf16.msra.mxu0 %v463
      %505 = vmatprep.subr.bf16.mxu0 0
      %506 = vmatpush1.bf16.msra.mxu0 %v464
      %507 = vmatprep.subr.bf16.mxu0 0
      %508 = vmatpush1.bf16.msra.mxu0 %v465
      %509 = vmatprep.subr.bf16.mxu0 0
      %510 = vmatpush1.bf16.msra.mxu0 %v466
      %511 = vmatprep.subr.bf16.mxu0 0
      %512 = vmatpush1.bf16.msra.mxu0 %v467
      %513 = vmatprep.subr.bf16.mxu0 0
      %514 = vmatpush1.bf16.msra.mxu0 %v468
      %515 = vmatprep.subr.bf16.mxu0 0
      %516 = vmatpush1.bf16.msra.mxu0 %v469
      %517 = vmatprep.subr.bf16.mxu0 0
      %518 = vmatpush1.bf16.msra.mxu0 %v470
      %519 = vmatprep.subr.bf16.mxu0 0
      %520 = vmatpush1.bf16.msra.mxu0 %v471
      %521 = vmatprep.subr.bf16.mxu0 0
      %522 = vmatpush1.bf16.msra.mxu0 %v472
      %523 = vmatprep.subr.bf16.mxu0 0
      %524 = vmatpush1.bf16.msra.mxu0 %v473
      %525 = vmatprep.subr.bf16.mxu0 0
      %526 = vmatpush1.bf16.msra.mxu0 %v474
      %527 = vmatprep.subr.bf16.mxu0 0
      %528 = vmatpush1.bf16.msra.mxu0 0
      %529 = vmatprep.subr.bf16.mxu0 0
      %530 = vmatpush1.bf16.msra.mxu0 0
      %531 = vmatprep.subr.bf16.mxu0 0
      %532 = vmatpush1.bf16.msra.mxu0 0
      %533 = vmatprep.subr.bf16.mxu0 0
      %534 = vmatpush1.bf16.msra.mxu0 0
      %535 = vmatprep.mubr.bf16.mxu0 %v489
      %536 = vmatmul.mubr.bf16.gmra.mrb[0].mxu0 %v374
      %v537 = vpop.f32.mrb[0].mxu0
      %v538 = vadd.f32 %v413, %v537
      %v539 = vpop.f32.mrb[0].mxu0
      %v540 = vpop.f32.mrb[0].mxu0
      %v541 = vadd.f32 %v413, %v540
      %v542 = vpop.f32.mrb[0].mxu0
      %543 = vmatprep.mubr.bf16.mxu0 %v492
      %544 = vmatmul.mubr.bf16.gmra.mrb[0].mxu0 %v376
      %v545 = vpop.f32.mrb[0].mxu0
      %v546 = vadd.f32 %v413, %v545
      %v547 = vpop.f32.mrb[0].mxu0
      %v548 = vpop.f32.mrb[0].mxu0
      %v549 = vadd.f32 %v413, %v548
      %v550 = vpop.f32.mrb[0].mxu0
      %551 = vmatprep.mubr.bf16.mxu0 %v495
      %552 = vmatmul.mubr.bf16.gmra.mrb[0].mxu0 %v378
      %v553 = vpop.f32.mrb[0].mxu0
      %v554 = vadd.f32 %v413, %v553
      %v555 = vpop.f32.mrb[0].mxu0
      %v556 = vpop.f32.mrb[0].mxu0
      %v557 = vadd.f32 %v413, %v556
      %v558 = vpop.f32.mrb[0].mxu0
      %559 = vmatprep.mubr.bf16.mxu0 %v498
      %560 = vmatmul.mubr.bf16.gmra.mrb[0].mxu0 %v380
      %v561 = vpop.f32.mrb[0].mxu0
      %v562 = vadd.f32 %v413, %v561
      %v563 = vpop.f32.mrb[0].mxu0
      %v564 = vpop.f32.mrb[0].mxu0
      %v565 = vadd.f32 %v413, %v564
      %v566 = vpop.f32.mrb[0].mxu0
      %567 = vmatprep.mubr.bf16.mxu0 %v501
      %568 = vmatmul.mubr.bf16.gmra.mrb[0].mxu0 %v382
      %v569 = vpop.f32.mrb[0].mxu0
      %v570 = vadd.f32 %v413, %v569
      %v571 = vpop.f32.mrb[0].mxu0
      %v572 = vpop.f32.mrb[0].mxu0
      %v573 = vadd.f32 %v413, %v572
      %v574 = vpop.f32.mrb[0].mxu0
      %575 = vdwg.mxu0
      %576 = vxpose.xlu0.b32.start [1/16] %v538, 128
      %577 = vxpose.xlu0.b32.cont [2/16] %v541, 128
      %578 = vxpose.xlu0.b32.cont [3/16] %v546, 128
      %579 = vxpose.xlu0.b32.cont [4/16] %v549, 128
      %580 = vxpose.xlu0.b32.cont [5/16] %v554, 128
      %581 = vxpose.xlu0.b32.cont [6/16] %v557, 128
      %582 = vxpose.xlu0.b32.cont [7/16] %v562, 128
      %583 = vxpose.xlu0.b32.cont [8/16] %v565, 128
      %584 = vxpose.xlu0.b32.cont [9/16] %v570, 128
      %585 = vxpose.xlu0.b32.cont [10/16] %v573, 128
      %586 = vxpose.xlu0.b32.cont [11/16] 0.0, 128
      %587 = vxpose.xlu0.b32.cont [12/16] 0.0, 128
      %588 = vxpose.xlu0.b32.cont [13/16] 0.0, 128
      %589 = vxpose.xlu0.b32.cont [14/16] 0.0, 128
      %590 = vxpose.xlu0.b32.cont [15/16] 0.0, 128
      %591 = vxpose.xlu0.b32.end [16/16] 0.0, 128
      %v592 = vpop.trf.xlu0
      %v593 = vpop.trf.xlu0
      %v594 = vpop.trf.xlu0
      %v595 = vpop.trf.xlu0
      %v596 = vpop.trf.xlu0
      %v597 = vpop.trf.xlu0
      %v598 = vpop.trf.xlu0
      %v599 = vpop.trf.xlu0
      %v600 = vpop.trf.xlu0
      %v601 = vpop.trf.xlu0
      %v602 = vpop.trf.xlu0
      %v603 = vpop.trf.xlu0
      %v604 = vpop.trf.xlu0
      %v605 = vpop.trf.xlu0
      %v606 = vpop.trf.xlu0
      %v607 = vpop.trf.xlu0
      %vm608 = vcmask 654337
      %609 = vst.msk [vmem:[%s258] sm:$0xfe] %vm608, %v592
      %v610 = vsub.f32 0.0, %v592
      %v611 = vmul.f32 %v610, 1.442695
      %v612 = vpow.pop %v611
      %v613 = vadd.f32 %v612, 1.0
      %v614 = vrcp.pop %v613
      %v615 = vmul.f32 1.0, %v614
      %vm616 = vcmask 647168
      %617 = vst.msk [vmem:[%s258] sm:$0x1] %vm616, %v615
      %p618 = scmp.lt.s32.totalorder %s20, 1
      %s619 = scalar_select %p618, %s20, 1
      %p620 = scmp.lt.s32.totalorder %s21, 3
      %s621 = scalar_select %p620, %s21, 3
      %s622 = smul.addr %s619, 4
      %s623 = sadd.s32 %s621, %s622
      %s624 = smul.addr %s623, 8
      %s625 = scalar_lea.vmem %s5, %s624
      // Predicated region
      $region41: #{resnet50_head_forward.3} parent=39 // pred_check
        %p626 = pneg %p160
      $region42: #{resnet50_head_forward.3} parent=39 // pred_check_branch
        %628 = sbr.rel (%p626) target = $region44
      $region43: #{resnet50_head_forward.3} parent=39 // pred_region
        _
      $region44: #{resnet50_head_forward.3} parent=39 // pred_fallthru
        _
    $region40: #{resnet50_head_forward.3} parent=5 // pred_fallthru
      _
    %p629 = scmp.le.s32.totalorder 2, %s11
    // Predicated region
    $region45: #{resnet50_head_forward.3} parent=5 // pred_check
      %p630 = pneg %p629
    $region46: #{resnet50_head_forward.3} parent=5 // pred_check_branch
      %632 = sbr.rel (%p630) target = $region48
    $region47: #{resnet50_head_forward.3} parent=5 // pred_region
      %s633 = ssub.s32 %s11, 2
      // Predicated region
      $region49: #{resnet50_head_forward.3} parent=47 // pred_check
        %p634 = pneg %p166
      $region50: #{resnet50_head_forward.3} parent=47 // pred_check_branch
        %636 = sbr.rel (%p634) target = $region52
      $region51: #{resnet50_head_forward.3} parent=47 // pred_region
        %p637 = scmp.lt.s32.totalorder %s22, 1
        %s638 = scalar_select %p637, %s22, 1
        %p639 = scmp.lt.s32.totalorder %s23, 3
        %s640 = scalar_select %p639, %s23, 3
        %s641 = smul.addr %s638, 4
        %s642 = sadd.s32 %s640, %s641
        %s643 = smul.addr %s642, 8
        %s644 = scalar_lea.vmem %s5, %s643
      $region52: #{resnet50_head_forward.3} parent=47 // pred_fallthru
        _
    $region48: #{resnet50_head_forward.3} parent=5 // pred_fallthru
      _
  $region6: #{resnet50_head_forward.3} parent=0 // loop_footer
    %s15 = sadd.s32 1, %s11
  $region7: #{resnet50_head_forward.3} parent=0 // loop_footer_branch
    %10 = sbr.rel target = $region3
  $region8: #{resnet50_head_forward.3} parent=0 // loop_exit
    _

// kernel: resnet50_head_forward.2
$region0: #{resnet50_head_forward.2}
  #allocation0 [shape = 'u32[]', space=smem, size = 0x4, offset = 0x4, fixed_abs, tag = 'smem constant byte address 0x4 - core index']
  #allocation1 [shape = 'u32[144,128]{1,0:T(1,128)}', space=vmem, size = 0x12000, scoped, tag = 'internal scratch']
  %s0 = inlined_call_operand.vmem [shape: bf16[2,6,110,64], index: 0, kind: input, shape index: {}, may-alias: {0,1,2}]
  %s1 = inlined_call_operand.vmem [shape: bf16[2,6,110,64], index: 1, kind: input, shape index: {}, may-alias: {0,1,2}]
  %s2 = inlined_call_operand.vmem [shape: bf16[2,6,110,64], index: 2, kind: input, shape index: {}, may-alias: {0,1,2}]
  %s3 = inlined_call_operand.vmem [shape: bf16[9,192,192], index: 3, kind: input, shape index: {}]
  %s4 = inlined_call_operand.vmem [shape: bf16[2,4,80,192], index: 4, kind: output, shape index: {0}]
  %s5 = inlined_call_operand.vmem [shape: f32[2,4,2,192], index: 5, kind: output, shape index: {1}]
  %6 = xla_tuple %s4, %s5
  %s7 = sld [smem:[#allocation0]]
  $region57: #{resnet50_head_forward.2} parent=0
    _
  %s9 = ssub.s32 1, %s7
  %s10 = scalar_select 0, %s9, %s7
  loop: start=0, step=1, limit=10
  $region2: #{resnet50_head_forward.2} parent=0 // loop_pre_header
    _
  $region3: #{resnet50_head_forward.2} parent=0 // loop_header
    %s12 = sphi 0, %s16
    %p13 = scmp.ge.s32.totalorder %s12, 10
    %s19 = sphi 0, %s31
    %s20 = sphi 0, %s27
    %s21 = sphi 0, %s19
    %s22 = sphi 0, %s20
    %s23 = sphi 0, %s21
    %s24 = sphi 0, %s22
    %s36 = sphi 0, %s38
    %s39 = sphi 0, %s36
    %s40 = sphi 0, %s39
    %s56 = sphi 0, %s40
    %s66 = sphi 0, %s68
    %s69 = sphi 0, %s66
    %s70 = sphi 0, %s69
    %s86 = sphi 0, %s70
    %s96 = sphi 0, %s98
    %s99 = sphi 0, %s96
    %s100 = sphi 0, %s99
    %s116 = sphi 0, %s100
    %s120 = sphi 0, %s120
    %s122 = sphi 0, %s120
    %s123 = sphi 0, %s122
    %s137 = sphi 0, %s123
    %s145 = sphi 0, %s147
    %s148 = sphi 0, %s145
    %s149 = sphi 0, %s148
    %s165 = sphi 0, %s149
    %s173 = sphi 0, %s175
    %s176 = sphi 0, %s173
    %s177 = sphi 0, %s176
    %s193 = sphi 0, %s177
  $region4: #{resnet50_head_forward.2} parent=0 // loop_header_branch
    %15 = sbr.rel (%p13) target = $region8
  $region5: #{resnet50_head_forward.2} parent=0 // loop_body
    %s17 = ssub.s32 %s12, 1
    %s18 = ssub.s32 %s12, 2
    %s25 = sadd.s32 1, %s20
    %p26 = scmp.ge.s32.totalorder %s25, 4
    %s27 = scalar_select %p26, 0, %s25
    %s28 = sadd.s32 1, %s19
    %s29 = scalar_select %p26, %s28, %s19
    %p30 = scmp.ge.s32.totalorder %s29, 2
    %s31 = scalar_select %p30, 0, %s29
    %s32 = ssub.s32 %s19, %s31
    %s33 = ssub.s32 %s20, %s27
    %s34 = sor.u32 %s32, %s33
    %p35 = scmp.eq.s32.totalorder %s34, 0
    %s37 = sadd.s32 %s36, 1
    %s38 = scalar_select %p35, %s36, %s37
    %p41 = pneg %p35
    %p42 = scmp.eq.s32.totalorder %s12, 7
    %p43 = por %p41, %p42
    %p44 = scmp.ne.s32.totalorder %s36, %s39
    %p45 = scmp.eq.s32.totalorder %s12, 0
    %p46 = por %p44, %p45
    %p47 = scmp.ne.s32.totalorder %s36, %s39
    %p48 = scmp.eq.s32.totalorder %s17, 7
    %p49 = por %p47, %p48
    %p50 = scmp.ne.s32.totalorder %s39, %s40
    %p51 = scmp.eq.s32.totalorder %s17, 0
    %p52 = por %p50, %p51
    %p53 = scmp.ne.s32.totalorder %s39, %s40
    %p54 = scmp.eq.s32.totalorder %s18, 7
    %p55 = por %p53, %p54
    %p57 = scmp.ne.s32.totalorder %s40, %s56
    %p58 = scmp.eq.s32.totalorder %s18, 0
    %p59 = por %p57, %p58
    %s60 = sadd.s32 %s20, 1
    %s61 = sadd.s32 %s27, 1
    %s62 = ssub.s32 %s19, %s31
    %s63 = ssub.s32 %s60, %s61
    %s64 = sor.u32 %s62, %s63
    %p65 = scmp.eq.s32.totalorder %s64, 0
    %s67 = sadd.s32 %s66, 1
    %s68 = scalar_select %p65, %s66, %s67
    %p71 = pneg %p65
    %p72 = scmp.eq.s32.totalorder %s12, 7
    %p73 = por %p71, %p72
    %p74 = scmp.ne.s32.totalorder %s66, %s69
    %p75 = scmp.eq.s32.totalorder %s12, 0
    %p76 = por %p74, %p75
    %p77 = scmp.ne.s32.totalorder %s66, %s69
    %p78 = scmp.eq.s32.totalorder %s17, 7
    %p79 = por %p77, %p78
    %p80 = scmp.ne.s32.totalorder %s69, %s70
    %p81 = scmp.eq.s32.totalorder %s17, 0
    %p82 = por %p80, %p81
    %p83 = scmp.ne.s32.totalorder %s69, %s70
    %p84 = scmp.eq.s32.totalorder %s18, 7
    %p85 = por %p83, %p84
    %p87 = scmp.ne.s32.totalorder %s70, %s86
    %p88 = scmp.eq.s32.totalorder %s18, 0
    %p89 = por %p87, %p88
    %s90 = sadd.s32 %s20, 2
    %s91 = sadd.s32 %s27, 2
    %s92 = ssub.s32 %s19, %s31
    %s93 = ssub.s32 %s90, %s91
    %s94 = sor.u32 %s92, %s93
    %p95 = scmp.eq.s32.totalorder %s94, 0
    %s97 = sadd.s32 %s96, 1
    %s98 = scalar_select %p95, %s96, %s97
    %p101 = pneg %p95
    %p102 = scmp.eq.s32.totalorder %s12, 7
    %p103 = por %p101, %p102
    %p104 = scmp.ne.s32.totalorder %s96, %s99
    %p105 = scmp.eq.s32.totalorder %s12, 0
    %p106 = por %p104, %p105
    %p107 = scmp.ne.s32.totalorder %s96, %s99
    %p108 = scmp.eq.s32.totalorder %s17, 7
    %p109 = por %p107, %p108
    %p110 = scmp.ne.s32.totalorder %s99, %s100
    %p111 = scmp.eq.s32.totalorder %s17, 0
    %p112 = por %p110, %p111
    %p113 = scmp.ne.s32.totalorder %s99, %s100
    %p114 = scmp.eq.s32.totalorder %s18, 7
    %p115 = por %p113, %p114
    %p117 = scmp.ne.s32.totalorder %s100, %s116
    %p118 = scmp.eq.s32.totalorder %s18, 0
    %p119 = por %p117, %p118
    %s121 = sadd.s32 %s120, 1
    %p124 = scmp.eq.s32.totalorder %s12, 7
    %p125 = scmp.ne.s32.totalorder %s120, %s122
    %p126 = scmp.eq.s32.totalorder %s12, 0
    %p127 = por %p125, %p126
    %p128 = scmp.ne.s32.totalorder %s120, %s122
    %p129 = scmp.eq.s32.totalorder %s17, 7
    %p130 = por %p128, %p129
    %p131 = scmp.ne.s32.totalorder %s122, %s123
    %p132 = scmp.eq.s32.totalorder %s17, 0
    %p133 = por %p131, %p132
    %p134 = scmp.ne.s32.totalorder %s122, %s123
    %p135 = scmp.eq.s32.totalorder %s18, 7
    %p136 = por %p134, %p135
    %p138 = scmp.ne.s32.totalorder %s123, %s137
    %p139 = scmp.eq.s32.totalorder %s18, 0
    %p140 = por %p138, %p139
    %s141 = ssub.s32 %s19, %s31
    %s142 = ssub.s32 %s20, %s27
    %s143 = sor.u32 %s141, %s142
    %p144 = scmp.eq.s32.totalorder %s143, 0
    %s146 = sadd.s32 %s145, 1
    %s147 = scalar_select %p144, %s145, %s146
    %p150 = pneg %p144
    %p151 = scmp.eq.s32.totalorder %s12, 7
    %p152 = por %p150, %p151
    %p153 = scmp.ne.s32.totalorder %s145, %s148
    %p154 = scmp.eq.s32.totalorder %s12, 0
    %p155 = por %p153, %p154
    %p156 = scmp.ne.s32.totalorder %s145, %s148
    %p157 = scmp.eq.s32.totalorder %s17, 7
    %p158 = por %p156, %p157
    %p159 = scmp.ne.s32.totalorder %s148, %s149
    %p160 = scmp.eq.s32.totalorder %s17, 0
    %p161 = por %p159, %p160
    %p162 = scmp.ne.s32.totalorder %s148, %s149
    %p163 = scmp.eq.s32.totalorder %s18, 7
    %p164 = por %p162, %p163
    %p166 = scmp.ne.s32.totalorder %s149, %s165
    %p167 = scmp.eq.s32.totalorder %s18, 0
    %p168 = por %p166, %p167
    %s169 = ssub.s32 %s19, %s31
    %s170 = ssub.s32 %s20, %s27
    %s171 = sor.u32 %s169, %s170
    %p172 = scmp.eq.s32.totalorder %s171, 0
    %s174 = sadd.s32 %s173, 1
    %s175 = scalar_select %p172, %s173, %s174
    %p178 = pneg %p172
    %p179 = scmp.eq.s32.totalorder %s12, 7
    %p180 = por %p178, %p179
    %p181 = scmp.ne.s32.totalorder %s173, %s176
    %p182 = scmp.eq.s32.totalorder %s12, 0
    %p183 = por %p181, %p182
    %p184 = scmp.ne.s32.totalorder %s173, %s176
    %p185 = scmp.eq.s32.totalorder %s17, 7
    %p186 = por %p184, %p185
    %p187 = scmp.ne.s32.totalorder %s176, %s177
    %p188 = scmp.eq.s32.totalorder %s17, 0
    %p189 = por %p187, %p188
    %p190 = scmp.ne.s32.totalorder %s176, %s177
    %p191 = scmp.eq.s32.totalorder %s18, 7
    %p192 = por %p190, %p191
    %p194 = scmp.ne.s32.totalorder %s177, %s193
    %p195 = scmp.eq.s32.totalorder %s18, 0
    %p196 = por %p194, %p195
    %p197 = scmp.le.s32.totalorder 1, %s12
    %p198 = scmp.lt.s32.totalorder %s12, 9
    %p199 = pnand %p197, %p198
    %p200 = pneg %p199
    // Predicated region
    $region9: #{resnet50_head_forward.2} parent=5 // pred_check
      _
    $region10: #{resnet50_head_forward.2} parent=5 // pred_check_branch
      %202 = sbr.rel (%p199) target = $region12
    $region11: #{resnet50_head_forward.2} parent=5 // pred_region
      %s203 = ssub.s32 %s12, 1
      // Predicated region
      $region13: #{resnet50_head_forward.2} parent=11 // pred_check
        %p204 = pneg %p133
      $region14: #{resnet50_head_forward.2} parent=11 // pred_check_branch
        %206 = sbr.rel (%p204) target = $region16
      $region15: #{resnet50_head_forward.2} parent=11 // pred_region
        _
      $region16: #{resnet50_head_forward.2} parent=11 // pred_fallthru
        _
    $region12: #{resnet50_head_forward.2} parent=5 // pred_fallthru
      _
    %p207 = scmp.lt.s32.totalorder %s12, 8
    // Predicated region
    $region17: #{resnet50_head_forward.2} parent=5 // pred_check
      %p208 = pneg %p207
    $region18: #{resnet50_head_forward.2} parent=5 // pred_check_branch
      %210 = sbr.rel (%p208) target = $region20
    $region19: #{resnet50_head_forward.2} parent=5 // pred_region
      // Predicated region
      $region21: #{resnet50_head_forward.2} parent=19 // pred_check
        %p211 = pneg %p46
      $region22: #{resnet50_head_forward.2} parent=19 // pred_check_branch
        %213 = sbr.rel (%p211) target = $region24
      $region23: #{resnet50_head_forward.2} parent=19 // pred_region
        %p214 = scmp.lt.s32.totalorder %s19, 1
        %s215 = scalar_select %p214, %s19, 1
        %p216 = scmp.lt.s32.totalorder %s20, 5
        %s217 = scalar_select %p216, %s20, 5
        %s218 = smul.addr %s217, 14
        %s219 = smul.addr %s215, 84
        %s220 = sadd.s32 %s218, %s219
        %s221 = smul.addr %s220, 4
        %s222 = scalar_lea.vmem %s0, %s221
      $region24: #{resnet50_head_forward.2} parent=19 // pred_fallthru
        _
      // Predicated region
      $region25: #{resnet50_head_forward.2} parent=19 // pred_check
        %p223 = pneg %p76
      $region26: #{resnet50_head_forward.2} parent=19 // pred_check_branch
        %225 = sbr.rel (%p223) target = $region28
      $region27: #{resnet50_head_forward.2} parent=19 // pred_region
        %s226 = sadd.s32 %s20, 1
        %p227 = scmp.lt.s32.totalorder %s19, 1
        %s228 = scalar_select %p227, %s19, 1
        %p229 = scmp.lt.s32.totalorder %s226, 5
        %s230 = scalar_select %p229, %s226, 5
        %s231 = smul.addr %s230, 14
        %s232 = smul.addr %s228, 84
        %s233 = sadd.s32 %s231, %s232
        %s234 = smul.addr %s233, 4
        %s235 = scalar_lea.vmem %s1, %s234
        %s236 = sadd.s32 %s20, 1
      $region28: #{resnet50_head_forward.2} parent=19 // pred_fallthru
        _
      // Predicated region
      $region29: #{resnet50_head_forward.2} parent=19 // pred_check
        %p237 = pneg %p106
      $region30: #{resnet50_head_forward.2} parent=19 // pred_check_branch
        %239 = sbr.rel (%p237) target = $region32
      $region31: #{resnet50_head_forward.2} parent=19 // pred_region
        %s240 = sadd.s32 %s20, 2
        %p241 = scmp.lt.s32.totalorder %s19, 1
        %s242 = scalar_select %p241, %s19, 1
        %p243 = scmp.lt.s32.totalorder %s240, 5
        %s244 = scalar_select %p243, %s240, 5
        %s245 = smul.addr %s244, 14
        %s246 = smul.addr %s242, 84
        %s247 = sadd.s32 %s245, %s246
        %s248 = smul.addr %s247, 4
        %s249 = scalar_lea.vmem %s2, %s248
        %s250 = sadd.s32 %s20, 2
      $region32: #{resnet50_head_forward.2} parent=19 // pred_fallthru
        _
    $region20: #{resnet50_head_forward.2} parent=5 // pred_fallthru
      _
    %p251 = scmp.le.s32.totalorder 1, %s12
    %p252 = scmp.lt.s32.totalorder %s12, 9
    %p253 = pnand %p251, %p252
    %p254 = pneg %p253
    // Predicated region
    $region33: #{resnet50_head_forward.2} parent=5 // pred_check
      _
    $region34: #{resnet50_head_forward.2} parent=5 // pred_check_branch
      %256 = sbr.rel (%p253) target = $region36
    $region35: #{resnet50_head_forward.2} parent=5 // pred_region
      %s257 = ssub.s32 %s12, 1
      %p258 = scmp.lt.s32.totalorder %s21, 1
      %s259 = scalar_select %p258, %s21, 1
      %p260 = scmp.lt.s32.totalorder %s22, 5
      %s261 = scalar_select %p260, %s22, 5
      %s262 = smul.addr %s261, 14
      %s263 = smul.addr %s259, 84
      %s264 = sadd.s32 %s262, %s263
      %s265 = smul.addr %s264, 4
      %s266 = scalar_lea.vmem %s0, %s265
      %p267 = pneg %p52
      %p268 = pneg %p49
      %s269 = sadd.s32 %s22, 1
      %p270 = scmp.lt.s32.totalorder %s21, 1
      %s271 = scalar_select %p270, %s21, 1
      %p272 = scmp.lt.s32.totalorder %s269, 5
      %s273 = scalar_select %p272, %s269, 5
      %s274 = smul.addr %s273, 14
      %s275 = smul.addr %s271, 84
      %s276 = sadd.s32 %s274, %s275
      %s277 = smul.addr %s276, 4
      %s278 = scalar_lea.vmem %s1, %s277
      %p279 = pneg %p82
      %p280 = pneg %p79
      %s281 = sadd.s32 %s22, 2
      %p282 = scmp.lt.s32.totalorder %s21, 1
      %s283 = scalar_select %p282, %s21, 1
      %p284 = scmp.lt.s32.totalorder %s281, 5
      %s285 = scalar_select %p284, %s281, 5
      %s286 = smul.addr %s285, 14
      %s287 = smul.addr %s283, 84
      %s288 = sadd.s32 %s286, %s287
      %s289 = smul.addr %s288, 4
      %s290 = scalar_lea.vmem %s2, %s289
      %p291 = pneg %p112
      %p292 = pneg %p109
      %p293 = pneg %p133
      %p294 = pneg %p130
      %p295 = pneg %p161
      %p296 = pneg %p158
      %p297 = scmp.lt.s32.totalorder %s21, 1
      %s298 = scalar_select %p297, %s21, 1
      %p299 = scmp.lt.s32.totalorder %s22, 3
      %s300 = scalar_select %p299, %s22, 3
      %s301 = smul.addr %s300, 20
      %s302 = smul.addr %s298, 80
      %s303 = sadd.s32 %s301, %s302
      %s304 = smul.addr %s303, 4
      %s305 = scalar_lea.vmem %s4, %s304
      %p306 = pneg %p189
      %p307 = pneg %p186
      %p308 = scmp.lt.s32.totalorder %s21, 1
      %s309 = scalar_select %p308, %s21, 1
      %p310 = scmp.lt.s32.totalorder %s22, 3
      %s311 = scalar_select %p310, %s22, 3
      %s312 = smul.addr %s311, 2
      %s313 = smul.addr %s309, 8
      %s314 = sadd.s32 %s312, %s313
      %s315 = smul.addr %s314, 2
      %s316 = scalar_lea.vmem %s5, %s315
      %p317 = scmp.lt.s32.totalorder %s21, 1
      %s318 = scalar_select %p317, %s21, 1
      %p319 = scmp.lt.s32.totalorder %s22, 5
      %s320 = scalar_select %p319, %s22, 5
      %s321 = smul.addr %s320, 14
      %s322 = smul.addr %s318, 84
      %s323 = sadd.s32 %s321, %s322
      %s324 = smul.addr %s323, 4
      %s325 = scalar_lea.vmem %s0, %s324
      %s326 = sadd.s32 %s22, 1
      %p327 = scmp.lt.s32.totalorder %s21, 1
      %s328 = scalar_select %p327, %s21, 1
      %p329 = scmp.lt.s32.totalorder %s326, 5
      %s330 = scalar_select %p329, %s326, 5
      %s331 = smul.addr %s330, 14
      %s332 = smul.addr %s328, 84
      %s333 = sadd.s32 %s331, %s332
      %s334 = smul.addr %s333, 4
      %s335 = scalar_lea.vmem %s1, %s334
      %s336 = sadd.s32 %s22, 1
      %s337 = sadd.s32 %s22, 2
      %p338 = scmp.lt.s32.totalorder %s21, 1
      %s339 = scalar_select %p338, %s21, 1
      %p340 = scmp.lt.s32.totalorder %s337, 5
      %s341 = scalar_select %p340, %s337, 5
      %s342 = smul.addr %s341, 14
      %s343 = smul.addr %s339, 84
      %s344 = sadd.s32 %s342, %s343
      %s345 = smul.addr %s344, 4
      %s346 = scalar_lea.vmem %s2, %s345
      %s347 = sadd.s32 %s22, 2
      %p348 = scmp.lt.s32.totalorder %s21, 1
      %s349 = scalar_select %p348, %s21, 1
      %p350 = scmp.lt.s32.totalorder %s22, 3
      %s351 = scalar_select %p350, %s22, 3
      %s352 = smul.addr %s351, 20
      %s353 = smul.addr %s349, 80
      %s354 = sadd.s32 %s352, %s353
      %s355 = smul.addr %s354, 4
      %s356 = scalar_lea.vmem %s4, %s355
      %p357 = scmp.lt.s32.totalorder %s21, 1
      %s358 = scalar_select %p357, %s21, 1
      %p359 = scmp.lt.s32.totalorder %s22, 3
      %s360 = scalar_select %p359, %s22, 3
      %s361 = smul.addr %s360, 2
      %s362 = smul.addr %s358, 8
      %s363 = sadd.s32 %s361, %s362
      %s364 = smul.addr %s363, 2
      %s365 = scalar_lea.vmem %s5, %s364
      %v367 = vld [vmem:[%s325] sm:$0xf]
      %v368 = vld [vmem:[%s325 + $0x4] sm:$0xf]
      %v369 = vld [vmem:[%s325 + $0x8] sm:$0xf]
      %v370 = vld [vmem:[%s325 + $0xc] sm:$0xf]
      %v371 = vld [vmem:[%s325 + $0x10] sm:$0xf]
      %v372 = vld [vmem:[%s325 + $0x14] sm:$0xf]
      %v373 = vld [vmem:[%s325 + $0x18] sm:$0xf]
      %v374 = vld [vmem:[%s325 + $0x1c] sm:$0xf]
      %v375 = vld [vmem:[%s325 + $0x20] sm:$0xf]
      %v376 = vld [vmem:[%s325 + $0x24] sm:$0xf]
      %v377 = vld [vmem:[%s325 + $0x28] sm:$0x1]
      %v378 = vld [vmem:[%s325] sm:$0xe]
      %v389 = vunpack.c.l.b16 %v367
      %v390 = vunpack.c.l.b16 %v368
      %v391 = vunpack.c.l.b16 %v369
      %v392 = vunpack.c.l.b16 %v370
      %v393 = vunpack.c.l.b16 %v371
      %v394 = vunpack.c.l.b16 %v372
      %v395 = vunpack.c.l.b16 %v373
      %v396 = vunpack.c.l.b16 %v374
      %v397 = vunpack.c.l.b16 %v375
      %v398 = vunpack.c.l.b16 %v376
      %v399 = vpack.c.b16 %v390, %v389
      %v400 = vpack.c.b16 %v392, %v391
      %v401 = vpack.c.b16 %v394, %v393
      %v402 = vpack.c.b16 %v396, %v395
      %v403 = vpack.c.b16 %v398, %v397
      %v405 = vunpack.c.l.b16 %v377
      %v406 = vpack.c.b16 %v405, %v405
      %vm407 = vsmask.f32 7424
      %v409 = vshrl.u32 %v399, 16
      %v411 = vshll.u32 %v399, 16
      %v413 = vrot.slane %v411, 1
      %v414 = vor.u32 %v409, %v413
      %v416 = vshll.u32 %v400, 16
      %v418 = vrot.slane %v416, 1
      %v419 = vsel %vm407, %v414, %v418
      %v420 = vshrl.u32 %v400, 16
      %v422 = vor.u32 %v420, %v418
      %v424 = vshll.u32 %v401, 16
      %v426 = vrot.slane %v424, 1
      %v427 = vsel %vm407, %v422, %v426
      %v428 = vshrl.u32 %v401, 16
      %v430 = vor.u32 %v428, %v426
      %v432 = vshll.u32 %v402, 16
      %v434 = vrot.slane %v432, 1
      %v435 = vsel %vm407, %v430, %v434
      %v436 = vshrl.u32 %v402, 16
      %v438 = vor.u32 %v436, %v434
      %v440 = vshll.u32 %v403, 16
      %v442 = vrot.slane %v440, 1
      %v443 = vsel %vm407, %v438, %v442
      %v444 = vshrl.u32 %v403, 16
      %v446 = vor.u32 %v444, %v442
      %v448 = vshll.u32 %v406, 16
      %v450 = vrot.slane %v448, 1
      %v451 = vsel %vm407, %v446, %v450
      %452 = vrot.lane.b32.xlu0 %v419, 64
      %v453 = vpop.permute.xlu0 %452
      %454 = vrot.lane.b32.xlu0 %v427, 64
      %v455 = vpop.permute.xlu0 %454
      %456 = vrot.lane.b32.xlu0 %v435, 64
      %v457 = vpop.permute.xlu0 %456
      %458 = vrot.lane.b32.xlu0 %v443, 64
      %v459 = vpop.permute.xlu0 %458
      %460 = vrot.lane.b32.xlu0 %v451, 64
      %v461 = vpop.permute.xlu0 %460
      %v463 = vunpack.c.l.b16 %v378
      %v464 = vpack.c.b16 %v390, %v463
      %vm465 = vcmask 1046528
      %v466 = vrot.slane %v464, 1
      %v467 = vrot.slane %v400, 1
      %v468 = vsel %vm465, %v466, %v467
      %v469 = vrot.slane %v401, 1
      %v470 = vsel %vm465, %v467, %v469
      %v471 = vrot.slane %v402, 1
      %v472 = vsel %vm465, %v469, %v471
      %v473 = vrot.slane %v403, 1
      %v474 = vsel %vm465, %v471, %v473
      %v475 = vrot.slane %v406, 1
      %v476 = vsel %vm465, %v473, %v475
      %vm477 = vcmask 523264
      %v479 = vsel %vm477, %v399, %v453
      %v482 = vsel %vm477, %v400, %v455
      %v485 = vsel %vm477, %v401, %v457
      %v488 = vsel %vm477, %v402, %v459
      %v491 = vsel %vm477, %v403, %v461
      %v493 = vld [vmem:[%s3] sm:$0xff]
      %v494 = vld [vmem:[%s3 + $0x8] sm:$0xff]
      %v495 = vld [vmem:[%s3 + $0x10] sm:$0xff]
      %v496 = vld [vmem:[%s3 + $0x18] sm:$0xff]
      %v497 = vld [vmem:[%s3 + $0x20] sm:$0xff]
      %v498 = vld [vmem:[%s3 + $0x28] sm:$0xff]
      %v499 = vld [vmem:[%s3 + $0x30] sm:$0xff]
      %v500 = vld [vmem:[%s3 + $0x38] sm:$0xff]
      %v501 = vld [vmem:[%s3 + $0x40] sm:$0xff]
      %v502 = vld [vmem:[%s3 + $0x48] sm:$0xff]
      %v503 = vld [vmem:[%s3 + $0x50] sm:$0xff]
      %v504 = vld [vmem:[%s3 + $0x58] sm:$0xff]
      %v505 = vld [vmem:[%s3 + $0x60] sm:$0xff]
      %v506 = vld [vmem:[%s3 + $0x68] sm:$0xff]
      %v507 = vld [vmem:[%s3 + $0x70] sm:$0xff]
      %v508 = vld [vmem:[%s3 + $0x78] sm:$0xff]
      %v509 = vld [vmem:[%s3 + $0x80] sm:$0xff]
      %v510 = vld [vmem:[%s3 + $0x88] sm:$0xff]
      %v511 = vld [vmem:[%s3 + $0x90] sm:$0xff]
      %v512 = vld [vmem:[%s3 + $0x98] sm:$0xff]
      %v513 = vld [vmem:[%s3 + $0xa0] sm:$0xff]
      %v514 = vld [vmem:[%s3 + $0xa8] sm:$0xff]
      %v515 = vld [vmem:[%s3 + $0xb0] sm:$0xff]
      %v516 = vld [vmem:[%s3 + $0xb8] sm:$0xff]
      %v517 = vld [vmem:[%s325 + $0x4] sm:$0xe]
      %v518 = vld [vmem:[%s325 + $0x28] sm:$0xf]
      %v519 = vld [vmem:[%s325 + $0x2c] sm:$0x1]
      %v520 = vld [vmem:[%s325 + $0x2c] sm:$0x3]
      %v521 = vld [vmem:[%s325 + $0x4] sm:$0xc]
      %v525 = vunpack.c.l.b16 %v517
      %v526 = vunpack.c.l.b16 %v518
      %v527 = vunpack.c.l.b16 %v519
      %v528 = vpack.c.b16 %v391, %v525
      %v529 = vpack.c.b16 %v393, %v392
      %v530 = vpack.c.b16 %v395, %v394
      %v531 = vpack.c.b16 %v397, %v396
      %v532 = vpack.c.b16 %v526, %v398
      %v533 = vpack.c.b16 %v527, %v527
      %v535 = vunpack.c.l.b16 %v520
      %v536 = vpack.c.b16 %v535, %v535
      %v538 = vshrl.u32 %v528, 16
      %v540 = vshll.u32 %v528, 16
      %v542 = vrot.slane %v540, 1
      %v543 = vor.u32 %v538, %v542
      %v545 = vshll.u32 %v529, 16
      %v547 = vrot.slane %v545, 1
      %v548 = vsel %vm407, %v543, %v547
      %v549 = vshrl.u32 %v529, 16
      %v551 = vor.u32 %v549, %v547
      %v553 = vshll.u32 %v530, 16
      %v555 = vrot.slane %v553, 1
      %v556 = vsel %vm407, %v551, %v555
      %v557 = vshrl.u32 %v530, 16
      %v559 = vor.u32 %v557, %v555
      %v561 = vshll.u32 %v531, 16
      %v563 = vrot.slane %v561, 1
      %v564 = vsel %vm407, %v559, %v563
      %v565 = vshrl.u32 %v531, 16
      %v567 = vor.u32 %v565, %v563
      %v569 = vshll.u32 %v532, 16
      %v571 = vrot.slane %v569, 1
      %v572 = vsel %vm407, %v567, %v571
      %v573 = vshrl.u32 %v532, 16
      %v575 = vor.u32 %v573, %v571
      %v577 = vshll.u32 %v536, 16
      %v579 = vrot.slane %v577, 1
      %v580 = vsel %vm407, %v575, %v579
      %v581 = vshrl.u32 %v536, 16
      %v583 = vor.u32 %v581, %v579
      %584 = vrot.lane.b32.xlu0 %v548, 64
      %v585 = vpop.permute.xlu0 %584
      %586 = vrot.lane.b32.xlu0 %v556, 64
      %v587 = vpop.permute.xlu0 %586
      %588 = vrot.lane.b32.xlu0 %v564, 64
      %v589 = vpop.permute.xlu0 %588
      %590 = vrot.lane.b32.xlu0 %v572, 64
      %v591 = vpop.permute.xlu0 %590
      %592 = vrot.lane.b32.xlu0 %v580, 64
      %v593 = vpop.permute.xlu0 %592
      %594 = vrot.lane.b32.xlu0 %v583, 64
      %v595 = vpop.permute.xlu0 %594
      %v597 = vunpack.c.l.b16 %v521
      %v598 = vpack.c.b16 %v391, %v597
      %v599 = vrot.slane %v598, 1
      %v600 = vrot.slane %v529, 1
      %v601 = vsel %vm465, %v599, %v600
      %v602 = vrot.slane %v530, 1
      %v603 = vsel %vm465, %v600, %v602
      %v604 = vrot.slane %v531, 1
      %v605 = vsel %vm465, %v602, %v604
      %v606 = vrot.slane %v532, 1
      %v607 = vsel %vm465, %v604, %v606
      %v608 = vrot.slane %v536, 1
      %v609 = vsel %vm465, %v606, %v608
      %v611 = vsel %vm477, %v528, %v585
      %v613 = vsel %vm477, %v529, %v587
      %v615 = vsel %vm477, %v530, %v589
      %v617 = vsel %vm477, %v531, %v591
      %v619 = vsel %vm477, %v532, %v593
      %v622 = vsel %vm477, %v533, %v595
      %s623 = scalar_lea.vmem %s3, 192
      %v624 = vld [vmem:[%s623] sm:$0xff]
      %v625 = vld [vmem:[%s623 + $0x8] sm:$0xff]
      %v626 = vld [vmem:[%s623 + $0x10] sm:$0xff]
      %v627 = vld [vmem:[%s623 + $0x18] sm:$0xff]
      %v628 = vld [vmem:[%s623 + $0x20] sm:$0xff]
      %v629 = vld [vmem:[%s623 + $0x28] sm:$0xff]
      %v630 = vld [vmem:[%s623 + $0x30] sm:$0xff]
      %v631 = vld [vmem:[%s623 + $0x38] sm:$0xff]
      %v632 = vld [vmem:[%s623 + $0x40] sm:$0xff]
      %v633 = vld [vmem:[%s623 + $0x48] sm:$0xff]
      %v634 = vld [vmem:[%s623 + $0x50] sm:$0xff]
      %v635 = vld [vmem:[%s623 + $0x58] sm:$0xff]
      %v636 = vld [vmem:[%s623 + $0x60] sm:$0xff]
      %v637 = vld [vmem:[%s623 + $0x68] sm:$0xff]
      %v638 = vld [vmem:[%s623 + $0x70] sm:$0xff]
      %v639 = vld [vmem:[%s623 + $0x78] sm:$0xff]
      %v640 = vld [vmem:[%s623 + $0x80] sm:$0xff]
      %v641 = vld [vmem:[%s623 + $0x88] sm:$0xff]
      %v642 = vld [vmem:[%s623 + $0x90] sm:$0xff]
      %v643 = vld [vmem:[%s623 + $0x98] sm:$0xff]
      %v644 = vld [vmem:[%s623 + $0xa0] sm:$0xff]
      %v645 = vld [vmem:[%s623 + $0xa8] sm:$0xff]
      %v646 = vld [vmem:[%s623 + $0xb0] sm:$0xff]
      %v647 = vld [vmem:[%s623 + $0xb8] sm:$0xff]
      %v654 = vrot.slane %v611, 1
      %v655 = vrot.slane %v613, 1
      %v656 = vsel %vm465, %v654, %v655
      %v657 = vrot.slane %v601, 1
      %v658 = vrot.slane %v603, 1
      %v659 = vsel %vm465, %v657, %v658
      %v660 = vrot.slane %v615, 1
      %v661 = vsel %vm465, %v655, %v660
      %v662 = vrot.slane %v605, 1
      %v663 = vsel %vm465, %v658, %v662
      %v664 = vrot.slane %v617, 1
      %v665 = vsel %vm465, %v660, %v664
      %v666 = vrot.slane %v607, 1
      %v667 = vsel %vm465, %v662, %v666
      %v668 = vrot.slane %v619, 1
      %v669 = vsel %vm465, %v664, %v668
      %v670 = vrot.slane %v609, 1
      %v671 = vsel %vm465, %v666, %v670
      %v672 = vrot.slane %v622, 1
      %v673 = vsel %vm465, %v668, %v672
      %v674 = vrot.slane %v608, 1
      %v675 = vsel %vm465, %v670, %v674
      %v705 = vunpack.c.l.b16 %v624
      %v706 = vunpack.c.h.b16 %v624
      %v707 = vunpack.c.l.b16 %v625
      %v708 = vunpack.c.h.b16 %v625
      %v709 = vunpack.c.l.b16 %v626
      %v710 = vunpack.c.h.b16 %v626
      %v711 = vunpack.c.l.b16 %v627
      %v712 = vunpack.c.h.b16 %v627
      %v713 = vunpack.c.l.b16 %v628
      %v714 = vunpack.c.h.b16 %v628
      %v715 = vunpack.c.l.b16 %v629
      %v716 = vunpack.c.h.b16 %v629
      %v717 = vunpack.c.l.b16 %v630
      %v718 = vunpack.c.h.b16 %v630
      %v719 = vunpack.c.l.b16 %v631
      %v720 = vunpack.c.h.b16 %v631
      %v721 = vunpack.c.l.b16 %v632
      %v722 = vunpack.c.h.b16 %v632
      %v723 = vunpack.c.l.b16 %v633
      %v724 = vunpack.c.h.b16 %v633
      %v725 = vunpack.c.l.b16 %v634
      %v726 = vunpack.c.h.b16 %v634
      %v727 = vunpack.c.l.b16 %v635
      %v728 = vunpack.c.h.b16 %v635
      %v729 = vunpack.c.l.b16 %v636
      %v730 = vunpack.c.h.b16 %v636
      %v731 = vunpack.c.l.b16 %v637
      %v732 = vunpack.c.h.b16 %v637
      %v733 = vunpack.c.l.b16 %v638
      %v734 = vunpack.c.h.b16 %v638
      %v735 = vunpack.c.l.b16 %v639
      %v736 = vunpack.c.h.b16 %v639
      %v737 = vunpack.c.l.b16 %v640
      %v738 = vunpack.c.h.b16 %v640
      %v739 = vunpack.c.l.b16 %v641
      %v740 = vunpack.c.h.b16 %v641
      %v741 = vunpack.c.l.b16 %v642
      %v742 = vunpack.c.h.b16 %v642
      %v743 = vunpack.c.l.b16 %v643
      %v744 = vunpack.c.h.b16 %v643
      %v745 = vunpack.c.l.b16 %v644
      %v746 = vunpack.c.h.b16 %v644
      %v747 = vunpack.c.l.b16 %v645
      %v748 = vunpack.c.h.b16 %v645
      %v749 = vunpack.c.l.b16 %v646
      %v750 = vunpack.c.h.b16 %v646
      %v751 = vunpack.c.l.b16 %v647
      %v752 = vunpack.c.h.b16 %v647
      %v753 = vpack.c.b16 %v707, %v705
      %v754 = vpack.c.b16 %v708, %v706
      %v755 = vpack.c.b16 %v711, %v709
      %v756 = vpack.c.b16 %v712, %v710
      %v757 = vpack.c.b16 %v715, %v713
      %v758 = vpack.c.b16 %v716, %v714
      %v759 = vpack.c.b16 %v719, %v717
      %v760 = vpack.c.b16 %v720, %v718
      %v761 = vpack.c.b16 %v723, %v721
      %v762 = vpack.c.b16 %v724, %v722
      %v763 = vpack.c.b16 %v727, %v725
      %v764 = vpack.c.b16 %v728, %v726
      %v765 = vpack.c.b16 %v731, %v729
      %v766 = vpack.c.b16 %v732, %v730
      %v767 = vpack.c.b16 %v735, %v733
      %v768 = vpack.c.b16 %v736, %v734
      %v769 = vpack.c.b16 %v739, %v737
      %v770 = vpack.c.b16 %v740, %v738
      %v771 = vpack.c.b16 %v743, %v741
      %v772 = vpack.c.b16 %v744, %v742
      %v773 = vpack.c.b16 %v747, %v745
      %v774 = vpack.c.b16 %v748, %v746
      %v775 = vpack.c.b16 %v751, %v749
      %v776 = vpack.c.b16 %v752, %v750
      %v802 = vsel %vm477, %v659, 0
      %v805 = vsel %vm477, %v663, 0
      %v808 = vsel %vm477, %v667, 0
      %v811 = vsel %vm477, %v671, 0
      %v814 = vsel %vm477, %v675, 0
      %816 = vmatprep.subr.bf16.mxu0 %v754
      %817 = vmatpush1.bf16.msra.mxu0 %v753
      %818 = vmatprep.subr.bf16.mxu0 %v756
      %819 = vmatpush1.bf16.msra.mxu0 %v755
      %820 = vmatprep.subr.bf16.mxu0 %v758
      %821 = vmatpush1.bf16.msra.mxu0 %v757
      %822 = vmatprep.subr.bf16.mxu0 %v760
      %823 = vmatpush1.bf16.msra.mxu0 %v759
      %824 = vmatprep.subr.bf16.mxu0 %v762
      %825 = vmatpush1.bf16.msra.mxu0 %v761
      %826 = vmatprep.subr.bf16.mxu0 %v764
      %827 = vmatpush1.bf16.msra.mxu0 %v763
      %828 = vmatprep.subr.bf16.mxu0 %v766
      %829 = vmatpush1.bf16.msra.mxu0 %v765
      %830 = vmatprep.subr.bf16.mxu0 %v768
      %831 = vmatpush1.bf16.msra.mxu0 %v767
      %832 = vmatprep.subr.bf16.mxu0 %v770
      %833 = vmatpush1.bf16.msra.mxu0 %v769
      %834 = vmatprep.subr.bf16.mxu0 %v772
      %835 = vmatpush1.bf16.msra.mxu0 %v771
      %836 = vmatprep.subr.bf16.mxu0 %v774
      %837 = vmatpush1.bf16.msra.mxu0 %v773
      %838 = vmatprep.subr.bf16.mxu0 %v776
      %839 = vmatpush1.bf16.msra.mxu0 %v775
      %840 = vmatprep.subr.bf16.mxu0 0
      %841 = vmatpush1.bf16.msra.mxu0 0
      %842 = vmatprep.subr.bf16.mxu0 0
      %843 = vmatpush1.bf16.msra.mxu0 0
      %844 = vmatprep.subr.bf16.mxu0 0
      %845 = vmatpush1.bf16.msra.mxu0 0
      %846 = vmatprep.subr.bf16.mxu0 0
      %847 = vmatpush1.bf16.msra.mxu0 0
      %848 = vmatprep.mubr.bf16.mxu0 %v802
      %849 = vmatmul.mubr.bf16.gmra.mrb[0].mxu0 %v656
      %v850 = vpop.f32.mrb[0].mxu0
      %v851 = vadd.f32 0.0, %v850
      %v852 = vpop.f32.mrb[0].mxu0
      %v853 = vadd.f32 0.0, %v852
      %v854 = vpop.f32.mrb[0].mxu0
      %v855 = vadd.f32 0.0, %v854
      %v856 = vpop.f32.mrb[0].mxu0
      %v857 = vadd.f32 0.0, %v856
      %858 = vmatprep.mubr.bf16.mxu0 %v805
      %859 = vmatmul.mubr.bf16.gmra.mrb[0].mxu0 %v661
      %v860 = vpop.f32.mrb[0].mxu0
      %v861 = vadd.f32 0.0, %v860
      %v862 = vpop.f32.mrb[0].mxu0
      %v863 = vadd.f32 0.0, %v862
      %v864 = vpop.f32.mrb[0].mxu0
      %v865 = vadd.f32 0.0, %v864
      %v866 = vpop.f32.mrb[0].mxu0
      %v867 = vadd.f32 0.0, %v866
      %868 = vmatprep.mubr.bf16.mxu0 %v808
      %869 = vmatmul.mubr.bf16.gmra.mrb[0].mxu0 %v665
      %v870 = vpop.f32.mrb[0].mxu0
      %v871 = vadd.f32 0.0, %v870
      %v872 = vpop.f32.mrb[0].mxu0
      %v873 = vadd.f32 0.0, %v872
      %v874 = vpop.f32.mrb[0].mxu0
      %v875 = vadd.f32 0.0, %v874
      %v876 = vpop.f32.mrb[0].mxu0
      %v877 = vadd.f32 0.0, %v876
      %878 = vmatprep.mubr.bf16.mxu0 %v811
      %879 = vmatmul.mubr.bf16.gmra.mrb[0].mxu0 %v669
      %v880 = vpop.f32.mrb[0].mxu0
      %v881 = vadd.f32 0.0, %v880
      %v882 = vpop.f32.mrb[0].mxu0
      %v883 = vadd.f32 0.0, %v882
      %v884 = vpop.f32.mrb[0].mxu0
      %v885 = vadd.f32 0.0, %v884
      %v886 = vpop.f32.mrb[0].mxu0
      %v887 = vadd.f32 0.0, %v886
      %888 = vmatprep.mubr.bf16.mxu0 %v814
      %889 = vmatmul.mubr.bf16.gmra.mrb[0].mxu0 %v673
      %v890 = vpop.f32.mrb[0].mxu0
      %v891 = vadd.f32 0.0, %v890
      %v892 = vpop.f32.mrb[0].mxu0
      %v893 = vadd.f32 0.0, %v892
      %v894 = vpop.f32.mrb[0].mxu0
      %v895 = vadd.f32 0.0, %v894
      %v896 = vpop.f32.mrb[0].mxu0
      %v897 = vadd.f32 0.0, %v896
      %898 = vdwg.mxu0
      %v923 = vunpack.c.l.b16 %v493
      %v924 = vunpack.c.h.b16 %v493
      %v925 = vunpack.c.l.b16 %v494
      %v926 = vunpack.c.h.b16 %v494
      %v927 = vunpack.c.l.b16 %v495
      %v928 = vunpack.c.h.b16 %v495
      %v929 = vunpack.c.l.b16 %v496
      %v930 = vunpack.c.h.b16 %v496
      %v931 = vunpack.c.l.b16 %v497
      %v932 = vunpack.c.h.b16 %v497
      %v933 = vunpack.c.l.b16 %v498
      %v934 = vunpack.c.h.b16 %v498
      %v935 = vunpack.c.l.b16 %v499
      %v936 = vunpack.c.h.b16 %v499
      %v937 = vunpack.c.l.b16 %v500
      %v938 = vunpack.c.h.b16 %v500
      %v939 = vunpack.c.l.b16 %v501
      %v940 = vunpack.c.h.b16 %v501
      %v941 = vunpack.c.l.b16 %v502
      %v942 = vunpack.c.h.b16 %v502
      %v943 = vunpack.c.l.b16 %v503
      %v944 = vunpack.c.h.b16 %v503
      %v945 = vunpack.c.l.b16 %v504
      %v946 = vunpack.c.h.b16 %v504
      %v947 = vunpack.c.l.b16 %v505
      %v948 = vunpack.c.h.b16 %v505
      %v949 = vunpack.c.l.b16 %v506
      %v950 = vunpack.c.h.b16 %v506
      %v951 = vunpack.c.l.b16 %v507
      %v952 = vunpack.c.h.b16 %v507
      %v953 = vunpack.c.l.b16 %v508
      %v954 = vunpack.c.h.b16 %v508
      %v955 = vunpack.c.l.b16 %v509
      %v956 = vunpack.c.h.b16 %v509
      %v957 = vunpack.c.l.b16 %v510
      %v958 = vunpack.c.h.b16 %v510
      %v959 = vunpack.c.l.b16 %v511
      %v960 = vunpack.c.h.b16 %v511
      %v961 = vunpack.c.l.b16 %v512
      %v962 = vunpack.c.h.b16 %v512
      %v963 = vunpack.c.l.b16 %v513
      %v964 = vunpack.c.h.b16 %v513
      %v965 = vunpack.c.l.b16 %v514
      %v966 = vunpack.c.h.b16 %v514
      %v967 = vunpack.c.l.b16 %v515
      %v968 = vunpack.c.h.b16 %v515
      %v969 = vunpack.c.l.b16 %v516
      %v970 = vunpack.c.h.b16 %v516
      %v971 = vpack.c.b16 %v925, %v923
      %v972 = vpack.c.b16 %v926, %v924
      %v973 = vpack.c.b16 %v929, %v927
      %v974 = vpack.c.b16 %v930, %v928
      %v975 = vpack.c.b16 %v933, %v931
      %v976 = vpack.c.b16 %v934, %v932
      %v977 = vpack.c.b16 %v937, %v935
      %v978 = vpack.c.b16 %v938, %v936
      %v979 = vpack.c.b16 %v941, %v939
      %v980 = vpack.c.b16 %v942, %v940
      %v981 = vpack.c.b16 %v945, %v943
      %v982 = vpack.c.b16 %v946, %v944
      %v983 = vpack.c.b16 %v949, %v947
      %v984 = vpack.c.b16 %v950, %v948
      %v985 = vpack.c.b16 %v953, %v951
      %v986 = vpack.c.b16 %v954, %v952
      %v987 = vpack.c.b16 %v957, %v955
      %v988 = vpack.c.b16 %v958, %v956
      %v989 = vpack.c.b16 %v961, %v959
      %v990 = vpack.c.b16 %v962, %v960
      %v991 = vpack.c.b16 %v965, %v963
      %v992 = vpack.c.b16 %v966, %v964
      %v993 = vpack.c.b16 %v969, %v967
      %v994 = vpack.c.b16 %v970, %v968
      %v1020 = vsel %vm477, %v468, 0
      %v1023 = vsel %vm477, %v470, 0
      %v1026 = vsel %vm477, %v472, 0
      %v1029 = vsel %vm477, %v474, 0
      %v1032 = vsel %vm477, %v476, 0
      %1034 = vmatprep.subr.bf16.mxu0 %v972
      %1035 = vmatpush1.bf16.msra.mxu0 %v971
      %1036 = vmatprep.subr.bf16.mxu0 %v974
      %1037 = vmatpush1.bf16.msra.mxu0 %v973
      %1038 = vmatprep.subr.bf16.mxu0 %v976
      %1039 = vmatpush1.bf16.msra.mxu0 %v975
      %1040 = vmatprep.subr.bf16.mxu0 %v978
      %1041 = vmatpush1.bf16.msra.mxu0 %v977
      %1042 = vmatprep.subr.bf16.mxu0 %v980
      %1043 = vmatpush1.bf16.msra.mxu0 %v979
      %1044 = vmatprep.subr.bf16.mxu0 %v982
      %1045 = vmatpush1.bf16.msra.mxu0 %v981
      %1046 = vmatprep.subr.bf16.mxu0 %v984
      %1047 = vmatpush1.bf16.msra.mxu0 %v983
      %1048 = vmatprep.subr.bf16.mxu0 %v986
      %1049 = vmatpush1.bf16.msra.mxu0 %v985
      %1050 = vmatprep.subr.bf16.mxu0 %v988
      %1051 = vmatpush1.bf16.msra.mxu0 %v987
      %1052 = vmatprep.subr.bf16.mxu0 %v990
      %1053 = vmatpush1.bf16.msra.mxu0 %v989
      %1054 = vmatprep.subr.bf16.mxu0 %v992
      %1055 = vmatpush1.bf16.msra.mxu0 %v991
      %1056 = vmatprep.subr.bf16.mxu0 %v994
      %1057 = vmatpush1.bf16.msra.mxu0 %v993
      %1058 = vmatprep.subr.bf16.mxu0 0
      %1059 = vmatpush1.bf16.msra.mxu0 0
      %1060 = vmatprep.subr.bf16.mxu0 0
      %1061 = vmatpush1.bf16.msra.mxu0 0
      %1062 = vmatprep.subr.bf16.mxu0 0
      %1063 = vmatpush1.bf16.msra.mxu0 0
      %1064 = vmatprep.subr.bf16.mxu0 0
      %1065 = vmatpush1.bf16.msra.mxu0 0
      %1066 = vmatprep.mubr.bf16.mxu0 %v1020
      %1067 = vmatmul.mubr.bf16.gmra.mrb[0].mxu0 %v479
      %v1068 = vpop.f32.mrb[0].mxu0
      %v1069 = vadd.f32 %v851, %v1068
      %v1070 = vpop.f32.mrb[0].mxu0
      %v1071 = vadd.f32 %v853, %v1070
      %v1072 = vpop.f32.mrb[0].mxu0
      %v1073 = vadd.f32 %v855, %v1072
      %v1074 = vpop.f32.mrb[0].mxu0
      %v1075 = vadd.f32 %v857, %v1074
      %1076 = vmatprep.mubr.bf16.mxu0 %v1023
      %1077 = vmatmul.mubr.bf16.gmra.mrb[0].mxu0 %v482
      %v1078 = vpop.f32.mrb[0].mxu0
      %v1079 = vadd.f32 %v861, %v1078
      %v1080 = vpop.f32.mrb[0].mxu0
      %v1081 = vadd.f32 %v863, %v1080
      %v1082 = vpop.f32.mrb[0].mxu0
      %v1083 = vadd.f32 %v865, %v1082
      %v1084 = vpop.f32.mrb[0].mxu0
      %v1085 = vadd.f32 %v867, %v1084
      %1086 = vmatprep.mubr.bf16.mxu0 %v1026
      %1087 = vmatmul.mubr.bf16.gmra.mrb[0].mxu0 %v485
      %v1088 = vpop.f32.mrb[0].mxu0
      %v1089 = vadd.f32 %v871, %v1088
      %v1090 = vpop.f32.mrb[0].mxu0
      %v1091 = vadd.f32 %v873, %v1090
      %v1092 = vpop.f32.mrb[0].mxu0
      %v1093 = vadd.f32 %v875, %v1092
      %v1094 = vpop.f32.mrb[0].mxu0
      %v1095 = vadd.f32 %v877, %v1094
      %1096 = vmatprep.mubr.bf16.mxu0 %v1029
      %1097 = vmatmul.mubr.bf16.gmra.mrb[0].mxu0 %v488
      %v1098 = vpop.f32.mrb[0].mxu0
      %v1099 = vadd.f32 %v881, %v1098
      %v1100 = vpop.f32.mrb[0].mxu0
      %v1101 = vadd.f32 %v883, %v1100
      %v1102 = vpop.f32.mrb[0].mxu0
      %v1103 = vadd.f32 %v885, %v1102
      %v1104 = vpop.f32.mrb[0].mxu0
      %v1105 = vadd.f32 %v887, %v1104
      %1106 = vmatprep.mubr.bf16.mxu0 %v1032
      %1107 = vmatmul.mubr.bf16.gmra.mrb[0].mxu0 %v491
      %v1108 = vpop.f32.mrb[0].mxu0
      %v1109 = vadd.f32 %v891, %v1108
      %v1110 = vpop.f32.mrb[0].mxu0
      %v1111 = vadd.f32 %v893, %v1110
      %v1112 = vpop.f32.mrb[0].mxu0
      %v1113 = vadd.f32 %v895, %v1112
      %v1114 = vpop.f32.mrb[0].mxu0
      %v1115 = vadd.f32 %v897, %v1114
      %1116 = vdwg.mxu0
      %v1117 = vld [vmem:[%s325 + $0x8] sm:$0xc]
      %v1118 = vld [vmem:[%s325 + $0xc] sm:$0xf]
      %v1119 = vld [vmem:[%s325 + $0x10] sm:$0xf]
      %v1120 = vld [vmem:[%s325 + $0x14] sm:$0xf]
      %v1121 = vld [vmem:[%s325 + $0x18] sm:$0xf]
      %v1122 = vld [vmem:[%s325 + $0x1c] sm:$0xf]
      %v1123 = vld [vmem:[%s325 + $0x20] sm:$0xf]
      %v1124 = vld [vmem:[%s325 + $0x24] sm:$0xf]
      %v1125 = vld [vmem:[%s325 + $0x28] sm:$0xf]
      %v1126 = vld [vmem:[%s325 + $0x2c] sm:$0xf]
      %v1127 = vld [vmem:[%s325 + $0x30] sm:$0x3]
      %v1128 = vld [vmem:[%s325 + $0x30] sm:$0x7]
      %v1129 = vld [vmem:[%s325 + $0x8] sm:$0x8]
      %v1141 = vunpack.c.l.b16 %v1117
      %v1142 = vunpack.c.l.b16 %v1118
      %v1143 = vunpack.c.l.b16 %v1119
      %v1144 = vunpack.c.l.b16 %v1120
      %v1145 = vunpack.c.l.b16 %v1121
      %v1146 = vunpack.c.l.b16 %v1122
      %v1147 = vunpack.c.l.b16 %v1123
      %v1148 = vunpack.c.l.b16 %v1124
      %v1149 = vunpack.c.l.b16 %v1125
      %v1150 = vunpack.c.l.b16 %v1126
      %v1151 = vunpack.c.l.b16 %v1127
      %v1152 = vpack.c.b16 %v1142, %v1141
      %v1153 = vpack.c.b16 %v1144, %v1143
      %v1154 = vpack.c.b16 %v1146, %v1145
      %v1155 = vpack.c.b16 %v1148, %v1147
      %v1156 = vpack.c.b16 %v1150, %v1149
      %v1157 = vpack.c.b16 %v1151, %v1151
      %v1159 = vunpack.c.l.b16 %v1128
      %v1160 = vpack.c.b16 %v1159, %v1159
      %v1162 = vshrl.u32 %v1152, 16
      %v1164 = vshll.u32 %v1152, 16
      %v1166 = vrot.slane %v1164, 1
      %v1167 = vor.u32 %v1162, %v1166
      %v1169 = vshll.u32 %v1153, 16
      %v1171 = vrot.slane %v1169, 1
      %v1172 = vsel %vm407, %v1167, %v1171
      %v1173 = vshrl.u32 %v1153, 16
      %v1175 = vor.u32 %v1173, %v1171
      %v1177 = vshll.u32 %v1154, 16
      %v1179 = vrot.slane %v1177, 1
      %v1180 = vsel %vm407, %v1175, %v1179
      %v1181 = vshrl.u32 %v1154, 16
      %v1183 = vor.u32 %v1181, %v1179
      %v1185 = vshll.u32 %v1155, 16
      %v1187 = vrot.slane %v1185, 1
      %v1188 = vsel %vm407, %v1183, %v1187
      %v1189 = vshrl.u32 %v1155, 16
      %v1191 = vor.u32 %v1189, %v1187
      %v1193 = vshll.u32 %v1156, 16
      %v1195 = vrot.slane %v1193, 1
      %v1196 = vsel %vm407, %v1191, %v1195
      %v1197 = vshrl.u32 %v1156, 16
      %v1199 = vor.u32 %v1197, %v1195
      %v1201 = vshll.u32 %v1160, 16
      %v1203 = vrot.slane %v1201, 1
      %v1204 = vsel %vm407, %v1199, %v1203
      %v1205 = vshrl.u32 %v1160, 16
      %v1207 = vor.u32 %v1205, %v1203
      %1208 = vrot.lane.b32.xlu0 %v1172, 64
      %v1209 = vpop.permute.xlu0 %1208
      %1210 = vrot.lane.b32.xlu0 %v1180, 64
      %v1211 = vpop.permute.xlu0 %1210
      %1212 = vrot.lane.b32.xlu0 %v1188, 64
      %v1213 = vpop.permute.xlu0 %1212
      %1214 = vrot.lane.b32.xlu0 %v1196, 64
      %v1215 = vpop.permute.xlu0 %1214
      %1216 = vrot.lane.b32.xlu0 %v1204, 64
      %v1217 = vpop.permute.xlu0 %1216
      %1218 = vrot.lane.b32.xlu0 %v1207, 64
      %v1219 = vpop.permute.xlu0 %1218
      %v1221 = vunpack.c.l.b16 %v1129
      %v1222 = vpack.c.b16 %v1142, %v1221
      %v1223 = vrot.slane %v1222, 1
      %v1224 = vrot.slane %v1153, 1
      %v1225 = vsel %vm465, %v1223, %v1224
      %v1226 = vrot.slane %v1154, 1
      %v1227 = vsel %vm465, %v1224, %v1226
      %v1228 = vrot.slane %v1155, 1
      %v1229 = vsel %vm465, %v1226, %v1228
      %v1230 = vrot.slane %v1156, 1
      %v1231 = vsel %vm465, %v1228, %v1230
      %v1232 = vrot.slane %v1160, 1
      %v1233 = vsel %vm465, %v1230, %v1232
      %v1235 = vsel %vm477, %v1152, %v1209
      %v1237 = vsel %vm477, %v1153, %v1211
      %v1239 = vsel %vm477, %v1154, %v1213
      %v1241 = vsel %vm477, %v1155, %v1215
      %v1243 = vsel %vm477, %v1156, %v1217
      %v1246 = vsel %vm477, %v1157, %v1219
      %s1247 = scalar_lea.vmem %s3, 384
      %v1248 = vld [vmem:[%s1247] sm:$0xff]
      %v1249 = vld [vmem:[%s1247 + $0x8] sm:$0xff]
      %v1250 = vld [vmem:[%s1247 + $0x10] sm:$0xff]
      %v1251 = vld [vmem:[%s1247 + $0x18] sm:$0xff]
      %v1252 = vld [vmem:[%s1247 + $0x20] sm:$0xff]
      %v1253 = vld [vmem:[%s1247 + $0x28] sm:$0xff]
      %v1254 = vld [vmem:[%s1247 + $0x30] sm:$0xff]
      %v1255 = vld [vmem:[%s1247 + $0x38] sm:$0xff]
      %v1256 = vld [vmem:[%s1247 + $0x40] sm:$0xff]
      %v1257 = vld [vmem:[%s1247 + $0x48] sm:$0xff]
      %v1258 = vld [vmem:[%s1247 + $0x50] sm:$0xff]
      %v1259 = vld [vmem:[%s1247 + $0x58] sm:$0xff]
      %v1260 = vld [vmem:[%s1247 + $0x60] sm:$0xff]
      %v1261 = vld [vmem:[%s1247 + $0x68] sm:$0xff]
      %v1262 = vld [vmem:[%s1247 + $0x70] sm:$0xff]
      %v1263 = vld [vmem:[%s1247 + $0x78] sm:$0xff]
      %v1264 = vld [vmem:[%s1247 + $0x80] sm:$0xff]
      %v1265 = vld [vmem:[%s1247 + $0x88] sm:$0xff]
      %v1266 = vld [vmem:[%s1247 + $0x90] sm:$0xff]
      %v1267 = vld [vmem:[%s1247 + $0x98] sm:$0xff]
      %v1268 = vld [vmem:[%s1247 + $0xa0] sm:$0xff]
      %v1269 = vld [vmem:[%s1247 + $0xa8] sm:$0xff]
      %v1270 = vld [vmem:[%s1247 + $0xb0] sm:$0xff]
      %v1271 = vld [vmem:[%s1247 + $0xb8] sm:$0xff]
      %vm1278 = vcmask 1045504
      %v1279 = vrot.slane %v1235, 2
      %v1280 = vrot.slane %v1237, 2
      %v1281 = vsel %vm1278, %v1279, %v1280
      %v1282 = vrot.slane %v1225, 2
      %v1283 = vrot.slane %v1227, 2
      %v1284 = vsel %vm1278, %v1282, %v1283
      %v1285 = vrot.slane %v1239, 2
      %v1286 = vsel %vm1278, %v1280, %v1285
      %v1287 = vrot.slane %v1229, 2
      %v1288 = vsel %vm1278, %v1283, %v1287
      %v1289 = vrot.slane %v1241, 2
      %v1290 = vsel %vm1278, %v1285, %v1289
      %v1291 = vrot.slane %v1231, 2
      %v1292 = vsel %vm1278, %v1287, %v1291
      %v1293 = vrot.slane %v1243, 2
      %v1294 = vsel %vm1278, %v1289, %v1293
      %v1295 = vrot.slane %v1233, 2
      %v1296 = vsel %vm1278, %v1291, %v1295
      %v1297 = vrot.slane %v1246, 2
      %v1298 = vsel %vm1278, %v1293, %v1297
      %v1299 = vrot.slane %v1232, 2
      %v1300 = vsel %vm1278, %v1295, %v1299
      %v1330 = vunpack.c.l.b16 %v1248
      %v1331 = vunpack.c.h.b16 %v1248
      %v1332 = vunpack.c.l.b16 %v1249
      %v1333 = vunpack.c.h.b16 %v1249
      %v1334 = vunpack.c.l.b16 %v1250
      %v1335 = vunpack.c.h.b16 %v1250
      %v1336 = vunpack.c.l.b16 %v1251
      %v1337 = vunpack.c.h.b16 %v1251
      %v1338 = vunpack.c.l.b16 %v1252
      %v1339 = vunpack.c.h.b16 %v1252
      %v1340 = vunpack.c.l.b16 %v1253
      %v1341 = vunpack.c.h.b16 %v1253
      %v1342 = vunpack.c.l.b16 %v1254
      %v1343 = vunpack.c.h.b16 %v1254
      %v1344 = vunpack.c.l.b16 %v1255
      %v1345 = vunpack.c.h.b16 %v1255
      %v1346 = vunpack.c.l.b16 %v1256
      %v1347 = vunpack.c.h.b16 %v1256
      %v1348 = vunpack.c.l.b16 %v1257
      %v1349 = vunpack.c.h.b16 %v1257
      %v1350 = vunpack.c.l.b16 %v1258
      %v1351 = vunpack.c.h.b16 %v1258
      %v1352 = vunpack.c.l.b16 %v1259
      %v1353 = vunpack.c.h.b16 %v1259
      %v1354 = vunpack.c.l.b16 %v1260
      %v1355 = vunpack.c.h.b16 %v1260
      %v1356 = vunpack.c.l.b16 %v1261
      %v1357 = vunpack.c.h.b16 %v1261
      %v1358 = vunpack.c.l.b16 %v1262
      %v1359 = vunpack.c.h.b16 %v1262
      %v1360 = vunpack.c.l.b16 %v1263
      %v1361 = vunpack.c.h.b16 %v1263
      %v1362 = vunpack.c.l.b16 %v1264
      %v1363 = vunpack.c.h.b16 %v1264
      %v1364 = vunpack.c.l.b16 %v1265
      %v1365 = vunpack.c.h.b16 %v1265
      %v1366 = vunpack.c.l.b16 %v1266
      %v1367 = vunpack.c.h.b16 %v1266
      %v1368 = vunpack.c.l.b16 %v1267
      %v1369 = vunpack.c.h.b16 %v1267
      %v1370 = vunpack.c.l.b16 %v1268
      %v1371 = vunpack.c.h.b16 %v1268
      %v1372 = vunpack.c.l.b16 %v1269
      %v1373 = vunpack.c.h.b16 %v1269
      %v1374 = vunpack.c.l.b16 %v1270
      %v1375 = vunpack.c.h.b16 %v1270
      %v1376 = vunpack.c.l.b16 %v1271
      %v1377 = vunpack.c.h.b16 %v1271
      %v1378 = vpack.c.b16 %v1332, %v1330
      %v1379 = vpack.c.b16 %v1333, %v1331
      %v1380 = vpack.c.b16 %v1336, %v1334
      %v1381 = vpack.c.b16 %v1337, %v1335
      %v1382 = vpack.c.b16 %v1340, %v1338
      %v1383 = vpack.c.b16 %v1341, %v1339
      %v1384 = vpack.c.b16 %v1344, %v1342
      %v1385 = vpack.c.b16 %v1345, %v1343
      %v1386 = vpack.c.b16 %v1348, %v1346
      %v1387 = vpack.c.b16 %v1349, %v1347
      %v1388 = vpack.c.b16 %v1352, %v1350
      %v1389 = vpack.c.b16 %v1353, %v1351
      %v1390 = vpack.c.b16 %v1356, %v1354
      %v1391 = vpack.c.b16 %v1357, %v1355
      %v1392 = vpack.c.b16 %v1360, %v1358
      %v1393 = vpack.c.b16 %v1361, %v1359
      %v1394 = vpack.c.b16 %v1364, %v1362
      %v1395 = vpack.c.b16 %v1365, %v1363
      %v1396 = vpack.c.b16 %v1368, %v1366
      %v1397 = vpack.c.b16 %v1369, %v1367
      %v1398 = vpack.c.b16 %v1372, %v1370
      %v1399 = vpack.c.b16 %v1373, %v1371
      %v1400 = vpack.c.b16 %v1376, %v1374
      %v1401 = vpack.c.b16 %v1377, %v1375
      %v1427 = vsel %vm477, %v1284, 0
      %v1430 = vsel %vm477, %v1288, 0
      %v1433 = vsel %vm477, %v1292, 0
      %v1436 = vsel %vm477, %v1296, 0
      %v1439 = vsel %vm477, %v1300, 0
      %1441 = vmatprep.subr.bf16.mxu0 %v1379
      %1442 = vmatpush1.bf16.msra.mxu0 %v1378
      %1443 = vmatprep.subr.bf16.mxu0 %v1381
      %1444 = vmatpush1.bf16.msra.mxu0 %v1380
      %1445 = vmatprep.subr.bf16.mxu0 %v1383
      %1446 = vmatpush1.bf16.msra.mxu0 %v1382
      %1447 = vmatprep.subr.bf16.mxu0 %v1385
      %1448 = vmatpush1.bf16.msra.mxu0 %v1384
      %1449 = vmatprep.subr.bf16.mxu0 %v1387
      %1450 = vmatpush1.bf16.msra.mxu0 %v1386
      %1451 = vmatprep.subr.bf16.mxu0 %v1389
      %1452 = vmatpush1.bf16.msra.mxu0 %v1388
      %1453 = vmatprep.subr.bf16.mxu0 %v1391
      %1454 = vmatpush1.bf16.msra.mxu0 %v1390
      %1455 = vmatprep.subr.bf16.mxu0 %v1393
      %1456 = vmatpush1.bf16.msra.mxu0 %v1392
      %1457 = vmatprep.subr.bf16.mxu0 %v1395
      %1458 = vmatpush1.bf16.msra.mxu0 %v1394
      %1459 = vmatprep.subr.bf16.mxu0 %v1397
      %1460 = vmatpush1.bf16.msra.mxu0 %v1396
      %1461 = vmatprep.subr.bf16.mxu0 %v1399
      %1462 = vmatpush1.bf16.msra.mxu0 %v1398
      %1463 = vmatprep.subr.bf16.mxu0 %v1401
      %1464 = vmatpush1.bf16.msra.mxu0 %v1400
      %1465 = vmatprep.subr.bf16.mxu0 0
      %1466 = vmatpush1.bf16.msra.mxu0 0
      %1467 = vmatprep.subr.bf16.mxu0 0
      %1468 = vmatpush1.bf16.msra.mxu0 0
      %1469 = vmatprep.subr.bf16.mxu0 0
      %1470 = vmatpush1.bf16.msra.mxu0 0
      %1471 = vmatprep.subr.bf16.mxu0 0
      %1472 = vmatpush1.bf16.msra.mxu0 0
      %1473 = vmatprep.mubr.bf16.mxu0 %v1427
      %1474 = vmatmul.mubr.bf16.gmra.mrb[0].mxu0 %v1281
      %v1475 = vpop.f32.mrb[0].mxu0
      %v1476 = vadd.f32 0.0, %v1475
      %v1477 = vpop.f32.mrb[0].mxu0
      %v1478 = vadd.f32 0.0, %v1477
      %v1479 = vpop.f32.mrb[0].mxu0
      %v1480 = vadd.f32 0.0, %v1479
      %v1481 = vpop.f32.mrb[0].mxu0
      %v1482 = vadd.f32 0.0, %v1481
      %1483 = vmatprep.mubr.bf16.mxu0 %v1430
      %1484 = vmatmul.mubr.bf16.gmra.mrb[0].mxu0 %v1286
      %v1485 = vpop.f32.mrb[0].mxu0
      %v1486 = vadd.f32 0.0, %v1485
      %v1487 = vpop.f32.mrb[0].mxu0
      %v1488 = vadd.f32 0.0, %v1487
      %v1489 = vpop.f32.mrb[0].mxu0
      %v1490 = vadd.f32 0.0, %v1489
      %v1491 = vpop.f32.mrb[0].mxu0
      %v1492 = vadd.f32 0.0, %v1491
      %1493 = vmatprep.mubr.bf16.mxu0 %v1433
      %1494 = vmatmul.mubr.bf16.gmra.mrb[0].mxu0 %v1290
      %v1495 = vpop.f32.mrb[0].mxu0
      %v1496 = vadd.f32 0.0, %v1495
      %v1497 = vpop.f32.mrb[0].mxu0
      %v1498 = vadd.f32 0.0, %v1497
      %v1499 = vpop.f32.mrb[0].mxu0
      %v1500 = vadd.f32 0.0, %v1499
      %v1501 = vpop.f32.mrb[0].mxu0
      %v1502 = vadd.f32 0.0, %v1501
      %1503 = vmatprep.mubr.bf16.mxu0 %v1436
      %1504 = vmatmul.mubr.bf16.gmra.mrb[0].mxu0 %v1294
      %v1505 = vpop.f32.mrb[0].mxu0
      %v1506 = vadd.f32 0.0, %v1505
      %v1507 = vpop.f32.mrb[0].mxu0
      %v1508 = vadd.f32 0.0, %v1507
      %v1509 = vpop.f32.mrb[0].mxu0
      %v1510 = vadd.f32 0.0, %v1509
      %v1511 = vpop.f32.mrb[0].mxu0
      %v1512 = vadd.f32 0.0, %v1511
      %1513 = vmatprep.mubr.bf16.mxu0 %v1439
      %1514 = vmatmul.mubr.bf16.gmra.mrb[0].mxu0 %v1298
      %v1515 = vpop.f32.mrb[0].mxu0
      %v1516 = vadd.f32 0.0, %v1515
      %v1517 = vpop.f32.mrb[0].mxu0
      %v1518 = vadd.f32 0.0, %v1517
      %v1519 = vpop.f32.mrb[0].mxu0
      %v1520 = vadd.f32 0.0, %v1519
      %v1521 = vpop.f32.mrb[0].mxu0
      %v1522 = vadd.f32 0.0, %v1521
      %1523 = vdwg.mxu0
      %v1524 = vadd.f32 %v1069, %v1476
      %v1525 = vadd.f32 %v1071, %v1478
      %v1526 = vadd.f32 %v1073, %v1480
      %v1527 = vadd.f32 %v1075, %v1482
      %v1528 = vadd.f32 %v1079, %v1486
      %v1529 = vadd.f32 %v1081, %v1488
      %v1530 = vadd.f32 %v1083, %v1490
      %v1531 = vadd.f32 %v1085, %v1492
      %v1532 = vadd.f32 %v1089, %v1496
      %v1533 = vadd.f32 %v1091, %v1498
      %v1534 = vadd.f32 %v1093, %v1500
      %v1535 = vadd.f32 %v1095, %v1502
      %v1536 = vadd.f32 %v1099, %v1506
      %v1537 = vadd.f32 %v1101, %v1508
      %v1538 = vadd.f32 %v1103, %v1510
      %v1539 = vadd.f32 %v1105, %v1512
      %v1540 = vadd.f32 %v1109, %v1516
      %v1541 = vadd.f32 %v1111, %v1518
      %v1542 = vadd.f32 %v1113, %v1520
      %v1543 = vadd.f32 %v1115, %v1522
      %v1544 = vld [vmem:[%s335] sm:$0xf]
      %v1545 = vld [vmem:[%s335 + $0x4] sm:$0xf]
      %v1546 = vld [vmem:[%s335 + $0x8] sm:$0xf]
      %v1547 = vld [vmem:[%s335 + $0xc] sm:$0xf]
      %v1548 = vld [vmem:[%s335 + $0x10] sm:$0xf]
      %v1549 = vld [vmem:[%s335 + $0x14] sm:$0xf]
      %v1550 = vld [vmem:[%s335 + $0x18] sm:$0xf]
      %v1551 = vld [vmem:[%s335 + $0x1c] sm:$0xf]
      %v1552 = vld [vmem:[%s335 + $0x20] sm:$0xf]
      %v1553 = vld [vmem:[%s335 + $0x24] sm:$0xf]
      %v1554 = vld [vmem:[%s335 + $0x28] sm:$0x1]
      %v1555 = vld [vmem:[%s335] sm:$0xe]
      %v1566 = vunpack.c.l.b16 %v1544
      %v1567 = vunpack.c.l.b16 %v1545
      %v1568 = vunpack.c.l.b16 %v1546
      %v1569 = vunpack.c.l.b16 %v1547
      %v1570 = vunpack.c.l.b16 %v1548
      %v1571 = vunpack.c.l.b16 %v1549
      %v1572 = vunpack.c.l.b16 %v1550
      %v1573 = vunpack.c.l.b16 %v1551
      %v1574 = vunpack.c.l.b16 %v1552
      %v1575 = vunpack.c.l.b16 %v1553
      %v1576 = vpack.c.b16 %v1567, %v1566
      %v1577 = vpack.c.b16 %v1569, %v1568
      %v1578 = vpack.c.b16 %v1571, %v1570
      %v1579 = vpack.c.b16 %v1573, %v1572
      %v1580 = vpack.c.b16 %v1575, %v1574
      %v1582 = vunpack.c.l.b16 %v1554
      %v1583 = vpack.c.b16 %v1582, %v1582
      %v1585 = vshrl.u32 %v1576, 16
      %v1587 = vshll.u32 %v1576, 16
      %v1589 = vrot.slane %v1587, 1
      %v1590 = vor.u32 %v1585, %v1589
      %v1592 = vshll.u32 %v1577, 16
      %v1594 = vrot.slane %v1592, 1
      %v1595 = vsel %vm407, %v1590, %v1594
      %v1596 = vshrl.u32 %v1577, 16
      %v1598 = vor.u32 %v1596, %v1594
      %v1600 = vshll.u32 %v1578, 16
      %v1602 = vrot.slane %v1600, 1
      %v1603 = vsel %vm407, %v1598, %v1602
      %v1604 = vshrl.u32 %v1578, 16
      %v1606 = vor.u32 %v1604, %v1602
      %v1608 = vshll.u32 %v1579, 16
      %v1610 = vrot.slane %v1608, 1
      %v1611 = vsel %vm407, %v1606, %v1610
      %v1612 = vshrl.u32 %v1579, 16
      %v1614 = vor.u32 %v1612, %v1610
      %v1616 = vshll.u32 %v1580, 16
      %v1618 = vrot.slane %v1616, 1
      %v1619 = vsel %vm407, %v1614, %v1618
      %v1620 = vshrl.u32 %v1580, 16
      %v1622 = vor.u32 %v1620, %v1618
      %v1624 = vshll.u32 %v1583, 16
      %v1626 = vrot.slane %v1624, 1
      %v1627 = vsel %vm407, %v1622, %v1626
      %1628 = vrot.lane.b32.xlu0 %v1595, 64
      %v1629 = vpop.permute.xlu0 %1628
      %1630 = vrot.lane.b32.xlu0 %v1603, 64
      %v1631 = vpop.permute.xlu0 %1630
      %1632 = vrot.lane.b32.xlu0 %v1611, 64
      %v1633 = vpop.permute.xlu0 %1632
      %1634 = vrot.lane.b32.xlu0 %v1619, 64
      %v1635 = vpop.permute.xlu0 %1634
      %1636 = vrot.lane.b32.xlu0 %v1627, 64
      %v1637 = vpop.permute.xlu0 %1636
      %v1639 = vunpack.c.l.b16 %v1555
      %v1640 = vpack.c.b16 %v1567, %v1639
      %v1641 = vrot.slane %v1640, 1
      %v1642 = vrot.slane %v1577, 1
      %v1643 = vsel %vm465, %v1641, %v1642
      %v1644 = vrot.slane %v1578, 1
      %v1645 = vsel %vm465, %v1642, %v1644
      %v1646 = vrot.slane %v1579, 1
      %v1647 = vsel %vm465, %v1644, %v1646
      %v1648 = vrot.slane %v1580, 1
      %v1649 = vsel %vm465, %v1646, %v1648
      %v1650 = vrot.slane %v1583, 1
      %v1651 = vsel %vm465, %v1648, %v1650
      %v1653 = vsel %vm477, %v1576, %v1629
      %v1656 = vsel %vm477, %v1577, %v1631
      %v1659 = vsel %vm477, %v1578, %v1633
      %v1662 = vsel %vm477, %v1579, %v1635
      %v1665 = vsel %vm477, %v1580, %v1637
      %s1667 = scalar_lea.vmem %s3, 576
      %v1668 = vld [vmem:[%s1667] sm:$0xff]
      %v1669 = vld [vmem:[%s1667 + $0x8] sm:$0xff]
      %v1670 = vld [vmem:[%s1667 + $0x10] sm:$0xff]
      %v1671 = vld [vmem:[%s1667 + $0x18] sm:$0xff]
      %v1672 = vld [vmem:[%s1667 + $0x20] sm:$0xff]
      %v1673 = vld [vmem:[%s1667 + $0x28] sm:$0xff]
      %v1674 = vld [vmem:[%s1667 + $0x30] sm:$0xff]
      %v1675 = vld [vmem:[%s1667 + $0x38] sm:$0xff]
      %v1676 = vld [vmem:[%s1667 + $0x40] sm:$0xff]
      %v1677 = vld [vmem:[%s1667 + $0x48] sm:$0xff]
      %v1678 = vld [vmem:[%s1667 + $0x50] sm:$0xff]
      %v1679 = vld [vmem:[%s1667 + $0x58] sm:$0xff]
      %v1680 = vld [vmem:[%s1667 + $0x60] sm:$0xff]
      %v1681 = vld [vmem:[%s1667 + $0x68] sm:$0xff]
      %v1682 = vld [vmem:[%s1667 + $0x70] sm:$0xff]
      %v1683 = vld [vmem:[%s1667 + $0x78] sm:$0xff]
      %v1684 = vld [vmem:[%s1667 + $0x80] sm:$0xff]
      %v1685 = vld [vmem:[%s1667 + $0x88] sm:$0xff]
      %v1686 = vld [vmem:[%s1667 + $0x90] sm:$0xff]
      %v1687 = vld [vmem:[%s1667 + $0x98] sm:$0xff]
      %v1688 = vld [vmem:[%s1667 + $0xa0] sm:$0xff]
      %v1689 = vld [vmem:[%s1667 + $0xa8] sm:$0xff]
      %v1690 = vld [vmem:[%s1667 + $0xb0] sm:$0xff]
      %v1691 = vld [vmem:[%s1667 + $0xb8] sm:$0xff]
      %v1716 = vunpack.c.l.b16 %v1668
      %v1717 = vunpack.c.h.b16 %v1668
      %v1718 = vunpack.c.l.b16 %v1669
      %v1719 = vunpack.c.h.b16 %v1669
      %v1720 = vunpack.c.l.b16 %v1670
      %v1721 = vunpack.c.h.b16 %v1670
      %v1722 = vunpack.c.l.b16 %v1671
      %v1723 = vunpack.c.h.b16 %v1671
      %v1724 = vunpack.c.l.b16 %v1672
      %v1725 = vunpack.c.h.b16 %v1672
      %v1726 = vunpack.c.l.b16 %v1673
      %v1727 = vunpack.c.h.b16 %v1673
      %v1728 = vunpack.c.l.b16 %v1674
      %v1729 = vunpack.c.h.b16 %v1674
      %v1730 = vunpack.c.l.b16 %v1675
      %v1731 = vunpack.c.h.b16 %v1675
      %v1732 = vunpack.c.l.b16 %v1676
      %v1733 = vunpack.c.h.b16 %v1676
      %v1734 = vunpack.c.l.b16 %v1677
      %v1735 = vunpack.c.h.b16 %v1677
      %v1736 = vunpack.c.l.b16 %v1678
      %v1737 = vunpack.c.h.b16 %v1678
      %v1738 = vunpack.c.l.b16 %v1679
      %v1739 = vunpack.c.h.b16 %v1679
      %v1740 = vunpack.c.l.b16 %v1680
      %v1741 = vunpack.c.h.b16 %v1680
      %v1742 = vunpack.c.l.b16 %v1681
      %v1743 = vunpack.c.h.b16 %v1681
      %v1744 = vunpack.c.l.b16 %v1682
      %v1745 = vunpack.c.h.b16 %v1682
      %v1746 = vunpack.c.l.b16 %v1683
      %v1747 = vunpack.c.h.b16 %v1683
      %v1748 = vunpack.c.l.b16 %v1684
      %v1749 = vunpack.c.h.b16 %v1684
      %v1750 = vunpack.c.l.b16 %v1685
      %v1751 = vunpack.c.h.b16 %v1685
      %v1752 = vunpack.c.l.b16 %v1686
      %v1753 = vunpack.c.h.b16 %v1686
      %v1754 = vunpack.c.l.b16 %v1687
      %v1755 = vunpack.c.h.b16 %v1687
      %v1756 = vunpack.c.l.b16 %v1688
      %v1757 = vunpack.c.h.b16 %v1688
      %v1758 = vunpack.c.l.b16 %v1689
      %v1759 = vunpack.c.h.b16 %v1689
      %v1760 = vunpack.c.l.b16 %v1690
      %v1761 = vunpack.c.h.b16 %v1690
      %v1762 = vunpack.c.l.b16 %v1691
      %v1763 = vunpack.c.h.b16 %v1691
      %v1764 = vpack.c.b16 %v1718, %v1716
      %v1765 = vpack.c.b16 %v1719, %v1717
      %v1766 = vpack.c.b16 %v1722, %v1720
      %v1767 = vpack.c.b16 %v1723, %v1721
      %v1768 = vpack.c.b16 %v1726, %v1724
      %v1769 = vpack.c.b16 %v1727, %v1725
      %v1770 = vpack.c.b16 %v1730, %v1728
      %v1771 = vpack.c.b16 %v1731, %v1729
      %v1772 = vpack.c.b16 %v1734, %v1732
      %v1773 = vpack.c.b16 %v1735, %v1733
      %v1774 = vpack.c.b16 %v1738, %v1736
      %v1775 = vpack.c.b16 %v1739, %v1737
      %v1776 = vpack.c.b16 %v1742, %v1740
      %v1777 = vpack.c.b16 %v1743, %v1741
      %v1778 = vpack.c.b16 %v1746, %v1744
      %v1779 = vpack.c.b16 %v1747, %v1745
      %v1780 = vpack.c.b16 %v1750, %v1748
      %v1781 = vpack.c.b16 %v1751, %v1749
      %v1782 = vpack.c.b16 %v1754, %v1752
      %v1783 = vpack.c.b16 %v1755, %v1753
      %v1784 = vpack.c.b16 %v1758, %v1756
      %v1785 = vpack.c.b16 %v1759, %v1757
      %v1786 = vpack.c.b16 %v1762, %v1760
      %v1787 = vpack.c.b16 %v1763, %v1761
      %v1813 = vsel %vm477, %v1643, 0
      %v1816 = vsel %vm477, %v1645, 0
      %v1819 = vsel %vm477, %v1647, 0
      %v1822 = vsel %vm477, %v1649, 0
      %v1825 = vsel %vm477, %v1651, 0
      %1827 = vmatprep.subr.bf16.mxu0 %v1765
      %1828 = vmatpush1.bf16.msra.mxu0 %v1764
      %1829 = vmatprep.subr.bf16.mxu0 %v1767
      %1830 = vmatpush1.bf16.msra.mxu0 %v1766
      %1831 = vmatprep.subr.bf16.mxu0 %v1769
      %1832 = vmatpush1.bf16.msra.mxu0 %v1768
      %1833 = vmatprep.subr.bf16.mxu0 %v1771
      %1834 = vmatpush1.bf16.msra.mxu0 %v1770
      %1835 = vmatprep.subr.bf16.mxu0 %v1773
      %1836 = vmatpush1.bf16.msra.mxu0 %v1772
      %1837 = vmatprep.subr.bf16.mxu0 %v1775
      %1838 = vmatpush1.bf16.msra.mxu0 %v1774
      %1839 = vmatprep.subr.bf16.mxu0 %v1777
      %1840 = vmatpush1.bf16.msra.mxu0 %v1776
      %1841 = vmatprep.subr.bf16.mxu0 %v1779
      %1842 = vmatpush1.bf16.msra.mxu0 %v1778
      %1843 = vmatprep.subr.bf16.mxu0 %v1781
      %1844 = vmatpush1.bf16.msra.mxu0 %v1780
      %1845 = vmatprep.subr.bf16.mxu0 %v1783
      %1846 = vmatpush1.bf16.msra.mxu0 %v1782
      %1847 = vmatprep.subr.bf16.mxu0 %v1785
      %1848 = vmatpush1.bf16.msra.mxu0 %v1784
      %1849 = vmatprep.subr.bf16.mxu0 %v1787
      %1850 = vmatpush1.bf16.msra.mxu0 %v1786
      %1851 = vmatprep.subr.bf16.mxu0 0
      %1852 = vmatpush1.bf16.msra.mxu0 0
      %1853 = vmatprep.subr.bf16.mxu0 0
      %1854 = vmatpush1.bf16.msra.mxu0 0
      %1855 = vmatprep.subr.bf16.mxu0 0
      %1856 = vmatpush1.bf16.msra.mxu0 0
      %1857 = vmatprep.subr.bf16.mxu0 0
      %1858 = vmatpush1.bf16.msra.mxu0 0
      %1859 = vmatprep.mubr.bf16.mxu0 %v1813
      %1860 = vmatmul.mubr.bf16.gmra.mrb[0].mxu0 %v1653
      %v1861 = vpop.f32.mrb[0].mxu0
      %v1862 = vadd.f32 0.0, %v1861
      %v1863 = vpop.f32.mrb[0].mxu0
      %v1864 = vadd.f32 0.0, %v1863
      %v1865 = vpop.f32.mrb[0].mxu0
      %v1866 = vadd.f32 0.0, %v1865
      %v1867 = vpop.f32.mrb[0].mxu0
      %v1868 = vadd.f32 0.0, %v1867
      %1869 = vmatprep.mubr.bf16.mxu0 %v1816
      %1870 = vmatmul.mubr.bf16.gmra.mrb[0].mxu0 %v1656
      %v1871 = vpop.f32.mrb[0].mxu0
      %v1872 = vadd.f32 0.0, %v1871
      %v1873 = vpop.f32.mrb[0].mxu0
      %v1874 = vadd.f32 0.0, %v1873
      %v1875 = vpop.f32.mrb[0].mxu0
      %v1876 = vadd.f32 0.0, %v1875
      %v1877 = vpop.f32.mrb[0].mxu0
      %v1878 = vadd.f32 0.0, %v1877
      %1879 = vmatprep.mubr.bf16.mxu0 %v1819
      %1880 = vmatmul.mubr.bf16.gmra.mrb[0].mxu0 %v1659
      %v1881 = vpop.f32.mrb[0].mxu0
      %v1882 = vadd.f32 0.0, %v1881
      %v1883 = vpop.f32.mrb[0].mxu0
      %v1884 = vadd.f32 0.0, %v1883
      %v1885 = vpop.f32.mrb[0].mxu0
      %v1886 = vadd.f32 0.0, %v1885
      %v1887 = vpop.f32.mrb[0].mxu0
      %v1888 = vadd.f32 0.0, %v1887
      %1889 = vmatprep.mubr.bf16.mxu0 %v1822
      %1890 = vmatmul.mubr.bf16.gmra.mrb[0].mxu0 %v1662
      %v1891 = vpop.f32.mrb[0].mxu0
      %v1892 = vadd.f32 0.0, %v1891
      %v1893 = vpop.f32.mrb[0].mxu0
      %v1894 = vadd.f32 0.0, %v1893
      %v1895 = vpop.f32.mrb[0].mxu0
      %v1896 = vadd.f32 0.0, %v1895
      %v1897 = vpop.f32.mrb[0].mxu0
      %v1898 = vadd.f32 0.0, %v1897
      %1899 = vmatprep.mubr.bf16.mxu0 %v1825
      %1900 = vmatmul.mubr.bf16.gmra.mrb[0].mxu0 %v1665
      %v1901 = vpop.f32.mrb[0].mxu0
      %v1902 = vadd.f32 0.0, %v1901
      %v1903 = vpop.f32.mrb[0].mxu0
      %v1904 = vadd.f32 0.0, %v1903
      %v1905 = vpop.f32.mrb[0].mxu0
      %v1906 = vadd.f32 0.0, %v1905
      %v1907 = vpop.f32.mrb[0].mxu0
      %v1908 = vadd.f32 0.0, %v1907
      %1909 = vdwg.mxu0
      %v1910 = vadd.f32 %v1524, %v1862
      %v1911 = vadd.f32 %v1525, %v1864
      %v1912 = vadd.f32 %v1526, %v1866
      %v1913 = vadd.f32 %v1527, %v1868
      %v1914 = vadd.f32 %v1528, %v1872
      %v1915 = vadd.f32 %v1529, %v1874
      %v1916 = vadd.f32 %v1530, %v1876
      %v1917 = vadd.f32 %v1531, %v1878
      %v1918 = vadd.f32 %v1532, %v1882
      %v1919 = vadd.f32 %v1533, %v1884
      %v1920 = vadd.f32 %v1534, %v1886
      %v1921 = vadd.f32 %v1535, %v1888
      %v1922 = vadd.f32 %v1536, %v1892
      %v1923 = vadd.f32 %v1537, %v1894
      %v1924 = vadd.f32 %v1538, %v1896
      %v1925 = vadd.f32 %v1539, %v1898
      %v1926 = vadd.f32 %v1540, %v1902
      %v1927 = vadd.f32 %v1541, %v1904
      %v1928 = vadd.f32 %v1542, %v1906
      %v1929 = vadd.f32 %v1543, %v1908
      %v1930 = vld [vmem:[%s335 + $0x4] sm:$0xe]
      %v1931 = vld [vmem:[%s335 + $0x8] sm:$0xf]
      %v1932 = vld [vmem:[%s335 + $0xc] sm:$0xf]
      %v1933 = vld [vmem:[%s335 + $0x10] sm:$0xf]
      %v1934 = vld [vmem:[%s335 + $0x14] sm:$0xf]
      %v1935 = vld [vmem:[%s335 + $0x18] sm:$0xf]
      %v1936 = vld [vmem:[%s335 + $0x1c] sm:$0xf]
      %v1937 = vld [vmem:[%s335 + $0x20] sm:$0xf]
      %v1938 = vld [vmem:[%s335 + $0x24] sm:$0xf]
      %v1939 = vld [vmem:[%s335 + $0x28] sm:$0xf]
      %v1940 = vld [vmem:[%s335 + $0x2c] sm:$0x1]
      %v1941 = vld [vmem:[%s335 + $0x2c] sm:$0x3]
      %v1942 = vld [vmem:[%s335 + $0x4] sm:$0xc]
      %v1954 = vunpack.c.l.b16 %v1930
      %v1955 = vunpack.c.l.b16 %v1931
      %v1956 = vunpack.c.l.b16 %v1932
      %v1957 = vunpack.c.l.b16 %v1933
      %v1958 = vunpack.c.l.b16 %v1934
      %v1959 = vunpack.c.l.b16 %v1935
      %v1960 = vunpack.c.l.b16 %v1936
      %v1961 = vunpack.c.l.b16 %v1937
      %v1962 = vunpack.c.l.b16 %v1938
      %v1963 = vunpack.c.l.b16 %v1939
      %v1964 = vunpack.c.l.b16 %v1940
      %v1965 = vpack.c.b16 %v1955, %v1954
      %v1966 = vpack.c.b16 %v1957, %v1956
      %v1967 = vpack.c.b16 %v1959, %v1958
      %v1968 = vpack.c.b16 %v1961, %v1960
      %v1969 = vpack.c.b16 %v1963, %v1962
      %v1970 = vpack.c.b16 %v1964, %v1964
      %v1972 = vunpack.c.l.b16 %v1941
      %v1973 = vpack.c.b16 %v1972, %v1972
      %v1975 = vshrl.u32 %v1965, 16
      %v1977 = vshll.u32 %v1965, 16
      %v1979 = vrot.slane %v1977, 1
      %v1980 = vor.u32 %v1975, %v1979
      %v1982 = vshll.u32 %v1966, 16
      %v1984 = vrot.slane %v1982, 1
      %v1985 = vsel %vm407, %v1980, %v1984
      %v1986 = vshrl.u32 %v1966, 16
      %v1988 = vor.u32 %v1986, %v1984
      %v1990 = vshll.u32 %v1967, 16
      %v1992 = vrot.slane %v1990, 1
      %v1993 = vsel %vm407, %v1988, %v1992
      %v1994 = vshrl.u32 %v1967, 16
      %v1996 = vor.u32 %v1994, %v1992
      %v1998 = vshll.u32 %v1968, 16
      %v2000 = vrot.slane %v1998, 1
      %v2001 = vsel %vm407, %v1996, %v2000
      %v2002 = vshrl.u32 %v1968, 16
      %v2004 = vor.u32 %v2002, %v2000
      %v2006 = vshll.u32 %v1969, 16
      %v2008 = vrot.slane %v2006, 1
      %v2009 = vsel %vm407, %v2004, %v2008
      %v2010 = vshrl.u32 %v1969, 16
      %v2012 = vor.u32 %v2010, %v2008
      %v2014 = vshll.u32 %v1973, 16
      %v2016 = vrot.slane %v2014, 1
      %v2017 = vsel %vm407, %v2012, %v2016
      %v2018 = vshrl.u32 %v1973, 16
      %v2020 = vor.u32 %v2018, %v2016
      %2021 = vrot.lane.b32.xlu0 %v1985, 64
      %v2022 = vpop.permute.xlu0 %2021
      %2023 = vrot.lane.b32.xlu0 %v1993, 64
      %v2024 = vpop.permute.xlu0 %2023
      %2025 = vrot.lane.b32.xlu0 %v2001, 64
      %v2026 = vpop.permute.xlu0 %2025
      %2027 = vrot.lane.b32.xlu0 %v2009, 64
      %v2028 = vpop.permute.xlu0 %2027
      %2029 = vrot.lane.b32.xlu0 %v2017, 64
      %v2030 = vpop.permute.xlu0 %2029
      %2031 = vrot.lane.b32.xlu0 %v2020, 64
      %v2032 = vpop.permute.xlu0 %2031
      %v2034 = vunpack.c.l.b16 %v1942
      %v2035 = vpack.c.b16 %v1955, %v2034
      %v2036 = vrot.slane %v2035, 1
      %v2037 = vrot.slane %v1966, 1
      %v2038 = vsel %vm465, %v2036, %v2037
      %v2039 = vrot.slane %v1967, 1
      %v2040 = vsel %vm465, %v2037, %v2039
      %v2041 = vrot.slane %v1968, 1
      %v2042 = vsel %vm465, %v2039, %v2041
      %v2043 = vrot.slane %v1969, 1
      %v2044 = vsel %vm465, %v2041, %v2043
      %v2045 = vrot.slane %v1973, 1
      %v2046 = vsel %vm465, %v2043, %v2045
      %v2048 = vsel %vm477, %v1965, %v2022
      %v2050 = vsel %vm477, %v1966, %v2024
      %v2052 = vsel %vm477, %v1967, %v2026
      %v2054 = vsel %vm477, %v1968, %v2028
      %v2056 = vsel %vm477, %v1969, %v2030
      %v2059 = vsel %vm477, %v1970, %v2032
      %s2060 = scalar_lea.vmem %s3, 768
      %v2061 = vld [vmem:[%s2060] sm:$0xff]
      %v2062 = vld [vmem:[%s2060 + $0x8] sm:$0xff]
      %v2063 = vld [vmem:[%s2060 + $0x10] sm:$0xff]
      %v2064 = vld [vmem:[%s2060 + $0x18] sm:$0xff]
      %v2065 = vld [vmem:[%s2060 + $0x20] sm:$0xff]
      %v2066 = vld [vmem:[%s2060 + $0x28] sm:$0xff]
      %v2067 = vld [vmem:[%s2060 + $0x30] sm:$0xff]
      %v2068 = vld [vmem:[%s2060 + $0x38] sm:$0xff]
      %v2069 = vld [vmem:[%s2060 + $0x40] sm:$0xff]
      %v2070 = vld [vmem:[%s2060 + $0x48] sm:$0xff]
      %v2071 = vld [vmem:[%s2060 + $0x50] sm:$0xff]
      %v2072 = vld [vmem:[%s2060 + $0x58] sm:$0xff]
      %v2073 = vld [vmem:[%s2060 + $0x60] sm:$0xff]
      %v2074 = vld [vmem:[%s2060 + $0x68] sm:$0xff]
      %v2075 = vld [vmem:[%s2060 + $0x70] sm:$0xff]
      %v2076 = vld [vmem:[%s2060 + $0x78] sm:$0xff]
      %v2077 = vld [vmem:[%s2060 + $0x80] sm:$0xff]
      %v2078 = vld [vmem:[%s2060 + $0x88] sm:$0xff]
      %v2079 = vld [vmem:[%s2060 + $0x90] sm:$0xff]
      %v2080 = vld [vmem:[%s2060 + $0x98] sm:$0xff]
      %v2081 = vld [vmem:[%s2060 + $0xa0] sm:$0xff]
      %v2082 = vld [vmem:[%s2060 + $0xa8] sm:$0xff]
      %v2083 = vld [vmem:[%s2060 + $0xb0] sm:$0xff]
      %v2084 = vld [vmem:[%s2060 + $0xb8] sm:$0xff]
      %v2091 = vrot.slane %v2048, 1
      %v2092 = vrot.slane %v2050, 1
      %v2093 = vsel %vm465, %v2091, %v2092
      %v2094 = vrot.slane %v2038, 1
      %v2095 = vrot.slane %v2040, 1
      %v2096 = vsel %vm465, %v2094, %v2095
      %v2097 = vrot.slane %v2052, 1
      %v2098 = vsel %vm465, %v2092, %v2097
      %v2099 = vrot.slane %v2042, 1
      %v2100 = vsel %vm465, %v2095, %v2099
      %v2101 = vrot.slane %v2054, 1
      %v2102 = vsel %vm465, %v2097, %v2101
      %v2103 = vrot.slane %v2044, 1
      %v2104 = vsel %vm465, %v2099, %v2103
      %v2105 = vrot.slane %v2056, 1
      %v2106 = vsel %vm465, %v2101, %v2105
      %v2107 = vrot.slane %v2046, 1
      %v2108 = vsel %vm465, %v2103, %v2107
      %v2109 = vrot.slane %v2059, 1
      %v2110 = vsel %vm465, %v2105, %v2109
      %v2111 = vrot.slane %v2045, 1
      %v2112 = vsel %vm465, %v2107, %v2111
      %v2142 = vunpack.c.l.b16 %v2061
      %v2143 = vunpack.c.h.b16 %v2061
      %v2144 = vunpack.c.l.b16 %v2062
      %v2145 = vunpack.c.h.b16 %v2062
      %v2146 = vunpack.c.l.b16 %v2063
      %v2147 = vunpack.c.h.b16 %v2063
      %v2148 = vunpack.c.l.b16 %v2064
      %v2149 = vunpack.c.h.b16 %v2064
      %v2150 = vunpack.c.l.b16 %v2065
      %v2151 = vunpack.c.h.b16 %v2065
      %v2152 = vunpack.c.l.b16 %v2066
      %v2153 = vunpack.c.h.b16 %v2066
      %v2154 = vunpack.c.l.b16 %v2067
      %v2155 = vunpack.c.h.b16 %v2067
      %v2156 = vunpack.c.l.b16 %v2068
      %v2157 = vunpack.c.h.b16 %v2068
      %v2158 = vunpack.c.l.b16 %v2069
      %v2159 = vunpack.c.h.b16 %v2069
      %v2160 = vunpack.c.l.b16 %v2070
      %v2161 = vunpack.c.h.b16 %v2070
      %v2162 = vunpack.c.l.b16 %v2071
      %v2163 = vunpack.c.h.b16 %v2071
      %v2164 = vunpack.c.l.b16 %v2072
      %v2165 = vunpack.c.h.b16 %v2072
      %v2166 = vunpack.c.l.b16 %v2073
      %v2167 = vunpack.c.h.b16 %v2073
      %v2168 = vunpack.c.l.b16 %v2074
      %v2169 = vunpack.c.h.b16 %v2074
      %v2170 = vunpack.c.l.b16 %v2075
      %v2171 = vunpack.c.h.b16 %v2075
      %v2172 = vunpack.c.l.b16 %v2076
      %v2173 = vunpack.c.h.b16 %v2076
      %v2174 = vunpack.c.l.b16 %v2077
      %v2175 = vunpack.c.h.b16 %v2077
      %v2176 = vunpack.c.l.b16 %v2078
      %v2177 = vunpack.c.h.b16 %v2078
      %v2178 = vunpack.c.l.b16 %v2079
      %v2179 = vunpack.c.h.b16 %v2079
      %v2180 = vunpack.c.l.b16 %v2080
      %v2181 = vunpack.c.h.b16 %v2080
      %v2182 = vunpack.c.l.b16 %v2081
      %v2183 = vunpack.c.h.b16 %v2081
      %v2184 = vunpack.c.l.b16 %v2082
      %v2185 = vunpack.c.h.b16 %v2082
      %v2186 = vunpack.c.l.b16 %v2083
      %v2187 = vunpack.c.h.b16 %v2083
      %v2188 = vunpack.c.l.b16 %v2084
      %v2189 = vunpack.c.h.b16 %v2084
      %v2190 = vpack.c.b16 %v2144, %v2142
      %v2191 = vpack.c.b16 %v2145, %v2143
      %v2192 = vpack.c.b16 %v2148, %v2146
      %v2193 = vpack.c.b16 %v2149, %v2147
      %v2194 = vpack.c.b16 %v2152, %v2150
      %v2195 = vpack.c.b16 %v2153, %v2151
      %v2196 = vpack.c.b16 %v2156, %v2154
      %v2197 = vpack.c.b16 %v2157, %v2155
      %v2198 = vpack.c.b16 %v2160, %v2158
      %v2199 = vpack.c.b16 %v2161, %v2159
      %v2200 = vpack.c.b16 %v2164, %v2162
      %v2201 = vpack.c.b16 %v2165, %v2163
      %v2202 = vpack.c.b16 %v2168, %v2166
      %v2203 = vpack.c.b16 %v2169, %v2167
      %v2204 = vpack.c.b16 %v2172, %v2170
      %v2205 = vpack.c.b16 %v2173, %v2171
      %v2206 = vpack.c.b16 %v2176, %v2174
      %v2207 = vpack.c.b16 %v2177, %v2175
      %v2208 = vpack.c.b16 %v2180, %v2178
      %v2209 = vpack.c.b16 %v2181, %v2179
      %v2210 = vpack.c.b16 %v2184, %v2182
      %v2211 = vpack.c.b16 %v2185, %v2183
      %v2212 = vpack.c.b16 %v2188, %v2186
      %v2213 = vpack.c.b16 %v2189, %v2187
      %v2239 = vsel %vm477, %v2096, 0
      %v2242 = vsel %vm477, %v2100, 0
      %v2245 = vsel %vm477, %v2104, 0
      %v2248 = vsel %vm477, %v2108, 0
      %v2251 = vsel %vm477, %v2112, 0
      %2253 = vmatprep.subr.bf16.mxu0 %v2191
      %2254 = vmatpush1.bf16.msra.mxu0 %v2190
      %2255 = vmatprep.subr.bf16.mxu0 %v2193
      %2256 = vmatpush1.bf16.msra.mxu0 %v2192
      %2257 = vmatprep.subr.bf16.mxu0 %v2195
      %2258 = vmatpush1.bf16.msra.mxu0 %v2194
      %2259 = vmatprep.subr.bf16.mxu0 %v2197
      %2260 = vmatpush1.bf16.msra.mxu0 %v2196
      %2261 = vmatprep.subr.bf16.mxu0 %v2199
      %2262 = vmatpush1.bf16.msra.mxu0 %v2198
      %2263 = vmatprep.subr.bf16.mxu0 %v2201
      %2264 = vmatpush1.bf16.msra.mxu0 %v2200
      %2265 = vmatprep.subr.bf16.mxu0 %v2203
      %2266 = vmatpush1.bf16.msra.mxu0 %v2202
      %2267 = vmatprep.subr.bf16.mxu0 %v2205
      %2268 = vmatpush1.bf16.msra.mxu0 %v2204
      %2269 = vmatprep.subr.bf16.mxu0 %v2207
      %2270 = vmatpush1.bf16.msra.mxu0 %v2206
      %2271 = vmatprep.subr.bf16.mxu0 %v2209
      %2272 = vmatpush1.bf16.msra.mxu0 %v2208
      %2273 = vmatprep.subr.bf16.mxu0 %v2211
      %2274 = vmatpush1.bf16.msra.mxu0 %v2210
      %2275 = vmatprep.subr.bf16.mxu0 %v2213
      %2276 = vmatpush1.bf16.msra.mxu0 %v2212
      %2277 = vmatprep.subr.bf16.mxu0 0
      %2278 = vmatpush1.bf16.msra.mxu0 0
      %2279 = vmatprep.subr.bf16.mxu0 0
      %2280 = vmatpush1.bf16.msra.mxu0 0
      %2281 = vmatprep.subr.bf16.mxu0 0
      %2282 = vmatpush1.bf16.msra.mxu0 0
      %2283 = vmatprep.subr.bf16.mxu0 0
      %2284 = vmatpush1.bf16.msra.mxu0 0
      %2285 = vmatprep.mubr.bf16.mxu0 %v2239
      %2286 = vmatmul.mubr.bf16.gmra.mrb[0].mxu0 %v2093
      %v2287 = vpop.f32.mrb[0].mxu0
      %v2288 = vadd.f32 0.0, %v2287
      %v2289 = vpop.f32.mrb[0].mxu0
      %v2290 = vadd.f32 0.0, %v2289
      %v2291 = vpop.f32.mrb[0].mxu0
      %v2292 = vadd.f32 0.0, %v2291
      %v2293 = vpop.f32.mrb[0].mxu0
      %v2294 = vadd.f32 0.0, %v2293
      %2295 = vmatprep.mubr.bf16.mxu0 %v2242
      %2296 = vmatmul.mubr.bf16.gmra.mrb[0].mxu0 %v2098
      %v2297 = vpop.f32.mrb[0].mxu0
      %v2298 = vadd.f32 0.0, %v2297
      %v2299 = vpop.f32.mrb[0].mxu0
      %v2300 = vadd.f32 0.0, %v2299
      %v2301 = vpop.f32.mrb[0].mxu0
      %v2302 = vadd.f32 0.0, %v2301
      %v2303 = vpop.f32.mrb[0].mxu0
      %v2304 = vadd.f32 0.0, %v2303
      %2305 = vmatprep.mubr.bf16.mxu0 %v2245
      %2306 = vmatmul.mubr.bf16.gmra.mrb[0].mxu0 %v2102
      %v2307 = vpop.f32.mrb[0].mxu0
      %v2308 = vadd.f32 0.0, %v2307
      %v2309 = vpop.f32.mrb[0].mxu0
      %v2310 = vadd.f32 0.0, %v2309
      %v2311 = vpop.f32.mrb[0].mxu0
      %v2312 = vadd.f32 0.0, %v2311
      %v2313 = vpop.f32.mrb[0].mxu0
      %v2314 = vadd.f32 0.0, %v2313
      %2315 = vmatprep.mubr.bf16.mxu0 %v2248
      %2316 = vmatmul.mubr.bf16.gmra.mrb[0].mxu0 %v2106
      %v2317 = vpop.f32.mrb[0].mxu0
      %v2318 = vadd.f32 0.0, %v2317
      %v2319 = vpop.f32.mrb[0].mxu0
      %v2320 = vadd.f32 0.0, %v2319
      %v2321 = vpop.f32.mrb[0].mxu0
      %v2322 = vadd.f32 0.0, %v2321
      %v2323 = vpop.f32.mrb[0].mxu0
      %v2324 = vadd.f32 0.0, %v2323
      %2325 = vmatprep.mubr.bf16.mxu0 %v2251
      %2326 = vmatmul.mubr.bf16.gmra.mrb[0].mxu0 %v2110
      %v2327 = vpop.f32.mrb[0].mxu0
      %v2328 = vadd.f32 0.0, %v2327
      %v2329 = vpop.f32.mrb[0].mxu0
      %v2330 = vadd.f32 0.0, %v2329
      %v2331 = vpop.f32.mrb[0].mxu0
      %v2332 = vadd.f32 0.0, %v2331
      %v2333 = vpop.f32.mrb[0].mxu0
      %v2334 = vadd.f32 0.0, %v2333
      %2335 = vdwg.mxu0
      %v2336 = vadd.f32 %v1910, %v2288
      %v2337 = vadd.f32 %v1911, %v2290
      %v2338 = vadd.f32 %v1912, %v2292
      %v2339 = vadd.f32 %v1913, %v2294
      %v2340 = vadd.f32 %v1914, %v2298
      %v2341 = vadd.f32 %v1915, %v2300
      %v2342 = vadd.f32 %v1916, %v2302
      %v2343 = vadd.f32 %v1917, %v2304
      %v2344 = vadd.f32 %v1918, %v2308
      %v2345 = vadd.f32 %v1919, %v2310
      %v2346 = vadd.f32 %v1920, %v2312
      %v2347 = vadd.f32 %v1921, %v2314
      %v2348 = vadd.f32 %v1922, %v2318
      %v2349 = vadd.f32 %v1923, %v2320
      %v2350 = vadd.f32 %v1924, %v2322
      %v2351 = vadd.f32 %v1925, %v2324
      %v2352 = vadd.f32 %v1926, %v2328
      %v2353 = vadd.f32 %v1927, %v2330
      %v2354 = vadd.f32 %v1928, %v2332
      %v2355 = vadd.f32 %v1929, %v2334
      %v2356 = vld [vmem:[%s335 + $0x8] sm:$0xc]
      %v2357 = vld [vmem:[%s335 + $0xc] sm:$0xf]
      %v2358 = vld [vmem:[%s335 + $0x10] sm:$0xf]
      %v2359 = vld [vmem:[%s335 + $0x14] sm:$0xf]
      %v2360 = vld [vmem:[%s335 + $0x18] sm:$0xf]
      %v2361 = vld [vmem:[%s335 + $0x1c] sm:$0xf]
      %v2362 = vld [vmem:[%s335 + $0x20] sm:$0xf]
      %v2363 = vld [vmem:[%s335 + $0x24] sm:$0xf]
      %v2364 = vld [vmem:[%s335 + $0x28] sm:$0xf]
      %v2365 = vld [vmem:[%s335 + $0x2c] sm:$0xf]
      %v2366 = vld [vmem:[%s335 + $0x30] sm:$0x3]
      %v2367 = vld [vmem:[%s335 + $0x30] sm:$0x7]
      %v2368 = vld [vmem:[%s335 + $0x8] sm:$0x8]
      %v2380 = vunpack.c.l.b16 %v2356
      %v2381 = vunpack.c.l.b16 %v2357
      %v2382 = vunpack.c.l.b16 %v2358
      %v2383 = vunpack.c.l.b16 %v2359
      %v2384 = vunpack.c.l.b16 %v2360
      %v2385 = vunpack.c.l.b16 %v2361
      %v2386 = vunpack.c.l.b16 %v2362
      %v2387 = vunpack.c.l.b16 %v2363
      %v2388 = vunpack.c.l.b16 %v2364
      %v2389 = vunpack.c.l.b16 %v2365
      %v2390 = vunpack.c.l.b16 %v2366
      %v2391 = vpack.c.b16 %v2381, %v2380
      %v2392 = vpack.c.b16 %v2383, %v2382
      %v2393 = vpack.c.b16 %v2385, %v2384
      %v2394 = vpack.c.b16 %v2387, %v2386
      %v2395 = vpack.c.b16 %v2389, %v2388
      %v2396 = vpack.c.b16 %v2390, %v2390
      %v2398 = vunpack.c.l.b16 %v2367
      %v2399 = vpack.c.b16 %v2398, %v2398
      %v2401 = vshrl.u32 %v2391, 16
      %v2403 = vshll.u32 %v2391, 16
      %v2405 = vrot.slane %v2403, 1
      %v2406 = vor.u32 %v2401, %v2405
      %v2408 = vshll.u32 %v2392, 16
      %v2410 = vrot.slane %v2408, 1
      %v2411 = vsel %vm407, %v2406, %v2410
      %v2412 = vshrl.u32 %v2392, 16
      %v2414 = vor.u32 %v2412, %v2410
      %v2416 = vshll.u32 %v2393, 16
      %v2418 = vrot.slane %v2416, 1
      %v2419 = vsel %vm407, %v2414, %v2418
      %v2420 = vshrl.u32 %v2393, 16
      %v2422 = vor.u32 %v2420, %v2418
      %v2424 = vshll.u32 %v2394, 16
      %v2426 = vrot.slane %v2424, 1
      %v2427 = vsel %vm407, %v2422, %v2426
      %v2428 = vshrl.u32 %v2394, 16
      %v2430 = vor.u32 %v2428, %v2426
      %v2432 = vshll.u32 %v2395, 16
      %v2434 = vrot.slane %v2432, 1
      %v2435 = vsel %vm407, %v2430, %v2434
      %v2436 = vshrl.u32 %v2395, 16
      %v2438 = vor.u32 %v2436, %v2434
      %v2440 = vshll.u32 %v2399, 16
      %v2442 = vrot.slane %v2440, 1
      %v2443 = vsel %vm407, %v2438, %v2442
      %v2444 = vshrl.u32 %v2399, 16
      %v2446 = vor.u32 %v2444, %v2442
      %2447 = vrot.lane.b32.xlu0 %v2411, 64
      %v2448 = vpop.permute.xlu0 %2447
      %2449 = vrot.lane.b32.xlu0 %v2419, 64
      %v2450 = vpop.permute.xlu0 %2449
      %2451 = vrot.lane.b32.xlu0 %v2427, 64
      %v2452 = vpop.permute.xlu0 %2451
      %2453 = vrot.lane.b32.xlu0 %v2435, 64
      %v2454 = vpop.permute.xlu0 %2453
      %2455 = vrot.lane.b32.xlu0 %v2443, 64
      %v2456 = vpop.permute.xlu0 %2455
      %2457 = vrot.lane.b32.xlu0 %v2446, 64
      %v2458 = vpop.permute.xlu0 %2457
      %v2460 = vunpack.c.l.b16 %v2368
      %v2461 = vpack.c.b16 %v2381, %v2460
      %v2462 = vrot.slane %v2461, 1
      %v2463 = vrot.slane %v2392, 1
      %v2464 = vsel %vm465, %v2462, %v2463
      %v2465 = vrot.slane %v2393, 1
      %v2466 = vsel %vm465, %v2463, %v2465
      %v2467 = vrot.slane %v2394, 1
      %v2468 = vsel %vm465, %v2465, %v2467
      %v2469 = vrot.slane %v2395, 1
      %v2470 = vsel %vm465, %v2467, %v2469
      %v2471 = vrot.slane %v2399, 1
      %v2472 = vsel %vm465, %v2469, %v2471
      %v2474 = vsel %vm477, %v2391, %v2448
      %v2476 = vsel %vm477, %v2392, %v2450
      %v2478 = vsel %vm477, %v2393, %v2452
      %v2480 = vsel %vm477, %v2394, %v2454
      %v2482 = vsel %vm477, %v2395, %v2456
      %v2485 = vsel %vm477, %v2396, %v2458
      %s2486 = scalar_lea.vmem %s3, 960
      %v2487 = vld [vmem:[%s2486] sm:$0xff]
      %v2488 = vld [vmem:[%s2486 + $0x8] sm:$0xff]
      %v2489 = vld [vmem:[%s2486 + $0x10] sm:$0xff]
      %v2490 = vld [vmem:[%s2486 + $0x18] sm:$0xff]
      %v2491 = vld [vmem:[%s2486 + $0x20] sm:$0xff]
      %v2492 = vld [vmem:[%s2486 + $0x28] sm:$0xff]
      %v2493 = vld [vmem:[%s2486 + $0x30] sm:$0xff]
      %v2494 = vld [vmem:[%s2486 + $0x38] sm:$0xff]
      %v2495 = vld [vmem:[%s2486 + $0x40] sm:$0xff]
      %v2496 = vld [vmem:[%s2486 + $0x48] sm:$0xff]
      %v2497 = vld [vmem:[%s2486 + $0x50] sm:$0xff]
      %v2498 = vld [vmem:[%s2486 + $0x58] sm:$0xff]
      %v2499 = vld [vmem:[%s2486 + $0x60] sm:$0xff]
      %v2500 = vld [vmem:[%s2486 + $0x68] sm:$0xff]
      %v2501 = vld [vmem:[%s2486 + $0x70] sm:$0xff]
      %v2502 = vld [vmem:[%s2486 + $0x78] sm:$0xff]
      %v2503 = vld [vmem:[%s2486 + $0x80] sm:$0xff]
      %v2504 = vld [vmem:[%s2486 + $0x88] sm:$0xff]
      %v2505 = vld [vmem:[%s2486 + $0x90] sm:$0xff]
      %v2506 = vld [vmem:[%s2486 + $0x98] sm:$0xff]
      %v2507 = vld [vmem:[%s2486 + $0xa0] sm:$0xff]
      %v2508 = vld [vmem:[%s2486 + $0xa8] sm:$0xff]
      %v2509 = vld [vmem:[%s2486 + $0xb0] sm:$0xff]
      %v2510 = vld [vmem:[%s2486 + $0xb8] sm:$0xff]
      %v2517 = vrot.slane %v2474, 2
      %v2518 = vrot.slane %v2476, 2
      %v2519 = vsel %vm1278, %v2517, %v2518
      %v2520 = vrot.slane %v2464, 2
      %v2521 = vrot.slane %v2466, 2
      %v2522 = vsel %vm1278, %v2520, %v2521
      %v2523 = vrot.slane %v2478, 2
      %v2524 = vsel %vm1278, %v2518, %v2523
      %v2525 = vrot.slane %v2468, 2
      %v2526 = vsel %vm1278, %v2521, %v2525
      %v2527 = vrot.slane %v2480, 2
      %v2528 = vsel %vm1278, %v2523, %v2527
      %v2529 = vrot.slane %v2470, 2
      %v2530 = vsel %vm1278, %v2525, %v2529
      %v2531 = vrot.slane %v2482, 2
      %v2532 = vsel %vm1278, %v2527, %v2531
      %v2533 = vrot.slane %v2472, 2
      %v2534 = vsel %vm1278, %v2529, %v2533
      %v2535 = vrot.slane %v2485, 2
      %v2536 = vsel %vm1278, %v2531, %v2535
      %v2537 = vrot.slane %v2471, 2
      %v2538 = vsel %vm1278, %v2533, %v2537
      %v2568 = vunpack.c.l.b16 %v2487
      %v2569 = vunpack.c.h.b16 %v2487
      %v2570 = vunpack.c.l.b16 %v2488
      %v2571 = vunpack.c.h.b16 %v2488
      %v2572 = vunpack.c.l.b16 %v2489
      %v2573 = vunpack.c.h.b16 %v2489
      %v2574 = vunpack.c.l.b16 %v2490
      %v2575 = vunpack.c.h.b16 %v2490
      %v2576 = vunpack.c.l.b16 %v2491
      %v2577 = vunpack.c.h.b16 %v2491
      %v2578 = vunpack.c.l.b16 %v2492
      %v2579 = vunpack.c.h.b16 %v2492
      %v2580 = vunpack.c.l.b16 %v2493
      %v2581 = vunpack.c.h.b16 %v2493
      %v2582 = vunpack.c.l.b16 %v2494
      %v2583 = vunpack.c.h.b16 %v2494
      %v2584 = vunpack.c.l.b16 %v2495
      %v2585 = vunpack.c.h.b16 %v2495
      %v2586 = vunpack.c.l.b16 %v2496
      %v2587 = vunpack.c.h.b16 %v2496
      %v2588 = vunpack.c.l.b16 %v2497
      %v2589 = vunpack.c.h.b16 %v2497
      %v2590 = vunpack.c.l.b16 %v2498
      %v2591 = vunpack.c.h.b16 %v2498
      %v2592 = vunpack.c.l.b16 %v2499
      %v2593 = vunpack.c.h.b16 %v2499
      %v2594 = vunpack.c.l.b16 %v2500
      %v2595 = vunpack.c.h.b16 %v2500
      %v2596 = vunpack.c.l.b16 %v2501
      %v2597 = vunpack.c.h.b16 %v2501
      %v2598 = vunpack.c.l.b16 %v2502
      %v2599 = vunpack.c.h.b16 %v2502
      %v2600 = vunpack.c.l.b16 %v2503
      %v2601 = vunpack.c.h.b16 %v2503
      %v2602 = vunpack.c.l.b16 %v2504
      %v2603 = vunpack.c.h.b16 %v2504
      %v2604 = vunpack.c.l.b16 %v2505
      %v2605 = vunpack.c.h.b16 %v2505
      %v2606 = vunpack.c.l.b16 %v2506
      %v2607 = vunpack.c.h.b16 %v2506
      %v2608 = vunpack.c.l.b16 %v2507
      %v2609 = vunpack.c.h.b16 %v2507
      %v2610 = vunpack.c.l.b16 %v2508
      %v2611 = vunpack.c.h.b16 %v2508
      %v2612 = vunpack.c.l.b16 %v2509
      %v2613 = vunpack.c.h.b16 %v2509
      %v2614 = vunpack.c.l.b16 %v2510
      %v2615 = vunpack.c.h.b16 %v2510
      %v2616 = vpack.c.b16 %v2570, %v2568
      %v2617 = vpack.c.b16 %v2571, %v2569
      %v2618 = vpack.c.b16 %v2574, %v2572
      %v2619 = vpack.c.b16 %v2575, %v2573
      %v2620 = vpack.c.b16 %v2578, %v2576
      %v2621 = vpack.c.b16 %v2579, %v2577
      %v2622 = vpack.c.b16 %v2582, %v2580
      %v2623 = vpack.c.b16 %v2583, %v2581
      %v2624 = vpack.c.b16 %v2586, %v2584
      %v2625 = vpack.c.b16 %v2587, %v2585
      %v2626 = vpack.c.b16 %v2590, %v2588
      %v2627 = vpack.c.b16 %v2591, %v2589
      %v2628 = vpack.c.b16 %v2594, %v2592
      %v2629 = vpack.c.b16 %v2595, %v2593
      %v2630 = vpack.c.b16 %v2598, %v2596
      %v2631 = vpack.c.b16 %v2599, %v2597
      %v2632 = vpack.c.b16 %v2602, %v2600
      %v2633 = vpack.c.b16 %v2603, %v2601
      %v2634 = vpack.c.b16 %v2606, %v2604
      %v2635 = vpack.c.b16 %v2607, %v2605
      %v2636 = vpack.c.b16 %v2610, %v2608
      %v2637 = vpack.c.b16 %v2611, %v2609
      %v2638 = vpack.c.b16 %v2614, %v2612
      %v2639 = vpack.c.b16 %v2615, %v2613
      %v2665 = vsel %vm477, %v2522, 0
      %v2668 = vsel %vm477, %v2526, 0
      %v2671 = vsel %vm477, %v2530, 0
      %v2674 = vsel %vm477, %v2534, 0
      %v2677 = vsel %vm477, %v2538, 0
      %2679 = vmatprep.subr.bf16.mxu0 %v2617
      %2680 = vmatpush1.bf16.msra.mxu0 %v2616
      %2681 = vmatprep.subr.bf16.mxu0 %v2619
      %2682 = vmatpush1.bf16.msra.mxu0 %v2618
      %2683 = vmatprep.subr.bf16.mxu0 %v2621
      %2684 = vmatpush1.bf16.msra.mxu0 %v2620
      %2685 = vmatprep.subr.bf16.mxu0 %v2623
      %2686 = vmatpush1.bf16.msra.mxu0 %v2622
      %2687 = vmatprep.subr.bf16.mxu0 %v2625
      %2688 = vmatpush1.bf16.msra.mxu0 %v2624
      %2689 = vmatprep.subr.bf16.mxu0 %v2627
      %2690 = vmatpush1.bf16.msra.mxu0 %v2626
      %2691 = vmatprep.subr.bf16.mxu0 %v2629
      %2692 = vmatpush1.bf16.msra.mxu0 %v2628
      %2693 = vmatprep.subr.bf16.mxu0 %v2631
      %2694 = vmatpush1.bf16.msra.mxu0 %v2630
      %2695 = vmatprep.subr.bf16.mxu0 %v2633
      %2696 = vmatpush1.bf16.msra.mxu0 %v2632
      %2697 = vmatprep.subr.bf16.mxu0 %v2635
      %2698 = vmatpush1.bf16.msra.mxu0 %v2634
      %2699 = vmatprep.subr.bf16.mxu0 %v2637
      %2700 = vmatpush1.bf16.msra.mxu0 %v2636
      %2701 = vmatprep.subr.bf16.mxu0 %v2639
      %2702 = vmatpush1.bf16.msra.mxu0 %v2638
      %2703 = vmatprep.subr.bf16.mxu0 0
      %2704 = vmatpush1.bf16.msra.mxu0 0
      %2705 = vmatprep.subr.bf16.mxu0 0
      %2706 = vmatpush1.bf16.msra.mxu0 0
      %2707 = vmatprep.subr.bf16.mxu0 0
      %2708 = vmatpush1.bf16.msra.mxu0 0
      %2709 = vmatprep.subr.bf16.mxu0 0
      %2710 = vmatpush1.bf16.msra.mxu0 0
      %2711 = vmatprep.mubr.bf16.mxu0 %v2665
      %2712 = vmatmul.mubr.bf16.gmra.mrb[0].mxu0 %v2519
      %v2713 = vpop.f32.mrb[0].mxu0
      %v2714 = vadd.f32 0.0, %v2713
      %v2715 = vpop.f32.mrb[0].mxu0
      %v2716 = vadd.f32 0.0, %v2715
      %v2717 = vpop.f32.mrb[0].mxu0
      %v2718 = vadd.f32 0.0, %v2717
      %v2719 = vpop.f32.mrb[0].mxu0
      %v2720 = vadd.f32 0.0, %v2719
      %2721 = vmatprep.mubr.bf16.mxu0 %v2668
      %2722 = vmatmul.mubr.bf16.gmra.mrb[0].mxu0 %v2524
      %v2723 = vpop.f32.mrb[0].mxu0
      %v2724 = vadd.f32 0.0, %v2723
      %v2725 = vpop.f32.mrb[0].mxu0
      %v2726 = vadd.f32 0.0, %v2725
      %v2727 = vpop.f32.mrb[0].mxu0
      %v2728 = vadd.f32 0.0, %v2727
      %v2729 = vpop.f32.mrb[0].mxu0
      %v2730 = vadd.f32 0.0, %v2729
      %2731 = vmatprep.mubr.bf16.mxu0 %v2671
      %2732 = vmatmul.mubr.bf16.gmra.mrb[0].mxu0 %v2528
      %v2733 = vpop.f32.mrb[0].mxu0
      %v2734 = vadd.f32 0.0, %v2733
      %v2735 = vpop.f32.mrb[0].mxu0
      %v2736 = vadd.f32 0.0, %v2735
      %v2737 = vpop.f32.mrb[0].mxu0
      %v2738 = vadd.f32 0.0, %v2737
      %v2739 = vpop.f32.mrb[0].mxu0
      %v2740 = vadd.f32 0.0, %v2739
      %2741 = vmatprep.mubr.bf16.mxu0 %v2674
      %2742 = vmatmul.mubr.bf16.gmra.mrb[0].mxu0 %v2532
      %v2743 = vpop.f32.mrb[0].mxu0
      %v2744 = vadd.f32 0.0, %v2743
      %v2745 = vpop.f32.mrb[0].mxu0
      %v2746 = vadd.f32 0.0, %v2745
      %v2747 = vpop.f32.mrb[0].mxu0
      %v2748 = vadd.f32 0.0, %v2747
      %v2749 = vpop.f32.mrb[0].mxu0
      %v2750 = vadd.f32 0.0, %v2749
      %2751 = vmatprep.mubr.bf16.mxu0 %v2677
      %2752 = vmatmul.mubr.bf16.gmra.mrb[0].mxu0 %v2536
      %v2753 = vpop.f32.mrb[0].mxu0
      %v2754 = vadd.f32 0.0, %v2753
      %v2755 = vpop.f32.mrb[0].mxu0
      %v2756 = vadd.f32 0.0, %v2755
      %v2757 = vpop.f32.mrb[0].mxu0
      %v2758 = vadd.f32 0.0, %v2757
      %v2759 = vpop.f32.mrb[0].mxu0
      %v2760 = vadd.f32 0.0, %v2759
      %2761 = vdwg.mxu0
      %v2762 = vadd.f32 %v2336, %v2714
      %v2763 = vadd.f32 %v2337, %v2716
      %v2764 = vadd.f32 %v2338, %v2718
      %v2765 = vadd.f32 %v2339, %v2720
      %v2766 = vadd.f32 %v2340, %v2724
      %v2767 = vadd.f32 %v2341, %v2726
      %v2768 = vadd.f32 %v2342, %v2728
      %v2769 = vadd.f32 %v2343, %v2730
      %v2770 = vadd.f32 %v2344, %v2734
      %v2771 = vadd.f32 %v2345, %v2736
      %v2772 = vadd.f32 %v2346, %v2738
      %v2773 = vadd.f32 %v2347, %v2740
      %v2774 = vadd.f32 %v2348, %v2744
      %v2775 = vadd.f32 %v2349, %v2746
      %v2776 = vadd.f32 %v2350, %v2748
      %v2777 = vadd.f32 %v2351, %v2750
      %v2778 = vadd.f32 %v2352, %v2754
      %v2779 = vadd.f32 %v2353, %v2756
      %v2780 = vadd.f32 %v2354, %v2758
      %v2781 = vadd.f32 %v2355, %v2760
      %v2782 = vld [vmem:[%s346] sm:$0xf]
      %v2783 = vld [vmem:[%s346 + $0x4] sm:$0xf]
      %v2784 = vld [vmem:[%s346 + $0x8] sm:$0xf]
      %v2785 = vld [vmem:[%s346 + $0xc] sm:$0xf]
      %v2786 = vld [vmem:[%s346 + $0x10] sm:$0xf]
      %v2787 = vld [vmem:[%s346 + $0x14] sm:$0xf]
      %v2788 = vld [vmem:[%s346 + $0x18] sm:$0xf]
      %v2789 = vld [vmem:[%s346 + $0x1c] sm:$0xf]
      %v2790 = vld [vmem:[%s346 + $0x20] sm:$0xf]
      %v2791 = vld [vmem:[%s346 + $0x24] sm:$0xf]
      %v2792 = vld [vmem:[%s346 + $0x28] sm:$0x1]
      %v2793 = vld [vmem:[%s346] sm:$0xe]
      %v2804 = vunpack.c.l.b16 %v2782
      %v2805 = vunpack.c.l.b16 %v2783
      %v2806 = vunpack.c.l.b16 %v2784
      %v2807 = vunpack.c.l.b16 %v2785
      %v2808 = vunpack.c.l.b16 %v2786
      %v2809 = vunpack.c.l.b16 %v2787
      %v2810 = vunpack.c.l.b16 %v2788
      %v2811 = vunpack.c.l.b16 %v2789
      %v2812 = vunpack.c.l.b16 %v2790
      %v2813 = vunpack.c.l.b16 %v2791
      %v2814 = vpack.c.b16 %v2805, %v2804
      %v2815 = vpack.c.b16 %v2807, %v2806
      %v2816 = vpack.c.b16 %v2809, %v2808
      %v2817 = vpack.c.b16 %v2811, %v2810
      %v2818 = vpack.c.b16 %v2813, %v2812
      %v2820 = vunpack.c.l.b16 %v2792
      %v2821 = vpack.c.b16 %v2820, %v2820
      %v2823 = vshrl.u32 %v2814, 16
      %v2825 = vshll.u32 %v2814, 16
      %v2827 = vrot.slane %v2825, 1
      %v2828 = vor.u32 %v2823, %v2827
      %v2830 = vshll.u32 %v2815, 16
      %v2832 = vrot.slane %v2830, 1
      %v2833 = vsel %vm407, %v2828, %v2832
      %v2834 = vshrl.u32 %v2815, 16
      %v2836 = vor.u32 %v2834, %v2832
      %v2838 = vshll.u32 %v2816, 16
      %v2840 = vrot.slane %v2838, 1
      %v2841 = vsel %vm407, %v2836, %v2840
      %v2842 = vshrl.u32 %v2816, 16
      %v2844 = vor.u32 %v2842, %v2840
      %v2846 = vshll.u32 %v2817, 16
      %v2848 = vrot.slane %v2846, 1
      %v2849 = vsel %vm407, %v2844, %v2848
      %v2850 = vshrl.u32 %v2817, 16
      %v2852 = vor.u32 %v2850, %v2848
      %v2854 = vshll.u32 %v2818, 16
      %v2856 = vrot.slane %v2854, 1
      %v2857 = vsel %vm407, %v2852, %v2856
      %v2858 = vshrl.u32 %v2818, 16
      %v2860 = vor.u32 %v2858, %v2856
      %v2862 = vshll.u32 %v2821, 16
      %v2864 = vrot.slane %v2862, 1
      %v2865 = vsel %vm407, %v2860, %v2864
      %2866 = vrot.lane.b32.xlu0 %v2833, 64
      %v2867 = vpop.permute.xlu0 %2866
      %2868 = vrot.lane.b32.xlu0 %v2841, 64
      %v2869 = vpop.permute.xlu0 %2868
      %2870 = vrot.lane.b32.xlu0 %v2849, 64
      %v2871 = vpop.permute.xlu0 %2870
      %2872 = vrot.lane.b32.xlu0 %v2857, 64
      %v2873 = vpop.permute.xlu0 %2872
      %2874 = vrot.lane.b32.xlu0 %v2865, 64
      %v2875 = vpop.permute.xlu0 %2874
      %v2877 = vunpack.c.l.b16 %v2793
      %v2878 = vpack.c.b16 %v2805, %v2877
      %v2879 = vrot.slane %v2878, 1
      %v2880 = vrot.slane %v2815, 1
      %v2881 = vsel %vm465, %v2879, %v2880
      %v2882 = vrot.slane %v2816, 1
      %v2883 = vsel %vm465, %v2880, %v2882
      %v2884 = vrot.slane %v2817, 1
      %v2885 = vsel %vm465, %v2882, %v2884
      %v2886 = vrot.slane %v2818, 1
      %v2887 = vsel %vm465, %v2884, %v2886
      %v2888 = vrot.slane %v2821, 1
      %v2889 = vsel %vm465, %v2886, %v2888
      %v2891 = vsel %vm477, %v2814, %v2867
      %v2894 = vsel %vm477, %v2815, %v2869
      %v2897 = vsel %vm477, %v2816, %v2871
      %v2900 = vsel %vm477, %v2817, %v2873
      %v2903 = vsel %vm477, %v2818, %v2875
      %s2905 = scalar_lea.vmem %s3, 1152
      %v2906 = vld [vmem:[%s2905] sm:$0xff]
      %v2907 = vld [vmem:[%s2905 + $0x8] sm:$0xff]
      %v2908 = vld [vmem:[%s2905 + $0x10] sm:$0xff]
      %v2909 = vld [vmem:[%s2905 + $0x18] sm:$0xff]
      %v2910 = vld [vmem:[%s2905 + $0x20] sm:$0xff]
      %v2911 = vld [vmem:[%s2905 + $0x28] sm:$0xff]
      %v2912 = vld [vmem:[%s2905 + $0x30] sm:$0xff]
      %v2913 = vld [vmem:[%s2905 + $0x38] sm:$0xff]
      %v2914 = vld [vmem:[%s2905 + $0x40] sm:$0xff]
      %v2915 = vld [vmem:[%s2905 + $0x48] sm:$0xff]
      %v2916 = vld [vmem:[%s2905 + $0x50] sm:$0xff]
      %v2917 = vld [vmem:[%s2905 + $0x58] sm:$0xff]
      %v2918 = vld [vmem:[%s2905 + $0x60] sm:$0xff]
      %v2919 = vld [vmem:[%s2905 + $0x68] sm:$0xff]
      %v2920 = vld [vmem:[%s2905 + $0x70] sm:$0xff]
      %v2921 = vld [vmem:[%s2905 + $0x78] sm:$0xff]
      %v2922 = vld [vmem:[%s2905 + $0x80] sm:$0xff]
      %v2923 = vld [vmem:[%s2905 + $0x88] sm:$0xff]
      %v2924 = vld [vmem:[%s2905 + $0x90] sm:$0xff]
      %v2925 = vld [vmem:[%s2905 + $0x98] sm:$0xff]
      %v2926 = vld [vmem:[%s2905 + $0xa0] sm:$0xff]
      %v2927 = vld [vmem:[%s2905 + $0xa8] sm:$0xff]
      %v2928 = vld [vmem:[%s2905 + $0xb0] sm:$0xff]
      %v2929 = vld [vmem:[%s2905 + $0xb8] sm:$0xff]
      %v2954 = vunpack.c.l.b16 %v2906
      %v2955 = vunpack.c.h.b16 %v2906
      %v2956 = vunpack.c.l.b16 %v2907
      %v2957 = vunpack.c.h.b16 %v2907
      %v2958 = vunpack.c.l.b16 %v2908
      %v2959 = vunpack.c.h.b16 %v2908
      %v2960 = vunpack.c.l.b16 %v2909
      %v2961 = vunpack.c.h.b16 %v2909
      %v2962 = vunpack.c.l.b16 %v2910
      %v2963 = vunpack.c.h.b16 %v2910
      %v2964 = vunpack.c.l.b16 %v2911
      %v2965 = vunpack.c.h.b16 %v2911
      %v2966 = vunpack.c.l.b16 %v2912
      %v2967 = vunpack.c.h.b16 %v2912
      %v2968 = vunpack.c.l.b16 %v2913
      %v2969 = vunpack.c.h.b16 %v2913
      %v2970 = vunpack.c.l.b16 %v2914
      %v2971 = vunpack.c.h.b16 %v2914
      %v2972 = vunpack.c.l.b16 %v2915
      %v2973 = vunpack.c.h.b16 %v2915
      %v2974 = vunpack.c.l.b16 %v2916
      %v2975 = vunpack.c.h.b16 %v2916
      %v2976 = vunpack.c.l.b16 %v2917
      %v2977 = vunpack.c.h.b16 %v2917
      %v2978 = vunpack.c.l.b16 %v2918
      %v2979 = vunpack.c.h.b16 %v2918
      %v2980 = vunpack.c.l.b16 %v2919
      %v2981 = vunpack.c.h.b16 %v2919
      %v2982 = vunpack.c.l.b16 %v2920
      %v2983 = vunpack.c.h.b16 %v2920
      %v2984 = vunpack.c.l.b16 %v2921
      %v2985 = vunpack.c.h.b16 %v2921
      %v2986 = vunpack.c.l.b16 %v2922
      %v2987 = vunpack.c.h.b16 %v2922
      %v2988 = vunpack.c.l.b16 %v2923
      %v2989 = vunpack.c.h.b16 %v2923
      %v2990 = vunpack.c.l.b16 %v2924
      %v2991 = vunpack.c.h.b16 %v2924
      %v2992 = vunpack.c.l.b16 %v2925
      %v2993 = vunpack.c.h.b16 %v2925
      %v2994 = vunpack.c.l.b16 %v2926
      %v2995 = vunpack.c.h.b16 %v2926
      %v2996 = vunpack.c.l.b16 %v2927
      %v2997 = vunpack.c.h.b16 %v2927
      %v2998 = vunpack.c.l.b16 %v2928
      %v2999 = vunpack.c.h.b16 %v2928
      %v3000 = vunpack.c.l.b16 %v2929
      %v3001 = vunpack.c.h.b16 %v2929
      %v3002 = vpack.c.b16 %v2956, %v2954
      %v3003 = vpack.c.b16 %v2957, %v2955
      %v3004 = vpack.c.b16 %v2960, %v2958
      %v3005 = vpack.c.b16 %v2961, %v2959
      %v3006 = vpack.c.b16 %v2964, %v2962
      %v3007 = vpack.c.b16 %v2965, %v2963
      %v3008 = vpack.c.b16 %v2968, %v2966
      %v3009 = vpack.c.b16 %v2969, %v2967
      %v3010 = vpack.c.b16 %v2972, %v2970
      %v3011 = vpack.c.b16 %v2973, %v2971
      %v3012 = vpack.c.b16 %v2976, %v2974
      %v3013 = vpack.c.b16 %v2977, %v2975
      %v3014 = vpack.c.b16 %v2980, %v2978
      %v3015 = vpack.c.b16 %v2981, %v2979
      %v3016 = vpack.c.b16 %v2984, %v2982
      %v3017 = vpack.c.b16 %v2985, %v2983
      %v3018 = vpack.c.b16 %v2988, %v2986
      %v3019 = vpack.c.b16 %v2989, %v2987
      %v3020 = vpack.c.b16 %v2992, %v2990
      %v3021 = vpack.c.b16 %v2993, %v2991
      %v3022 = vpack.c.b16 %v2996, %v2994
      %v3023 = vpack.c.b16 %v2997, %v2995
      %v3024 = vpack.c.b16 %v3000, %v2998
      %v3025 = vpack.c.b16 %v3001, %v2999
      %v3051 = vsel %vm477, %v2881, 0
      %v3054 = vsel %vm477, %v2883, 0
      %v3057 = vsel %vm477, %v2885, 0
      %v3060 = vsel %vm477, %v2887, 0
      %v3063 = vsel %vm477, %v2889, 0
      %3065 = vmatprep.subr.bf16.mxu0 %v3003
      %3066 = vmatpush1.bf16.msra.mxu0 %v3002
      %3067 = vmatprep.subr.bf16.mxu0 %v3005
      %3068 = vmatpush1.bf16.msra.mxu0 %v3004
      %3069 = vmatprep.subr.bf16.mxu0 %v3007
      %3070 = vmatpush1.bf16.msra.mxu0 %v3006
      %3071 = vmatprep.subr.bf16.mxu0 %v3009
      %3072 = vmatpush1.bf16.msra.mxu0 %v3008
      %3073 = vmatprep.subr.bf16.mxu0 %v3011
      %3074 = vmatpush1.bf16.msra.mxu0 %v3010
      %3075 = vmatprep.subr.bf16.mxu0 %v3013
      %3076 = vmatpush1.bf16.msra.mxu0 %v3012
      %3077 = vmatprep.subr.bf16.mxu0 %v3015
      %3078 = vmatpush1.bf16.msra.mxu0 %v3014
      %3079 = vmatprep.subr.bf16.mxu0 %v3017
      %3080 = vmatpush1.bf16.msra.mxu0 %v3016
      %3081 = vmatprep.subr.bf16.mxu0 %v3019
      %3082 = vmatpush1.bf16.msra.mxu0 %v3018
      %3083 = vmatprep.subr.bf16.mxu0 %v3021
      %3084 = vmatpush1.bf16.msra.mxu0 %v3020
      %3085 = vmatprep.subr.bf16.mxu0 %v3023
      %3086 = vmatpush1.bf16.msra.mxu0 %v3022
      %3087 = vmatprep.subr.bf16.mxu0 %v3025
      %3088 = vmatpush1.bf16.msra.mxu0 %v3024
      %3089 = vmatprep.subr.bf16.mxu0 0
      %3090 = vmatpush1.bf16.msra.mxu0 0
      %3091 = vmatprep.subr.bf16.mxu0 0
      %3092 = vmatpush1.bf16.msra.mxu0 0
      %3093 = vmatprep.subr.bf16.mxu0 0
      %3094 = vmatpush1.bf16.msra.mxu0 0
      %3095 = vmatprep.subr.bf16.mxu0 0
      %3096 = vmatpush1.bf16.msra.mxu0 0
      %3097 = vmatprep.mubr.bf16.mxu0 %v3051
      %3098 = vmatmul.mubr.bf16.gmra.mrb[0].mxu0 %v2891
      %v3099 = vpop.f32.mrb[0].mxu0
      %v3100 = vadd.f32 0.0, %v3099
      %v3101 = vpop.f32.mrb[0].mxu0
      %v3102 = vadd.f32 0.0, %v3101
      %v3103 = vpop.f32.mrb[0].mxu0
      %v3104 = vadd.f32 0.0, %v3103
      %v3105 = vpop.f32.mrb[0].mxu0
      %v3106 = vadd.f32 0.0, %v3105
      %3107 = vmatprep.mubr.bf16.mxu0 %v3054
      %3108 = vmatmul.mubr.bf16.gmra.mrb[0].mxu0 %v2894
      %v3109 = vpop.f32.mrb[0].mxu0
      %v3110 = vadd.f32 0.0, %v3109
      %v3111 = vpop.f32.mrb[0].mxu0
      %v3112 = vadd.f32 0.0, %v3111
      %v3113 = vpop.f32.mrb[0].mxu0
      %v3114 = vadd.f32 0.0, %v3113
      %v3115 = vpop.f32.mrb[0].mxu0
      %v3116 = vadd.f32 0.0, %v3115
      %3117 = vmatprep.mubr.bf16.mxu0 %v3057
      %3118 = vmatmul.mubr.bf16.gmra.mrb[0].mxu0 %v2897
      %v3119 = vpop.f32.mrb[0].mxu0
      %v3120 = vadd.f32 0.0, %v3119
      %v3121 = vpop.f32.mrb[0].mxu0
      %v3122 = vadd.f32 0.0, %v3121
      %v3123 = vpop.f32.mrb[0].mxu0
      %v3124 = vadd.f32 0.0, %v3123
      %v3125 = vpop.f32.mrb[0].mxu0
      %v3126 = vadd.f32 0.0, %v3125
      %3127 = vmatprep.mubr.bf16.mxu0 %v3060
      %3128 = vmatmul.mubr.bf16.gmra.mrb[0].mxu0 %v2900
      %v3129 = vpop.f32.mrb[0].mxu0
      %v3130 = vadd.f32 0.0, %v3129
      %v3131 = vpop.f32.mrb[0].mxu0
      %v3132 = vadd.f32 0.0, %v3131
      %v3133 = vpop.f32.mrb[0].mxu0
      %v3134 = vadd.f32 0.0, %v3133
      %v3135 = vpop.f32.mrb[0].mxu0
      %v3136 = vadd.f32 0.0, %v3135
      %3137 = vmatprep.mubr.bf16.mxu0 %v3063
      %3138 = vmatmul.mubr.bf16.gmra.mrb[0].mxu0 %v2903
      %v3139 = vpop.f32.mrb[0].mxu0
      %v3140 = vadd.f32 0.0, %v3139
      %v3141 = vpop.f32.mrb[0].mxu0
      %v3142 = vadd.f32 0.0, %v3141
      %v3143 = vpop.f32.mrb[0].mxu0
      %v3144 = vadd.f32 0.0, %v3143
      %v3145 = vpop.f32.mrb[0].mxu0
      %v3146 = vadd.f32 0.0, %v3145
      %3147 = vdwg.mxu0
      %v3148 = vadd.f32 %v2762, %v3100
      %v3149 = vadd.f32 %v2763, %v3102
      %v3150 = vadd.f32 %v2764, %v3104
      %v3151 = vadd.f32 %v2765, %v3106
      %v3152 = vadd.f32 %v2766, %v3110
      %v3153 = vadd.f32 %v2767, %v3112
      %v3154 = vadd.f32 %v2768, %v3114
      %v3155 = vadd.f32 %v2769, %v3116
      %v3156 = vadd.f32 %v2770, %v3120
      %v3157 = vadd.f32 %v2771, %v3122
      %v3158 = vadd.f32 %v2772, %v3124
      %v3159 = vadd.f32 %v2773, %v3126
      %v3160 = vadd.f32 %v2774, %v3130
      %v3161 = vadd.f32 %v2775, %v3132
      %v3162 = vadd.f32 %v2776, %v3134
      %v3163 = vadd.f32 %v2777, %v3136
      %v3164 = vadd.f32 %v2778, %v3140
      %v3165 = vadd.f32 %v2779, %v3142
      %v3166 = vadd.f32 %v2780, %v3144
      %v3167 = vadd.f32 %v2781, %v3146
      %v3168 = vld [vmem:[%s346 + $0x4] sm:$0xe]
      %v3169 = vld [vmem:[%s346 + $0x8] sm:$0xf]
      %v3170 = vld [vmem:[%s346 + $0xc] sm:$0xf]
      %v3171 = vld [vmem:[%s346 + $0x10] sm:$0xf]
      %v3172 = vld [vmem:[%s346 + $0x14] sm:$0xf]
      %v3173 = vld [vmem:[%s346 + $0x18] sm:$0xf]
      %v3174 = vld [vmem:[%s346 + $0x1c] sm:$0xf]
      %v3175 = vld [vmem:[%s346 + $0x20] sm:$0xf]
      %v3176 = vld [vmem:[%s346 + $0x24] sm:$0xf]
      %v3177 = vld [vmem:[%s346 + $0x28] sm:$0xf]
      %v3178 = vld [vmem:[%s346 + $0x2c] sm:$0x1]
      %v3179 = vld [vmem:[%s346 + $0x2c] sm:$0x3]
      %v3180 = vld [vmem:[%s346 + $0x4] sm:$0xc]
      %v3192 = vunpack.c.l.b16 %v3168
      %v3193 = vunpack.c.l.b16 %v3169
      %v3194 = vunpack.c.l.b16 %v3170
      %v3195 = vunpack.c.l.b16 %v3171
      %v3196 = vunpack.c.l.b16 %v3172
      %v3197 = vunpack.c.l.b16 %v3173
      %v3198 = vunpack.c.l.b16 %v3174
      %v3199 = vunpack.c.l.b16 %v3175
      %v3200 = vunpack.c.l.b16 %v3176
      %v3201 = vunpack.c.l.b16 %v3177
      %v3202 = vunpack.c.l.b16 %v3178
      %v3203 = vpack.c.b16 %v3193, %v3192
      %v3204 = vpack.c.b16 %v3195, %v3194
      %v3205 = vpack.c.b16 %v3197, %v3196
      %v3206 = vpack.c.b16 %v3199, %v3198
      %v3207 = vpack.c.b16 %v3201, %v3200
      %v3208 = vpack.c.b16 %v3202, %v3202
      %v3210 = vunpack.c.l.b16 %v3179
      %v3211 = vpack.c.b16 %v3210, %v3210
      %v3213 = vshrl.u32 %v3203, 16
      %v3215 = vshll.u32 %v3203, 16
      %v3217 = vrot.slane %v3215, 1
      %v3218 = vor.u32 %v3213, %v3217
      %v3220 = vshll.u32 %v3204, 16
      %v3222 = vrot.slane %v3220, 1
      %v3223 = vsel %vm407, %v3218, %v3222
      %v3224 = vshrl.u32 %v3204, 16
      %v3226 = vor.u32 %v3224, %v3222
      %v3228 = vshll.u32 %v3205, 16
      %v3230 = vrot.slane %v3228, 1
      %v3231 = vsel %vm407, %v3226, %v3230
      %v3232 = vshrl.u32 %v3205, 16
      %v3234 = vor.u32 %v3232, %v3230
      %v3236 = vshll.u32 %v3206, 16
      %v3238 = vrot.slane %v3236, 1
      %v3239 = vsel %vm407, %v3234, %v3238
      %v3240 = vshrl.u32 %v3206, 16
      %v3242 = vor.u32 %v3240, %v3238
      %v3244 = vshll.u32 %v3207, 16
      %v3246 = vrot.slane %v3244, 1
      %v3247 = vsel %vm407, %v3242, %v3246
      %v3248 = vshrl.u32 %v3207, 16
      %v3250 = vor.u32 %v3248, %v3246
      %v3252 = vshll.u32 %v3211, 16
      %v3254 = vrot.slane %v3252, 1
      %v3255 = vsel %vm407, %v3250, %v3254
      %v3256 = vshrl.u32 %v3211, 16
      %v3258 = vor.u32 %v3256, %v3254
      %3259 = vrot.lane.b32.xlu0 %v3223, 64
      %v3260 = vpop.permute.xlu0 %3259
      %3261 = vrot.lane.b32.xlu0 %v3231, 64
      %v3262 = vpop.permute.xlu0 %3261
      %3263 = vrot.lane.b32.xlu0 %v3239, 64
      %v3264 = vpop.permute.xlu0 %3263
      %3265 = vrot.lane.b32.xlu0 %v3247, 64
      %v3266 = vpop.permute.xlu0 %3265
      %3267 = vrot.lane.b32.xlu0 %v3255, 64
      %v3268 = vpop.permute.xlu0 %3267
      %3269 = vrot.lane.b32.xlu0 %v3258, 64
      %v3270 = vpop.permute.xlu0 %3269
      %v3272 = vunpack.c.l.b16 %v3180
      %v3273 = vpack.c.b16 %v3193, %v3272
      %v3274 = vrot.slane %v3273, 1
      %v3275 = vrot.slane %v3204, 1
      %v3276 = vsel %vm465, %v3274, %v3275
      %v3277 = vrot.slane %v3205, 1
      %v3278 = vsel %vm465, %v3275, %v3277
      %v3279 = vrot.slane %v3206, 1
      %v3280 = vsel %vm465, %v3277, %v3279
      %v3281 = vrot.slane %v3207, 1
      %v3282 = vsel %vm465, %v3279, %v3281
      %v3283 = vrot.slane %v3211, 1
      %v3284 = vsel %vm465, %v3281, %v3283
      %v3286 = vsel %vm477, %v3203, %v3260
      %v3288 = vsel %vm477, %v3204, %v3262
      %v3290 = vsel %vm477, %v3205, %v3264
      %v3292 = vsel %vm477, %v3206, %v3266
      %v3294 = vsel %vm477, %v3207, %v3268
      %v3297 = vsel %vm477, %v3208, %v3270
      %s3298 = scalar_lea.vmem %s3, 1344
      %v3299 = vld [vmem:[%s3298] sm:$0xff]
      %v3300 = vld [vmem:[%s3298 + $0x8] sm:$0xff]
      %v3301 = vld [vmem:[%s3298 + $0x10] sm:$0xff]
      %v3302 = vld [vmem:[%s3298 + $0x18] sm:$0xff]
      %v3303 = vld [vmem:[%s3298 + $0x20] sm:$0xff]
      %v3304 = vld [vmem:[%s3298 + $0x28] sm:$0xff]
      %v3305 = vld [vmem:[%s3298 + $0x30] sm:$0xff]
      %v3306 = vld [vmem:[%s3298 + $0x38] sm:$0xff]
      %v3307 = vld [vmem:[%s3298 + $0x40] sm:$0xff]
      %v3308 = vld [vmem:[%s3298 + $0x48] sm:$0xff]
      %v3309 = vld [vmem:[%s3298 + $0x50] sm:$0xff]
      %v3310 = vld [vmem:[%s3298 + $0x58] sm:$0xff]
      %v3311 = vld [vmem:[%s3298 + $0x60] sm:$0xff]
      %v3312 = vld [vmem:[%s3298 + $0x68] sm:$0xff]
      %v3313 = vld [vmem:[%s3298 + $0x70] sm:$0xff]
      %v3314 = vld [vmem:[%s3298 + $0x78] sm:$0xff]
      %v3315 = vld [vmem:[%s3298 + $0x80] sm:$0xff]
      %v3316 = vld [vmem:[%s3298 + $0x88] sm:$0xff]
      %v3317 = vld [vmem:[%s3298 + $0x90] sm:$0xff]
      %v3318 = vld [vmem:[%s3298 + $0x98] sm:$0xff]
      %v3319 = vld [vmem:[%s3298 + $0xa0] sm:$0xff]
      %v3320 = vld [vmem:[%s3298 + $0xa8] sm:$0xff]
      %v3321 = vld [vmem:[%s3298 + $0xb0] sm:$0xff]
      %v3322 = vld [vmem:[%s3298 + $0xb8] sm:$0xff]
      %v3329 = vrot.slane %v3286, 1
      %v3330 = vrot.slane %v3288, 1
      %v3331 = vsel %vm465, %v3329, %v3330
      %v3332 = vrot.slane %v3276, 1
      %v3333 = vrot.slane %v3278, 1
      %v3334 = vsel %vm465, %v3332, %v3333
      %v3335 = vrot.slane %v3290, 1
      %v3336 = vsel %vm465, %v3330, %v3335
      %v3337 = vrot.slane %v3280, 1
      %v3338 = vsel %vm465, %v3333, %v3337
      %v3339 = vrot.slane %v3292, 1
      %v3340 = vsel %vm465, %v3335, %v3339
      %v3341 = vrot.slane %v3282, 1
      %v3342 = vsel %vm465, %v3337, %v3341
      %v3343 = vrot.slane %v3294, 1
      %v3344 = vsel %vm465, %v3339, %v3343
      %v3345 = vrot.slane %v3284, 1
      %v3346 = vsel %vm465, %v3341, %v3345
      %v3347 = vrot.slane %v3297, 1
      %v3348 = vsel %vm465, %v3343, %v3347
      %v3349 = vrot.slane %v3283, 1
      %v3350 = vsel %vm465, %v3345, %v3349
      %v3380 = vunpack.c.l.b16 %v3299
      %v3381 = vunpack.c.h.b16 %v3299
      %v3382 = vunpack.c.l.b16 %v3300
      %v3383 = vunpack.c.h.b16 %v3300
      %v3384 = vunpack.c.l.b16 %v3301
      %v3385 = vunpack.c.h.b16 %v3301
      %v3386 = vunpack.c.l.b16 %v3302
      %v3387 = vunpack.c.h.b16 %v3302
      %v3388 = vunpack.c.l.b16 %v3303
      %v3389 = vunpack.c.h.b16 %v3303
      %v3390 = vunpack.c.l.b16 %v3304
      %v3391 = vunpack.c.h.b16 %v3304
      %v3392 = vunpack.c.l.b16 %v3305
      %v3393 = vunpack.c.h.b16 %v3305
      %v3394 = vunpack.c.l.b16 %v3306
      %v3395 = vunpack.c.h.b16 %v3306
      %v3396 = vunpack.c.l.b16 %v3307
      %v3397 = vunpack.c.h.b16 %v3307
      %v3398 = vunpack.c.l.b16 %v3308
      %v3399 = vunpack.c.h.b16 %v3308
      %v3400 = vunpack.c.l.b16 %v3309
      %v3401 = vunpack.c.h.b16 %v3309
      %v3402 = vunpack.c.l.b16 %v3310
      %v3403 = vunpack.c.h.b16 %v3310
      %v3404 = vunpack.c.l.b16 %v3311
      %v3405 = vunpack.c.h.b16 %v3311
      %v3406 = vunpack.c.l.b16 %v3312
      %v3407 = vunpack.c.h.b16 %v3312
      %v3408 = vunpack.c.l.b16 %v3313
      %v3409 = vunpack.c.h.b16 %v3313
      %v3410 = vunpack.c.l.b16 %v3314
      %v3411 = vunpack.c.h.b16 %v3314
      %v3412 = vunpack.c.l.b16 %v3315
      %v3413 = vunpack.c.h.b16 %v3315
      %v3414 = vunpack.c.l.b16 %v3316
      %v3415 = vunpack.c.h.b16 %v3316
      %v3416 = vunpack.c.l.b16 %v3317
      %v3417 = vunpack.c.h.b16 %v3317
      %v3418 = vunpack.c.l.b16 %v3318
      %v3419 = vunpack.c.h.b16 %v3318
      %v3420 = vunpack.c.l.b16 %v3319
      %v3421 = vunpack.c.h.b16 %v3319
      %v3422 = vunpack.c.l.b16 %v3320
      %v3423 = vunpack.c.h.b16 %v3320
      %v3424 = vunpack.c.l.b16 %v3321
      %v3425 = vunpack.c.h.b16 %v3321
      %v3426 = vunpack.c.l.b16 %v3322
      %v3427 = vunpack.c.h.b16 %v3322
      %v3428 = vpack.c.b16 %v3382, %v3380
      %v3429 = vpack.c.b16 %v3383, %v3381
      %v3430 = vpack.c.b16 %v3386, %v3384
      %v3431 = vpack.c.b16 %v3387, %v3385
      %v3432 = vpack.c.b16 %v3390, %v3388
      %v3433 = vpack.c.b16 %v3391, %v3389
      %v3434 = vpack.c.b16 %v3394, %v3392
      %v3435 = vpack.c.b16 %v3395, %v3393
      %v3436 = vpack.c.b16 %v3398, %v3396
      %v3437 = vpack.c.b16 %v3399, %v3397
      %v3438 = vpack.c.b16 %v3402, %v3400
      %v3439 = vpack.c.b16 %v3403, %v3401
      %v3440 = vpack.c.b16 %v3406, %v3404
      %v3441 = vpack.c.b16 %v3407, %v3405
      %v3442 = vpack.c.b16 %v3410, %v3408
      %v3443 = vpack.c.b16 %v3411, %v3409
      %v3444 = vpack.c.b16 %v3414, %v3412
      %v3445 = vpack.c.b16 %v3415, %v3413
      %v3446 = vpack.c.b16 %v3418, %v3416
      %v3447 = vpack.c.b16 %v3419, %v3417
      %v3448 = vpack.c.b16 %v3422, %v3420
      %v3449 = vpack.c.b16 %v3423, %v3421
      %v3450 = vpack.c.b16 %v3426, %v3424
      %v3451 = vpack.c.b16 %v3427, %v3425
      %v3477 = vsel %vm477, %v3334, 0
      %v3480 = vsel %vm477, %v3338, 0
      %v3483 = vsel %vm477, %v3342, 0
      %v3486 = vsel %vm477, %v3346, 0
      %v3489 = vsel %vm477, %v3350, 0
      %3491 = vmatprep.subr.bf16.mxu0 %v3429
      %3492 = vmatpush1.bf16.msra.mxu0 %v3428
      %3493 = vmatprep.subr.bf16.mxu0 %v3431
      %3494 = vmatpush1.bf16.msra.mxu0 %v3430
      %3495 = vmatprep.subr.bf16.mxu0 %v3433
      %3496 = vmatpush1.bf16.msra.mxu0 %v3432
      %3497 = vmatprep.subr.bf16.mxu0 %v3435
      %3498 = vmatpush1.bf16.msra.mxu0 %v3434
      %3499 = vmatprep.subr.bf16.mxu0 %v3437
      %3500 = vmatpush1.bf16.msra.mxu0 %v3436
      %3501 = vmatprep.subr.bf16.mxu0 %v3439
      %3502 = vmatpush1.bf16.msra.mxu0 %v3438
      %3503 = vmatprep.subr.bf16.mxu0 %v3441
      %3504 = vmatpush1.bf16.msra.mxu0 %v3440
      %3505 = vmatprep.subr.bf16.mxu0 %v3443
      %3506 = vmatpush1.bf16.msra.mxu0 %v3442
      %3507 = vmatprep.subr.bf16.mxu0 %v3445
      %3508 = vmatpush1.bf16.msra.mxu0 %v3444
      %3509 = vmatprep.subr.bf16.mxu0 %v3447
      %3510 = vmatpush1.bf16.msra.mxu0 %v3446
      %3511 = vmatprep.subr.bf16.mxu0 %v3449
      %3512 = vmatpush1.bf16.msra.mxu0 %v3448
      %3513 = vmatprep.subr.bf16.mxu0 %v3451
      %3514 = vmatpush1.bf16.msra.mxu0 %v3450
      %3515 = vmatprep.subr.bf16.mxu0 0
      %3516 = vmatpush1.bf16.msra.mxu0 0
      %3517 = vmatprep.subr.bf16.mxu0 0
      %3518 = vmatpush1.bf16.msra.mxu0 0
      %3519 = vmatprep.subr.bf16.mxu0 0
      %3520 = vmatpush1.bf16.msra.mxu0 0
      %3521 = vmatprep.subr.bf16.mxu0 0
      %3522 = vmatpush1.bf16.msra.mxu0 0
      %3523 = vmatprep.mubr.bf16.mxu0 %v3477
      %3524 = vmatmul.mubr.bf16.gmra.mrb[0].mxu0 %v3331
      %v3525 = vpop.f32.mrb[0].mxu0
      %v3526 = vadd.f32 0.0, %v3525
      %v3527 = vpop.f32.mrb[0].mxu0
      %v3528 = vadd.f32 0.0, %v3527
      %v3529 = vpop.f32.mrb[0].mxu0
      %v3530 = vadd.f32 0.0, %v3529
      %v3531 = vpop.f32.mrb[0].mxu0
      %v3532 = vadd.f32 0.0, %v3531
      %3533 = vmatprep.mubr.bf16.mxu0 %v3480
      %3534 = vmatmul.mubr.bf16.gmra.mrb[0].mxu0 %v3336
      %v3535 = vpop.f32.mrb[0].mxu0
      %v3536 = vadd.f32 0.0, %v3535
      %v3537 = vpop.f32.mrb[0].mxu0
      %v3538 = vadd.f32 0.0, %v3537
      %v3539 = vpop.f32.mrb[0].mxu0
      %v3540 = vadd.f32 0.0, %v3539
      %v3541 = vpop.f32.mrb[0].mxu0
      %v3542 = vadd.f32 0.0, %v3541
      %3543 = vmatprep.mubr.bf16.mxu0 %v3483
      %3544 = vmatmul.mubr.bf16.gmra.mrb[0].mxu0 %v3340
      %v3545 = vpop.f32.mrb[0].mxu0
      %v3546 = vadd.f32 0.0, %v3545
      %v3547 = vpop.f32.mrb[0].mxu0
      %v3548 = vadd.f32 0.0, %v3547
      %v3549 = vpop.f32.mrb[0].mxu0
      %v3550 = vadd.f32 0.0, %v3549
      %v3551 = vpop.f32.mrb[0].mxu0
      %v3552 = vadd.f32 0.0, %v3551
      %3553 = vmatprep.mubr.bf16.mxu0 %v3486
      %3554 = vmatmul.mubr.bf16.gmra.mrb[0].mxu0 %v3344
      %v3555 = vpop.f32.mrb[0].mxu0
      %v3556 = vadd.f32 0.0, %v3555
      %v3557 = vpop.f32.mrb[0].mxu0
      %v3558 = vadd.f32 0.0, %v3557
      %v3559 = vpop.f32.mrb[0].mxu0
      %v3560 = vadd.f32 0.0, %v3559
      %v3561 = vpop.f32.mrb[0].mxu0
      %v3562 = vadd.f32 0.0, %v3561
      %3563 = vmatprep.mubr.bf16.mxu0 %v3489
      %3564 = vmatmul.mubr.bf16.gmra.mrb[0].mxu0 %v3348
      %v3565 = vpop.f32.mrb[0].mxu0
      %v3566 = vadd.f32 0.0, %v3565
      %v3567 = vpop.f32.mrb[0].mxu0
      %v3568 = vadd.f32 0.0, %v3567
      %v3569 = vpop.f32.mrb[0].mxu0
      %v3570 = vadd.f32 0.0, %v3569
      %v3571 = vpop.f32.mrb[0].mxu0
      %v3572 = vadd.f32 0.0, %v3571
      %3573 = vdwg.mxu0
      %v3574 = vadd.f32 %v3148, %v3526
      %v3575 = vadd.f32 %v3149, %v3528
      %v3576 = vadd.f32 %v3150, %v3530
      %v3577 = vadd.f32 %v3151, %v3532
      %v3578 = vadd.f32 %v3152, %v3536
      %v3579 = vadd.f32 %v3153, %v3538
      %v3580 = vadd.f32 %v3154, %v3540
      %v3581 = vadd.f32 %v3155, %v3542
      %v3582 = vadd.f32 %v3156, %v3546
      %v3583 = vadd.f32 %v3157, %v3548
      %v3584 = vadd.f32 %v3158, %v3550
      %v3585 = vadd.f32 %v3159, %v3552
      %v3586 = vadd.f32 %v3160, %v3556
      %v3587 = vadd.f32 %v3161, %v3558
      %v3588 = vadd.f32 %v3162, %v3560
      %v3589 = vadd.f32 %v3163, %v3562
      %v3590 = vadd.f32 %v3164, %v3566
      %v3591 = vadd.f32 %v3165, %v3568
      %v3592 = vadd.f32 %v3166, %v3570
      %v3593 = vadd.f32 %v3167, %v3572
      %v3594 = vld [vmem:[%s346 + $0x8] sm:$0xc]
      %v3595 = vld [vmem:[%s346 + $0xc] sm:$0xf]
      %v3596 = vld [vmem:[%s346 + $0x10] sm:$0xf]
      %v3597 = vld [vmem:[%s346 + $0x14] sm:$0xf]
      %v3598 = vld [vmem:[%s346 + $0x18] sm:$0xf]
      %v3599 = vld [vmem:[%s346 + $0x1c] sm:$0xf]
      %v3600 = vld [vmem:[%s346 + $0x20] sm:$0xf]
      %v3601 = vld [vmem:[%s346 + $0x24] sm:$0xf]
      %v3602 = vld [vmem:[%s346 + $0x28] sm:$0xf]
      %v3603 = vld [vmem:[%s346 + $0x2c] sm:$0xf]
      %v3604 = vld [vmem:[%s346 + $0x30] sm:$0x3]
      %v3605 = vld [vmem:[%s346 + $0x30] sm:$0x7]
      %v3606 = vld [vmem:[%s346 + $0x8] sm:$0x8]
      %v3618 = vunpack.c.l.b16 %v3594
      %v3619 = vunpack.c.l.b16 %v3595
      %v3620 = vunpack.c.l.b16 %v3596
      %v3621 = vunpack.c.l.b16 %v3597
      %v3622 = vunpack.c.l.b16 %v3598
      %v3623 = vunpack.c.l.b16 %v3599
      %v3624 = vunpack.c.l.b16 %v3600
      %v3625 = vunpack.c.l.b16 %v3601
      %v3626 = vunpack.c.l.b16 %v3602
      %v3627 = vunpack.c.l.b16 %v3603
      %v3628 = vunpack.c.l.b16 %v3604
      %v3629 = vpack.c.b16 %v3619, %v3618
      %v3630 = vpack.c.b16 %v3621, %v3620
      %v3631 = vpack.c.b16 %v3623, %v3622
      %v3632 = vpack.c.b16 %v3625, %v3624
      %v3633 = vpack.c.b16 %v3627, %v3626
      %v3634 = vpack.c.b16 %v3628, %v3628
      %v3636 = vunpack.c.l.b16 %v3605
      %v3637 = vpack.c.b16 %v3636, %v3636
      %v3639 = vshrl.u32 %v3629, 16
      %v3641 = vshll.u32 %v3629, 16
      %v3643 = vrot.slane %v3641, 1
      %v3644 = vor.u32 %v3639, %v3643
      %v3646 = vshll.u32 %v3630, 16
      %v3648 = vrot.slane %v3646, 1
      %v3649 = vsel %vm407, %v3644, %v3648
      %v3650 = vshrl.u32 %v3630, 16
      %v3652 = vor.u32 %v3650, %v3648
      %v3654 = vshll.u32 %v3631, 16
      %v3656 = vrot.slane %v3654, 1
      %v3657 = vsel %vm407, %v3652, %v3656
      %v3658 = vshrl.u32 %v3631, 16
      %v3660 = vor.u32 %v3658, %v3656
      %v3662 = vshll.u32 %v3632, 16
      %v3664 = vrot.slane %v3662, 1
      %v3665 = vsel %vm407, %v3660, %v3664
      %v3666 = vshrl.u32 %v3632, 16
      %v3668 = vor.u32 %v3666, %v3664
      %v3670 = vshll.u32 %v3633, 16
      %v3672 = vrot.slane %v3670, 1
      %v3673 = vsel %vm407, %v3668, %v3672
      %v3674 = vshrl.u32 %v3633, 16
      %v3676 = vor.u32 %v3674, %v3672
      %v3678 = vshll.u32 %v3637, 16
      %v3680 = vrot.slane %v3678, 1
      %v3681 = vsel %vm407, %v3676, %v3680
      %v3682 = vshrl.u32 %v3637, 16
      %v3684 = vor.u32 %v3682, %v3680
      %3685 = vrot.lane.b32.xlu0 %v3649, 64
      %v3686 = vpop.permute.xlu0 %3685
      %3687 = vrot.lane.b32.xlu0 %v3657, 64
      %v3688 = vpop.permute.xlu0 %3687
      %3689 = vrot.lane.b32.xlu0 %v3665, 64
      %v3690 = vpop.permute.xlu0 %3689
      %3691 = vrot.lane.b32.xlu0 %v3673, 64
      %v3692 = vpop.permute.xlu0 %3691
      %3693 = vrot.lane.b32.xlu0 %v3681, 64
      %v3694 = vpop.permute.xlu0 %3693
      %3695 = vrot.lane.b32.xlu0 %v3684, 64
      %v3696 = vpop.permute.xlu0 %3695
      %v3698 = vunpack.c.l.b16 %v3606
      %v3699 = vpack.c.b16 %v3619, %v3698
      %v3700 = vrot.slane %v3699, 1
      %v3701 = vrot.slane %v3630, 1
      %v3702 = vsel %vm465, %v3700, %v3701
      %v3703 = vrot.slane %v3631, 1
      %v3704 = vsel %vm465, %v3701, %v3703
      %v3705 = vrot.slane %v3632, 1
      %v3706 = vsel %vm465, %v3703, %v3705
      %v3707 = vrot.slane %v3633, 1
      %v3708 = vsel %vm465, %v3705, %v3707
      %v3709 = vrot.slane %v3637, 1
      %v3710 = vsel %vm465, %v3707, %v3709
      %v3712 = vsel %vm477, %v3629, %v3686
      %v3714 = vsel %vm477, %v3630, %v3688
      %v3716 = vsel %vm477, %v3631, %v3690
      %v3718 = vsel %vm477, %v3632, %v3692
      %v3720 = vsel %vm477, %v3633, %v3694
      %v3723 = vsel %vm477, %v3634, %v3696
      %s3724 = scalar_lea.vmem %s3, 1536
      %v3725 = vld [vmem:[%s3724] sm:$0xff]
      %v3726 = vld [vmem:[%s3724 + $0x8] sm:$0xff]
      %v3727 = vld [vmem:[%s3724 + $0x10] sm:$0xff]
      %v3728 = vld [vmem:[%s3724 + $0x18] sm:$0xff]
      %v3729 = vld [vmem:[%s3724 + $0x20] sm:$0xff]
      %v3730 = vld [vmem:[%s3724 + $0x28] sm:$0xff]
      %v3731 = vld [vmem:[%s3724 + $0x30] sm:$0xff]
      %v3732 = vld [vmem:[%s3724 + $0x38] sm:$0xff]
      %v3733 = vld [vmem:[%s3724 + $0x40] sm:$0xff]
      %v3734 = vld [vmem:[%s3724 + $0x48] sm:$0xff]
      %v3735 = vld [vmem:[%s3724 + $0x50] sm:$0xff]
      %v3736 = vld [vmem:[%s3724 + $0x58] sm:$0xff]
      %v3737 = vld [vmem:[%s3724 + $0x60] sm:$0xff]
      %v3738 = vld [vmem:[%s3724 + $0x68] sm:$0xff]
      %v3739 = vld [vmem:[%s3724 + $0x70] sm:$0xff]
      %v3740 = vld [vmem:[%s3724 + $0x78] sm:$0xff]
      %v3741 = vld [vmem:[%s3724 + $0x80] sm:$0xff]
      %v3742 = vld [vmem:[%s3724 + $0x88] sm:$0xff]
      %v3743 = vld [vmem:[%s3724 + $0x90] sm:$0xff]
      %v3744 = vld [vmem:[%s3724 + $0x98] sm:$0xff]
      %v3745 = vld [vmem:[%s3724 + $0xa0] sm:$0xff]
      %v3746 = vld [vmem:[%s3724 + $0xa8] sm:$0xff]
      %v3747 = vld [vmem:[%s3724 + $0xb0] sm:$0xff]
      %v3748 = vld [vmem:[%s3724 + $0xb8] sm:$0xff]
      %v3755 = vrot.slane %v3712, 2
      %v3756 = vrot.slane %v3714, 2
      %v3757 = vsel %vm1278, %v3755, %v3756
      %v3758 = vrot.slane %v3702, 2
      %v3759 = vrot.slane %v3704, 2
      %v3760 = vsel %vm1278, %v3758, %v3759
      %v3761 = vrot.slane %v3716, 2
      %v3762 = vsel %vm1278, %v3756, %v3761
      %v3763 = vrot.slane %v3706, 2
      %v3764 = vsel %vm1278, %v3759, %v3763
      %v3765 = vrot.slane %v3718, 2
      %v3766 = vsel %vm1278, %v3761, %v3765
      %v3767 = vrot.slane %v3708, 2
      %v3768 = vsel %vm1278, %v3763, %v3767
      %v3769 = vrot.slane %v3720, 2
      %v3770 = vsel %vm1278, %v3765, %v3769
      %v3771 = vrot.slane %v3710, 2
      %v3772 = vsel %vm1278, %v3767, %v3771
      %v3773 = vrot.slane %v3723, 2
      %v3774 = vsel %vm1278, %v3769, %v3773
      %v3775 = vrot.slane %v3709, 2
      %v3776 = vsel %vm1278, %v3771, %v3775
      %v3806 = vunpack.c.l.b16 %v3725
      %v3807 = vunpack.c.h.b16 %v3725
      %v3808 = vunpack.c.l.b16 %v3726
      %v3809 = vunpack.c.h.b16 %v3726
      %v3810 = vunpack.c.l.b16 %v3727
      %v3811 = vunpack.c.h.b16 %v3727
      %v3812 = vunpack.c.l.b16 %v3728
      %v3813 = vunpack.c.h.b16 %v3728
      %v3814 = vunpack.c.l.b16 %v3729
      %v3815 = vunpack.c.h.b16 %v3729
      %v3816 = vunpack.c.l.b16 %v3730
      %v3817 = vunpack.c.h.b16 %v3730
      %v3818 = vunpack.c.l.b16 %v3731
      %v3819 = vunpack.c.h.b16 %v3731
      %v3820 = vunpack.c.l.b16 %v3732
      %v3821 = vunpack.c.h.b16 %v3732
      %v3822 = vunpack.c.l.b16 %v3733
      %v3823 = vunpack.c.h.b16 %v3733
      %v3824 = vunpack.c.l.b16 %v3734
      %v3825 = vunpack.c.h.b16 %v3734
      %v3826 = vunpack.c.l.b16 %v3735
      %v3827 = vunpack.c.h.b16 %v3735
      %v3828 = vunpack.c.l.b16 %v3736
      %v3829 = vunpack.c.h.b16 %v3736
      %v3830 = vunpack.c.l.b16 %v3737
      %v3831 = vunpack.c.h.b16 %v3737
      %v3832 = vunpack.c.l.b16 %v3738
      %v3833 = vunpack.c.h.b16 %v3738
      %v3834 = vunpack.c.l.b16 %v3739
      %v3835 = vunpack.c.h.b16 %v3739
      %v3836 = vunpack.c.l.b16 %v3740
      %v3837 = vunpack.c.h.b16 %v3740
      %v3838 = vunpack.c.l.b16 %v3741
      %v3839 = vunpack.c.h.b16 %v3741
      %v3840 = vunpack.c.l.b16 %v3742
      %v3841 = vunpack.c.h.b16 %v3742
      %v3842 = vunpack.c.l.b16 %v3743
      %v3843 = vunpack.c.h.b16 %v3743
      %v3844 = vunpack.c.l.b16 %v3744
      %v3845 = vunpack.c.h.b16 %v3744
      %v3846 = vunpack.c.l.b16 %v3745
      %v3847 = vunpack.c.h.b16 %v3745
      %v3848 = vunpack.c.l.b16 %v3746
      %v3849 = vunpack.c.h.b16 %v3746
      %v3850 = vunpack.c.l.b16 %v3747
      %v3851 = vunpack.c.h.b16 %v3747
      %v3852 = vunpack.c.l.b16 %v3748
      %v3853 = vunpack.c.h.b16 %v3748
      %v3854 = vpack.c.b16 %v3808, %v3806
      %v3855 = vpack.c.b16 %v3809, %v3807
      %v3856 = vpack.c.b16 %v3812, %v3810
      %v3857 = vpack.c.b16 %v3813, %v3811
      %v3858 = vpack.c.b16 %v3816, %v3814
      %v3859 = vpack.c.b16 %v3817, %v3815
      %v3860 = vpack.c.b16 %v3820, %v3818
      %v3861 = vpack.c.b16 %v3821, %v3819
      %v3862 = vpack.c.b16 %v3824, %v3822
      %v3863 = vpack.c.b16 %v3825, %v3823
      %v3864 = vpack.c.b16 %v3828, %v3826
      %v3865 = vpack.c.b16 %v3829, %v3827
      %v3866 = vpack.c.b16 %v3832, %v3830
      %v3867 = vpack.c.b16 %v3833, %v3831
      %v3868 = vpack.c.b16 %v3836, %v3834
      %v3869 = vpack.c.b16 %v3837, %v3835
      %v3870 = vpack.c.b16 %v3840, %v3838
      %v3871 = vpack.c.b16 %v3841, %v3839
      %v3872 = vpack.c.b16 %v3844, %v3842
      %v3873 = vpack.c.b16 %v3845, %v3843
      %v3874 = vpack.c.b16 %v3848, %v3846
      %v3875 = vpack.c.b16 %v3849, %v3847
      %v3876 = vpack.c.b16 %v3852, %v3850
      %v3877 = vpack.c.b16 %v3853, %v3851
      %v3903 = vsel %vm477, %v3760, 0
      %v3906 = vsel %vm477, %v3764, 0
      %v3909 = vsel %vm477, %v3768, 0
      %v3912 = vsel %vm477, %v3772, 0
      %v3915 = vsel %vm477, %v3776, 0
      %3917 = vmatprep.subr.bf16.mxu0 %v3855
      %3918 = vmatpush1.bf16.msra.mxu0 %v3854
      %3919 = vmatprep.subr.bf16.mxu0 %v3857
      %3920 = vmatpush1.bf16.msra.mxu0 %v3856
      %3921 = vmatprep.subr.bf16.mxu0 %v3859
      %3922 = vmatpush1.bf16.msra.mxu0 %v3858
      %3923 = vmatprep.subr.bf16.mxu0 %v3861
      %3924 = vmatpush1.bf16.msra.mxu0 %v3860
      %3925 = vmatprep.subr.bf16.mxu0 %v3863
      %3926 = vmatpush1.bf16.msra.mxu0 %v3862
      %3927 = vmatprep.subr.bf16.mxu0 %v3865
      %3928 = vmatpush1.bf16.msra.mxu0 %v3864
      %3929 = vmatprep.subr.bf16.mxu0 %v3867
      %3930 = vmatpush1.bf16.msra.mxu0 %v3866
      %3931 = vmatprep.subr.bf16.mxu0 %v3869
      %3932 = vmatpush1.bf16.msra.mxu0 %v3868
      %3933 = vmatprep.subr.bf16.mxu0 %v3871
      %3934 = vmatpush1.bf16.msra.mxu0 %v3870
      %3935 = vmatprep.subr.bf16.mxu0 %v3873
      %3936 = vmatpush1.bf16.msra.mxu0 %v3872
      %3937 = vmatprep.subr.bf16.mxu0 %v3875
      %3938 = vmatpush1.bf16.msra.mxu0 %v3874
      %3939 = vmatprep.subr.bf16.mxu0 %v3877
      %3940 = vmatpush1.bf16.msra.mxu0 %v3876
      %3941 = vmatprep.subr.bf16.mxu0 0
      %3942 = vmatpush1.bf16.msra.mxu0 0
      %3943 = vmatprep.subr.bf16.mxu0 0
      %3944 = vmatpush1.bf16.msra.mxu0 0
      %3945 = vmatprep.subr.bf16.mxu0 0
      %3946 = vmatpush1.bf16.msra.mxu0 0
      %3947 = vmatprep.subr.bf16.mxu0 0
      %3948 = vmatpush1.bf16.msra.mxu0 0
      %3949 = vmatprep.mubr.bf16.mxu0 %v3903
      %3950 = vmatmul.mubr.bf16.gmra.mrb[0].mxu0 %v3757
      %v3951 = vpop.f32.mrb[0].mxu0
      %v3952 = vadd.f32 0.0, %v3951
      %v3953 = vpop.f32.mrb[0].mxu0
      %v3954 = vadd.f32 0.0, %v3953
      %v3955 = vpop.f32.mrb[0].mxu0
      %v3956 = vadd.f32 0.0, %v3955
      %v3957 = vpop.f32.mrb[0].mxu0
      %v3958 = vadd.f32 0.0, %v3957
      %3959 = vmatprep.mubr.bf16.mxu0 %v3906
      %3960 = vmatmul.mubr.bf16.gmra.mrb[0].mxu0 %v3762
      %v3961 = vpop.f32.mrb[0].mxu0
      %v3962 = vadd.f32 0.0, %v3961
      %v3963 = vpop.f32.mrb[0].mxu0
      %v3964 = vadd.f32 0.0, %v3963
      %v3965 = vpop.f32.mrb[0].mxu0
      %v3966 = vadd.f32 0.0, %v3965
      %v3967 = vpop.f32.mrb[0].mxu0
      %v3968 = vadd.f32 0.0, %v3967
      %3969 = vmatprep.mubr.bf16.mxu0 %v3909
      %3970 = vmatmul.mubr.bf16.gmra.mrb[0].mxu0 %v3766
      %v3971 = vpop.f32.mrb[0].mxu0
      %v3972 = vadd.f32 0.0, %v3971
      %v3973 = vpop.f32.mrb[0].mxu0
      %v3974 = vadd.f32 0.0, %v3973
      %v3975 = vpop.f32.mrb[0].mxu0
      %v3976 = vadd.f32 0.0, %v3975
      %v3977 = vpop.f32.mrb[0].mxu0
      %v3978 = vadd.f32 0.0, %v3977
      %3979 = vmatprep.mubr.bf16.mxu0 %v3912
      %3980 = vmatmul.mubr.bf16.gmra.mrb[0].mxu0 %v3770
      %v3981 = vpop.f32.mrb[0].mxu0
      %v3982 = vadd.f32 0.0, %v3981
      %v3983 = vpop.f32.mrb[0].mxu0
      %v3984 = vadd.f32 0.0, %v3983
      %v3985 = vpop.f32.mrb[0].mxu0
      %v3986 = vadd.f32 0.0, %v3985
      %v3987 = vpop.f32.mrb[0].mxu0
      %v3988 = vadd.f32 0.0, %v3987
      %3989 = vmatprep.mubr.bf16.mxu0 %v3915
      %3990 = vmatmul.mubr.bf16.gmra.mrb[0].mxu0 %v3774
      %v3991 = vpop.f32.mrb[0].mxu0
      %v3992 = vadd.f32 0.0, %v3991
      %v3993 = vpop.f32.mrb[0].mxu0
      %v3994 = vadd.f32 0.0, %v3993
      %v3995 = vpop.f32.mrb[0].mxu0
      %v3996 = vadd.f32 0.0, %v3995
      %v3997 = vpop.f32.mrb[0].mxu0
      %v3998 = vadd.f32 0.0, %v3997
      %3999 = vdwg.mxu0
      %v4000 = vadd.f32 %v3574, %v3952
      %v4001 = vadd.f32 %v3575, %v3954
      %v4002 = vadd.f32 %v3576, %v3956
      %v4003 = vadd.f32 %v3577, %v3958
      %v4004 = vadd.f32 %v3578, %v3962
      %v4005 = vadd.f32 %v3579, %v3964
      %v4006 = vadd.f32 %v3580, %v3966
      %v4007 = vadd.f32 %v3581, %v3968
      %v4008 = vadd.f32 %v3582, %v3972
      %v4009 = vadd.f32 %v3583, %v3974
      %v4010 = vadd.f32 %v3584, %v3976
      %v4011 = vadd.f32 %v3585, %v3978
      %v4012 = vadd.f32 %v3586, %v3982
      %v4013 = vadd.f32 %v3587, %v3984
      %v4014 = vadd.f32 %v3588, %v3986
      %v4015 = vadd.f32 %v3589, %v3988
      %v4016 = vadd.f32 %v3590, %v3992
      %v4017 = vadd.f32 %v3591, %v3994
      %v4018 = vadd.f32 %v3592, %v3996
      %v4019 = vadd.f32 %v3593, %v3998
      %v4020 = vpack.c.bf16 %v4002, %v4000
      %v4021 = vpack.c.bf16 %v4003, %v4001
      %v4022 = vpack.c.bf16 %v4006, %v4004
      %v4023 = vpack.c.bf16 %v4007, %v4005
      %v4024 = vpack.c.bf16 %v4010, %v4008
      %v4025 = vpack.c.bf16 %v4011, %v4009
      %v4026 = vpack.c.bf16 %v4014, %v4012
      %v4027 = vpack.c.bf16 %v4015, %v4013
      %v4028 = vpack.c.bf16 %v4018, %v4016
      %v4029 = vpack.c.bf16 %v4019, %v4017
      %v4040 = vunpack.c.l.b16 %v4020
      %v4041 = vunpack.c.l.b16 %v4021
      %v4042 = vunpack.c.h.b16 %v4020
      %v4043 = vunpack.c.h.b16 %v4021
      %v4044 = vunpack.c.l.b16 %v4022
      %v4045 = vunpack.c.l.b16 %v4023
      %v4046 = vunpack.c.h.b16 %v4022
      %v4047 = vunpack.c.h.b16 %v4023
      %v4048 = vunpack.c.l.b16 %v4024
      %v4049 = vunpack.c.l.b16 %v4025
      %v4050 = vunpack.c.h.b16 %v4024
      %v4051 = vunpack.c.h.b16 %v4025
      %v4052 = vunpack.c.l.b16 %v4026
      %v4053 = vunpack.c.l.b16 %v4027
      %v4054 = vunpack.c.h.b16 %v4026
      %v4055 = vunpack.c.h.b16 %v4027
      %v4056 = vunpack.c.l.b16 %v4028
      %v4057 = vunpack.c.l.b16 %v4029
      %v4058 = vunpack.c.h.b16 %v4028
      %v4059 = vunpack.c.h.b16 %v4029
      %v4060 = vpack.c.b16 %v4041, %v4040
      %v4061 = vpack.c.b16 %v4043, %v4042
      %v4062 = vpack.c.b16 %v4045, %v4044
      %v4063 = vpack.c.b16 %v4047, %v4046
      %v4064 = vpack.c.b16 %v4049, %v4048
      %v4065 = vpack.c.b16 %v4051, %v4050
      %v4066 = vpack.c.b16 %v4053, %v4052
      %v4067 = vpack.c.b16 %v4055, %v4054
      %v4068 = vpack.c.b16 %v4057, %v4056
      %v4069 = vpack.c.b16 %v4059, %v4058
      %vm4080 = vcmask 1043456
      %vm4081 = vcmask 523268
      %vm4082 = vmor %vm4081, %vm4080
      %4083 = vst.msk [vmem:[%s356] sm:$0xff] %vm4082, %v4060
      %4084 = vst.msk [vmem:[%s356 + $0x8] sm:$0xff] %vm4082, %v4061
      %4085 = vst.msk [vmem:[%s356 + $0x10] sm:$0xff] %vm4082, %v4062
      %4086 = vst.msk [vmem:[%s356 + $0x18] sm:$0xff] %vm4082, %v4063
      %4087 = vst.msk [vmem:[%s356 + $0x20] sm:$0xff] %vm4082, %v4064
      %4088 = vst.msk [vmem:[%s356 + $0x28] sm:$0xff] %vm4082, %v4065
      %4089 = vst.msk [vmem:[%s356 + $0x30] sm:$0xff] %vm4082, %v4066
      %4090 = vst.msk [vmem:[%s356 + $0x38] sm:$0xff] %vm4082, %v4067
      %4091 = vst.msk [vmem:[%s356 + $0x40] sm:$0xff] %vm4082, %v4068
      %4092 = vst.msk [vmem:[%s356 + $0x48] sm:$0xff] %vm4082, %v4069
      %v4093 = vunpack.c.l.bf16 %v4020
      %v4094 = vunpack.c.l.bf16 %v4021
      %v4095 = vunpack.c.h.bf16 %v4020
      %v4096 = vunpack.c.h.bf16 %v4021
      %v4097 = vunpack.c.l.bf16 %v4022
      %v4098 = vunpack.c.l.bf16 %v4023
      %v4099 = vunpack.c.h.bf16 %v4022
      %v4100 = vunpack.c.h.bf16 %v4023
      %v4101 = vunpack.c.l.bf16 %v4024
      %v4102 = vunpack.c.l.bf16 %v4025
      %v4103 = vunpack.c.h.bf16 %v4024
      %v4104 = vunpack.c.h.bf16 %v4025
      %v4105 = vunpack.c.l.bf16 %v4026
      %v4106 = vunpack.c.l.bf16 %v4027
      %v4107 = vunpack.c.h.bf16 %v4026
      %v4108 = vunpack.c.h.bf16 %v4027
      %v4109 = vunpack.c.l.bf16 %v4028
      %v4110 = vunpack.c.l.bf16 %v4029
      %v4111 = vunpack.c.h.bf16 %v4028
      %v4112 = vunpack.c.h.bf16 %v4029
      %v4113 = vlaneseq
      %v4114 = vshrl.u32 %v4113, 7
      %v4115 = vadd.s32 %v4114, 8
      %v4116 = vadd.s32 %v4114, 16
      %v4117 = vadd.s32 %v4114, 24
      %v4118 = vadd.s32 %v4114, 32
      %v4119 = vadd.s32 %v4114, 40
      %v4120 = vadd.s32 %v4114, 48
      %v4121 = vadd.s32 %v4114, 56
      %v4122 = vadd.s32 %v4114, 64
      %v4123 = vadd.s32 %v4114, 72
      %vm4124 = vcmp.lt.s32.totalorder %v4114, 0
      %v4125 = vsub.s32 0, %v4114
      %v4126 = vsel %vm4124, %v4125, %v4114
      %v4127 = vmul.u32.u64.compose %v4126, 3435973837
      %v4128 = vextract.low.u32 %v4127
      %v4129 = vextract.high.u32 %v4127
      %v4130 = vshrl.u32 %v4129, 3
      %v4131 = vmul.u32 %v4130, 10
      %v4132 = vsub.s32 %v4126, %v4131
      %v4133 = vsub.s32 0, %v4132
      %v4134 = vsel %vm4124, %v4133, %v4132
      %vm4135 = vcmp.lt.s32.totalorder %v4115, 0
      %v4136 = vsub.s32 0, %v4115
      %v4137 = vsel %vm4135, %v4136, %v4115
      %v4138 = vmul.u32.u64.compose %v4137, 3435973837
      %v4139 = vextract.low.u32 %v4138
      %v4140 = vextract.high.u32 %v4138
      %v4141 = vshrl.u32 %v4140, 3
      %v4142 = vmul.u32 %v4141, 10
      %v4143 = vsub.s32 %v4137, %v4142
      %v4144 = vsub.s32 0, %v4143
      %v4145 = vsel %vm4135, %v4144, %v4143
      %vm4146 = vcmp.lt.s32.totalorder %v4116, 0
      %v4147 = vsub.s32 0, %v4116
      %v4148 = vsel %vm4146, %v4147, %v4116
      %v4149 = vmul.u32.u64.compose %v4148, 3435973837
      %v4150 = vextract.low.u32 %v4149
      %v4151 = vextract.high.u32 %v4149
      %v4152 = vshrl.u32 %v4151, 3
      %v4153 = vmul.u32 %v4152, 10
      %v4154 = vsub.s32 %v4148, %v4153
      %v4155 = vsub.s32 0, %v4154
      %v4156 = vsel %vm4146, %v4155, %v4154
      %vm4157 = vcmp.lt.s32.totalorder %v4117, 0
      %v4158 = vsub.s32 0, %v4117
      %v4159 = vsel %vm4157, %v4158, %v4117
      %v4160 = vmul.u32.u64.compose %v4159, 3435973837
      %v4161 = vextract.low.u32 %v4160
      %v4162 = vextract.high.u32 %v4160
      %v4163 = vshrl.u32 %v4162, 3
      %v4164 = vmul.u32 %v4163, 10
      %v4165 = vsub.s32 %v4159, %v4164
      %v4166 = vsub.s32 0, %v4165
      %v4167 = vsel %vm4157, %v4166, %v4165
      %vm4168 = vcmp.lt.s32.totalorder %v4118, 0
      %v4169 = vsub.s32 0, %v4118
      %v4170 = vsel %vm4168, %v4169, %v4118
      %v4171 = vmul.u32.u64.compose %v4170, 3435973837
      %v4172 = vextract.low.u32 %v4171
      %v4173 = vextract.high.u32 %v4171
      %v4174 = vshrl.u32 %v4173, 3
      %v4175 = vmul.u32 %v4174, 10
      %v4176 = vsub.s32 %v4170, %v4175
      %v4177 = vsub.s32 0, %v4176
      %v4178 = vsel %vm4168, %v4177, %v4176
      %vm4179 = vcmp.lt.s32.totalorder %v4119, 0
      %v4180 = vsub.s32 0, %v4119
      %v4181 = vsel %vm4179, %v4180, %v4119
      %v4182 = vmul.u32.u64.compose %v4181, 3435973837
      %v4183 = vextract.low.u32 %v4182
      %v4184 = vextract.high.u32 %v4182
      %v4185 = vshrl.u32 %v4184, 3
      %v4186 = vmul.u32 %v4185, 10
      %v4187 = vsub.s32 %v4181, %v4186
      %v4188 = vsub.s32 0, %v4187
      %v4189 = vsel %vm4179, %v4188, %v4187
      %vm4190 = vcmp.lt.s32.totalorder %v4120, 0
      %v4191 = vsub.s32 0, %v4120
      %v4192 = vsel %vm4190, %v4191, %v4120
      %v4193 = vmul.u32.u64.compose %v4192, 3435973837
      %v4194 = vextract.low.u32 %v4193
      %v4195 = vextract.high.u32 %v4193
      %v4196 = vshrl.u32 %v4195, 3
      %v4197 = vmul.u32 %v4196, 10
      %v4198 = vsub.s32 %v4192, %v4197
      %v4199 = vsub.s32 0, %v4198
      %v4200 = vsel %vm4190, %v4199, %v4198
      %vm4201 = vcmp.lt.s32.totalorder %v4121, 0
      %v4202 = vsub.s32 0, %v4121
      %v4203 = vsel %vm4201, %v4202, %v4121
      %v4204 = vmul.u32.u64.compose %v4203, 3435973837
      %v4205 = vextract.low.u32 %v4204
      %v4206 = vextract.high.u32 %v4204
      %v4207 = vshrl.u32 %v4206, 3
      %v4208 = vmul.u32 %v4207, 10
      %v4209 = vsub.s32 %v4203, %v4208
      %v4210 = vsub.s32 0, %v4209
      %v4211 = vsel %vm4201, %v4210, %v4209
      %vm4212 = vcmp.lt.s32.totalorder %v4122, 0
      %v4213 = vsub.s32 0, %v4122
      %v4214 = vsel %vm4212, %v4213, %v4122
      %v4215 = vmul.u32.u64.compose %v4214, 3435973837
      %v4216 = vextract.low.u32 %v4215
      %v4217 = vextract.high.u32 %v4215
      %v4218 = vshrl.u32 %v4217, 3
      %v4219 = vmul.u32 %v4218, 10
      %v4220 = vsub.s32 %v4214, %v4219
      %v4221 = vsub.s32 0, %v4220
      %v4222 = vsel %vm4212, %v4221, %v4220
      %vm4223 = vcmp.lt.s32.totalorder %v4123, 0
      %v4224 = vsub.s32 0, %v4123
      %v4225 = vsel %vm4223, %v4224, %v4123
      %v4226 = vmul.u32.u64.compose %v4225, 3435973837
      %v4227 = vextract.low.u32 %v4226
      %v4228 = vextract.high.u32 %v4226
      %v4229 = vshrl.u32 %v4228, 3
      %v4230 = vmul.u32 %v4229, 10
      %v4231 = vsub.s32 %v4225, %v4230
      %v4232 = vsub.s32 0, %v4231
      %v4233 = vsel %vm4223, %v4232, %v4231
      %vm4234 = vcmp.ne.s32.totalorder %v4134, 0
      %vm4235 = vcmp.ne.s32.totalorder %v4145, 0
      %vm4236 = vcmp.ne.s32.totalorder %v4156, 0
      %vm4237 = vcmp.ne.s32.totalorder %v4167, 0
      %vm4238 = vcmp.ne.s32.totalorder %v4178, 0
      %vm4239 = vcmp.ne.s32.totalorder %v4189, 0
      %vm4240 = vcmp.ne.s32.totalorder %v4200, 0
      %vm4241 = vcmp.ne.s32.totalorder %v4211, 0
      %vm4242 = vcmp.ne.s32.totalorder %v4222, 0
      %vm4243 = vcmp.ne.s32.totalorder %v4233, 0
      %vm4244 = vcmp.lt.s32.totalorder %v4134, 0
      %vm4245 = vcmp.lt.s32.totalorder %v4145, 0
      %vm4246 = vcmp.lt.s32.totalorder %v4156, 0
      %vm4247 = vcmp.lt.s32.totalorder %v4167, 0
      %vm4248 = vcmp.lt.s32.totalorder %v4178, 0
      %vm4249 = vcmp.lt.s32.totalorder %v4189, 0
      %vm4250 = vcmp.lt.s32.totalorder %v4200, 0
      %vm4251 = vcmp.lt.s32.totalorder %v4211, 0
      %vm4252 = vcmp.lt.s32.totalorder %v4222, 0
      %vm4253 = vcmp.lt.s32.totalorder %v4233, 0
      %vm4254 = vmand %vm4244, %vm4234
      %vm4255 = vmand %vm4245, %vm4235
      %vm4256 = vmand %vm4246, %vm4236
      %vm4257 = vmand %vm4247, %vm4237
      %vm4258 = vmand %vm4248, %vm4238
      %vm4259 = vmand %vm4249, %vm4239
      %vm4260 = vmand %vm4250, %vm4240
      %vm4261 = vmand %vm4251, %vm4241
      %vm4262 = vmand %vm4252, %vm4242
      %vm4263 = vmand %vm4253, %vm4243
      %v4264 = vadd.s32 %v4134, 10
      %v4265 = vadd.s32 %v4145, 10
      %v4266 = vadd.s32 %v4156, 10
      %v4267 = vadd.s32 %v4167, 10
      %v4268 = vadd.s32 %v4178, 10
      %v4269 = vadd.s32 %v4189, 10
      %v4270 = vadd.s32 %v4200, 10
      %v4271 = vadd.s32 %v4211, 10
      %v4272 = vadd.s32 %v4222, 10
      %v4273 = vadd.s32 %v4233, 10
      %v4274 = vsel %vm4254, %v4264, %v4134
      %v4275 = vsel %vm4255, %v4265, %v4145
      %v4276 = vsel %vm4256, %v4266, %v4156
      %v4277 = vsel %vm4257, %v4267, %v4167
      %v4278 = vsel %vm4258, %v4268, %v4178
      %v4279 = vsel %vm4259, %v4269, %v4189
      %v4280 = vsel %vm4260, %v4270, %v4200
      %v4281 = vsel %vm4261, %v4271, %v4211
      %v4282 = vsel %vm4262, %v4272, %v4222
      %v4283 = vsel %vm4263, %v4273, %v4233
      %vm4284 = vcmp.lt.s32.totalorder %v4274, 8
      %vm4285 = vcmp.lt.s32.totalorder %v4275, 8
      %vm4286 = vcmp.lt.s32.totalorder %v4276, 8
      %vm4287 = vcmp.lt.s32.totalorder %v4277, 8
      %vm4288 = vcmp.lt.s32.totalorder %v4278, 8
      %vm4289 = vcmp.lt.s32.totalorder %v4279, 8
      %vm4290 = vcmp.lt.s32.totalorder %v4280, 8
      %vm4291 = vcmp.lt.s32.totalorder %v4281, 8
      %vm4292 = vcmp.lt.s32.totalorder %v4282, 8
      %vm4293 = vcmp.lt.s32.totalorder %v4283, 8
      %v4294 = vsel %vm4284, 1, 0
      %v4295 = vsel %vm4285, 1, 0
      %v4296 = vsel %vm4286, 1, 0
      %v4297 = vsel %vm4287, 1, 0
      %v4298 = vsel %vm4288, 1, 0
      %v4299 = vsel %vm4289, 1, 0
      %v4300 = vsel %vm4290, 1, 0
      %v4301 = vsel %vm4291, 1, 0
      %v4302 = vsel %vm4292, 1, 0
      %v4303 = vsel %vm4293, 1, 0
      %v4304 = vcvt.s32.f32 %v4294
      %v4305 = vcvt.s32.f32 %v4295
      %v4306 = vcvt.s32.f32 %v4296
      %v4307 = vcvt.s32.f32 %v4297
      %v4308 = vcvt.s32.f32 %v4298
      %v4309 = vcvt.s32.f32 %v4299
      %v4310 = vcvt.s32.f32 %v4300
      %v4311 = vcvt.s32.f32 %v4301
      %v4312 = vcvt.s32.f32 %v4302
      %v4313 = vcvt.s32.f32 %v4303
      %v4314 = vmul.f32 %v4093, %v4304
      %v4315 = vmul.f32 %v4094, %v4304
      %v4316 = vmul.f32 %v4095, %v4305
      %v4317 = vmul.f32 %v4096, %v4305
      %v4318 = vmul.f32 %v4097, %v4306
      %v4319 = vmul.f32 %v4098, %v4306
      %v4320 = vmul.f32 %v4099, %v4307
      %v4321 = vmul.f32 %v4100, %v4307
      %v4322 = vmul.f32 %v4101, %v4308
      %v4323 = vmul.f32 %v4102, %v4308
      %v4324 = vmul.f32 %v4103, %v4309
      %v4325 = vmul.f32 %v4104, %v4309
      %v4326 = vmul.f32 %v4105, %v4310
      %v4327 = vmul.f32 %v4106, %v4310
      %v4328 = vmul.f32 %v4107, %v4311
      %v4329 = vmul.f32 %v4108, %v4311
      %v4330 = vmul.f32 %v4109, %v4312
      %v4331 = vmul.f32 %v4110, %v4312
      %v4332 = vmul.f32 %v4111, %v4313
      %v4333 = vmul.f32 %v4112, %v4313
      %v4334 = vadd.f32 %v4314, %v4316
      %v4335 = vadd.f32 %v4334, %v4318
      %v4336 = vadd.f32 %v4335, %v4320
      %v4337 = vadd.f32 %v4336, %v4322
      %v4338 = vadd.f32 %v4337, %v4324
      %v4339 = vadd.f32 %v4338, %v4326
      %v4340 = vadd.f32 %v4339, %v4328
      %v4341 = vadd.f32 %v4340, %v4330
      %v4342 = vadd.f32 %v4341, %v4332
      %v4343 = vrot.slane %v4342, 4
      %v4344 = vadd.f32 %v4342, %v4343
      %v4345 = vrot.slane %v4344, 2
      %v4346 = vadd.f32 %v4344, %v4345
      %v4347 = vrot.slane %v4346, 1
      %v4348 = vadd.f32 %v4346, %v4347
      %v4349 = vsel %vm477, %v4315, 0.0
      %v4350 = vsel %vm477, %v4317, 0.0
      %v4351 = vadd.f32 %v4349, %v4350
      %v4352 = vsel %vm477, %v4319, 0.0
      %v4353 = vadd.f32 %v4351, %v4352
      %v4354 = vsel %vm477, %v4321, 0.0
      %v4355 = vadd.f32 %v4353, %v4354
      %v4356 = vsel %vm477, %v4323, 0.0
      %v4357 = vadd.f32 %v4355, %v4356
      %v4358 = vsel %vm477, %v4325, 0.0
      %v4359 = vadd.f32 %v4357, %v4358
      %v4360 = vsel %vm477, %v4327, 0.0
      %v4361 = vadd.f32 %v4359, %v4360
      %v4362 = vsel %vm477, %v4329, 0.0
      %v4363 = vadd.f32 %v4361, %v4362
      %v4364 = vsel %vm477, %v4331, 0.0
      %v4365 = vadd.f32 %v4363, %v4364
      %v4366 = vsel %vm477, %v4333, 0.0
      %v4367 = vadd.f32 %v4365, %v4366
      %v4368 = vrot.slane %v4367, 4
      %v4369 = vadd.f32 %v4367, %v4368
      %v4370 = vrot.slane %v4369, 2
      %v4371 = vadd.f32 %v4369, %v4370
      %v4372 = vrot.slane %v4371, 1
      %v4373 = vadd.f32 %v4371, %v4372
      %v4376 = vcombine.low %v4348, %v4373
      %v4378 = vunpack.c.l.s4 1966171168
      %v4379 = vunpack.c.0.s8 %v4378
      %v4380 = vlaneseq
      %v4381 = vshrl.u32 %v4380, 7
      %v4382 = vsub.s32 %v4379, %v4381
      %v4383 = vrot.slane %v4376, %v4382
      %v4385 = vunpack.c.l.s4 1966171168
      %v4386 = vunpack.c.0.s8 %v4385
      %v4387 = vlaneseq
      %v4388 = vshrl.u32 %v4387, 7
      %v4389 = vsub.s32 %v4386, %v4388
      %v4390 = vrot.slane %v4383, %v4389
      %v4392 = vlaneseq
      %vm4393 = vcmp.ge.s32.totalorder %v4392, 0
      %vm4394 = vcmp.lt.s32.totalorder %v4392, 192
      %vm4395 = vmand %vm4393, %vm4394
      %4396 = vst.msk [vmem:[%s365] ss:$2 sm:$0x3] %vm4395, %v4390
      %v4397 = vmul.f32 %v4314, %v4093
      %v4398 = vmul.f32 %v4315, %v4094
      %v4399 = vmul.f32 %v4316, %v4095
      %v4400 = vmul.f32 %v4317, %v4096
      %v4401 = vmul.f32 %v4318, %v4097
      %v4402 = vmul.f32 %v4319, %v4098
      %v4403 = vmul.f32 %v4320, %v4099
      %v4404 = vmul.f32 %v4321, %v4100
      %v4405 = vmul.f32 %v4322, %v4101
      %v4406 = vmul.f32 %v4323, %v4102
      %v4407 = vmul.f32 %v4324, %v4103
      %v4408 = vmul.f32 %v4325, %v4104
      %v4409 = vmul.f32 %v4326, %v4105
      %v4410 = vmul.f32 %v4327, %v4106
      %v4411 = vmul.f32 %v4328, %v4107
      %v4412 = vmul.f32 %v4329, %v4108
      %v4413 = vmul.f32 %v4330, %v4109
      %v4414 = vmul.f32 %v4331, %v4110
      %v4415 = vmul.f32 %v4332, %v4111
      %v4416 = vmul.f32 %v4333, %v4112
      %v4417 = vadd.f32 %v4397, %v4399
      %v4418 = vadd.f32 %v4417, %v4401
      %v4419 = vadd.f32 %v4418, %v4403
      %v4420 = vadd.f32 %v4419, %v4405
      %v4421 = vadd.f32 %v4420, %v4407
      %v4422 = vadd.f32 %v4421, %v4409
      %v4423 = vadd.f32 %v4422, %v4411
      %v4424 = vadd.f32 %v4423, %v4413
      %v4425 = vadd.f32 %v4424, %v4415
      %v4426 = vrot.slane %v4425, 4
      %v4427 = vadd.f32 %v4425, %v4426
      %v4428 = vrot.slane %v4427, 2
      %v4429 = vadd.f32 %v4427, %v4428
      %v4430 = vrot.slane %v4429, 1
      %v4431 = vadd.f32 %v4429, %v4430
      %v4432 = vsel %vm477, %v4398, 0.0
      %v4433 = vsel %vm477, %v4400, 0.0
      %v4434 = vadd.f32 %v4432, %v4433
      %v4435 = vsel %vm477, %v4402, 0.0
      %v4436 = vadd.f32 %v4434, %v4435
      %v4437 = vsel %vm477, %v4404, 0.0
      %v4438 = vadd.f32 %v4436, %v4437
      %v4439 = vsel %vm477, %v4406, 0.0
      %v4440 = vadd.f32 %v4438, %v4439
      %v4441 = vsel %vm477, %v4408, 0.0
      %v4442 = vadd.f32 %v4440, %v4441
      %v4443 = vsel %vm477, %v4410, 0.0
      %v4444 = vadd.f32 %v4442, %v4443
      %v4445 = vsel %vm477, %v4412, 0.0
      %v4446 = vadd.f32 %v4444, %v4445
      %v4447 = vsel %vm477, %v4414, 0.0
      %v4448 = vadd.f32 %v4446, %v4447
      %v4449 = vsel %vm477, %v4416, 0.0
      %v4450 = vadd.f32 %v4448, %v4449
      %v4451 = vrot.slane %v4450, 4
      %v4452 = vadd.f32 %v4450, %v4451
      %v4453 = vrot.slane %v4452, 2
      %v4454 = vadd.f32 %v4452, %v4453
      %v4455 = vrot.slane %v4454, 1
      %v4456 = vadd.f32 %v4454, %v4455
      %v4459 = vcombine.low %v4431, %v4456
      %v4461 = vunpack.c.l.s4 1966171168
      %v4462 = vunpack.c.0.s8 %v4461
      %v4463 = vlaneseq
      %v4464 = vshrl.u32 %v4463, 7
      %v4465 = vsub.s32 %v4462, %v4464
      %v4466 = vrot.slane %v4459, %v4465
      %v4468 = vunpack.c.l.s4 1966171168
      %v4469 = vunpack.c.0.s8 %v4468
      %v4470 = vlaneseq
      %v4471 = vshrl.u32 %v4470, 7
      %v4472 = vsub.s32 %v4469, %v4471
      %v4473 = vrot.slane %v4466, %v4472
      %s4475 = scalar_lea.vmem %s365, 1
      %4476 = vst.msk [vmem:[%s4475] ss:$2 sm:$0x3] %vm4395, %v4473
      %p4477 = scmp.lt.s32.totalorder %s21, 1
      %s4478 = scalar_select %p4477, %s21, 1
      %p4479 = scmp.lt.s32.totalorder %s22, 3
      %s4480 = scalar_select %p4479, %s22, 3
      %s4481 = smul.addr %s4480, 20
      %s4482 = smul.addr %s4478, 80
      %s4483 = sadd.s32 %s4481, %s4482
      %s4484 = smul.addr %s4483, 4
      %s4485 = scalar_lea.vmem %s4, %s4484
      %p4486 = scmp.lt.s32.totalorder %s21, 1
      %s4487 = scalar_select %p4486, %s21, 1
      %p4488 = scmp.lt.s32.totalorder %s22, 3
      %s4489 = scalar_select %p4488, %s22, 3
      %s4490 = smul.addr %s4489, 2
      %s4491 = smul.addr %s4487, 8
      %s4492 = sadd.s32 %s4490, %s4491
      %s4493 = smul.addr %s4492, 2
      %s4494 = scalar_lea.vmem %s5, %s4493
      // Predicated region
      $region37: #{resnet50_head_forward.2} parent=35 // pred_check
        %p4495 = pneg %p158
      $region38: #{resnet50_head_forward.2} parent=35 // pred_check_branch
        %4497 = sbr.rel (%p4495) target = $region40
      $region39: #{resnet50_head_forward.2} parent=35 // pred_region
        _
      $region40: #{resnet50_head_forward.2} parent=35 // pred_fallthru
        _
      // Predicated region
      $region41: #{resnet50_head_forward.2} parent=35 // pred_check
        %p4498 = pneg %p186
      $region42: #{resnet50_head_forward.2} parent=35 // pred_check_branch
        %4500 = sbr.rel (%p4498) target = $region44
      $region43: #{resnet50_head_forward.2} parent=35 // pred_region
        _
      $region44: #{resnet50_head_forward.2} parent=35 // pred_fallthru
        _
    $region36: #{resnet50_head_forward.2} parent=5 // pred_fallthru
      _
    %p4501 = scmp.le.s32.totalorder 2, %s12
    // Predicated region
    $region45: #{resnet50_head_forward.2} parent=5 // pred_check
      %p4502 = pneg %p4501
    $region46: #{resnet50_head_forward.2} parent=5 // pred_check_branch
      %4504 = sbr.rel (%p4502) target = $region48
    $region47: #{resnet50_head_forward.2} parent=5 // pred_region
      %s4505 = ssub.s32 %s12, 2
      // Predicated region
      $region49: #{resnet50_head_forward.2} parent=47 // pred_check
        %p4506 = pneg %p164
      $region50: #{resnet50_head_forward.2} parent=47 // pred_check_branch
        %4508 = sbr.rel (%p4506) target = $region52
      $region51: #{resnet50_head_forward.2} parent=47 // pred_region
        %p4509 = scmp.lt.s32.totalorder %s23, 1
        %s4510 = scalar_select %p4509, %s23, 1
        %p4511 = scmp.lt.s32.totalorder %s24, 3
        %s4512 = scalar_select %p4511, %s24, 3
        %s4513 = smul.addr %s4512, 20
        %s4514 = smul.addr %s4510, 80
        %s4515 = sadd.s32 %s4513, %s4514
        %s4516 = smul.addr %s4515, 4
        %s4517 = scalar_lea.vmem %s4, %s4516
      $region52: #{resnet50_head_forward.2} parent=47 // pred_fallthru
        _
      // Predicated region
      $region53: #{resnet50_head_forward.2} parent=47 // pred_check
        %p4518 = pneg %p192
      $region54: #{resnet50_head_forward.2} parent=47 // pred_check_branch
        %4520 = sbr.rel (%p4518) target = $region56
      $region55: #{resnet50_head_forward.2} parent=47 // pred_region
        %p4521 = scmp.lt.s32.totalorder %s23, 1
        %s4522 = scalar_select %p4521, %s23, 1
        %p4523 = scmp.lt.s32.totalorder %s24, 3
        %s4524 = scalar_select %p4523, %s24, 3
        %s4525 = smul.addr %s4524, 2
        %s4526 = smul.addr %s4522, 8
        %s4527 = sadd.s32 %s4525, %s4526
        %s4528 = smul.addr %s4527, 2
        %s4529 = scalar_lea.vmem %s5, %s4528
      $region56: #{resnet50_head_forward.2} parent=47 // pred_fallthru
        _
    $region48: #{resnet50_head_forward.2} parent=5 // pred_fallthru
      _
  $region6: #{resnet50_head_forward.2} parent=0 // loop_footer
    %s16 = sadd.s32 1, %s12
  $region7: #{resnet50_head_forward.2} parent=0 // loop_footer_branch
    %11 = sbr.rel target = $region3
  $region8: #{resnet50_head_forward.2} parent=0 // loop_exit
    _

</llo_original>
